<compile_context>
chip_gen: v6e
topology: v6e:2x2x1
jax: 0.10.0
libtpu: 0.0.40
codegen_flags: <defaults>
</compile_context>

<pallas_src>
import functools

import jax
import jax.numpy as jnp
from jax.experimental import pallas as pl
from jax.experimental.pallas import tpu as pltpu

# ----------------------------------------------------------------------------
# Tunables.
HALO = 8                      # look-ahead rows per tile; multiple of 8, >= ceil(K/s)-1.
TILE_TARGET = 512             # output frames per grid step (~6 MiB VMEM at C=512:
                              # safe on v7x's 64 MiB; can be raised on v5e/v6e).
ACT_DTYPE = jnp.bfloat16      # inter-layer activation / weight dtype (MXU-native).
VMEM_LIMIT = 32 * 1024 * 1024
_INV_SQRT2 = 0.7071067811865476


def _gelu(y):
    # Exact (erf) GELU == PyTorch default.  (tanh-approx would use the EUP but
    # changes numerics, so keep parity.)
    return 0.5 * y * (1.0 + jax.lax.erf(y * _INV_SQRT2))


def _accumulate_conv(xm_ref, xh_ref, w_ref, acc_ref, q_shifts, tile_t):
    """acc[f] = sum_q x_rows[f + q] @ W_q  (fused im2col, f32 accumulator)."""
    acc_ref[...] = jnp.dot(xm_ref[0], w_ref[0],
                           preferred_element_type=jnp.float32)
    for q in range(1, q_shifts):
        # rows f+q for f < tile_t - q come from the main tile ...
        acc_ref[: tile_t - q, :] += jnp.dot(
            xm_ref[0, q:, :], w_ref[q], preferred_element_type=jnp.float32)
        # ... and the last q rows come from the 8-row halo (start of next tile).
        acc_ref[tile_t - q:, :] += jnp.dot(
            xh_ref[0, :q, :], w_ref[q], preferred_element_type=jnp.float32)


def _make_conv_kernel(q_shifts, tile_t, t_valid, use_norm):
    if use_norm:
        def kernel(xm_ref, xh_ref, w_ref, out_ref, mom_ref, acc_ref):
            _accumulate_conv(xm_ref, xh_ref, w_ref, acc_ref, q_shifts, tile_t)
            y = acc_ref[...]
            out_ref[0] = y.astype(out_ref.dtype)          # pre-norm activations

            j = pl.program_id(1)

            @pl.when(j == 0)
            def _init():
                mom_ref[...] = jnp.zeros_like(mom_ref)

            # One-pass moments (sum, sum of squares) over *valid* frames only;
            # frames beyond t_valid are padding and must not pollute the stats.
            frame = j * tile_t + jax.lax.broadcasted_iota(
                jnp.int32, (tile_t, 1), 0)
            ym = jnp.where(frame < t_valid, y, 0.0)
            mom_ref[0, 0:1, :] += jnp.sum(ym, axis=0, keepdims=True)
            mom_ref[0, 1:2, :] += jnp.sum(ym * ym, axis=0, keepdims=True)
    else:
        def kernel(xm_ref, xh_ref, w_ref, out_ref, acc_ref):
            _accumulate_conv(xm_ref, xh_ref, w_ref, acc_ref, q_shifts, tile_t)
            out_ref[0] = _gelu(acc_ref[...]).astype(out_ref.dtype)
    return kernel


def _norm_gelu_kernel(y_ref, scale_ref, shift_ref, out_ref):
    y = y_ref[0].astype(jnp.float32)
    y = y * scale_ref[0] + shift_ref[0]
    out_ref[0] = _gelu(y).astype(out_ref.dtype)


def conv_layer_block(x, wq, gamma, beta, *, kernel_size, stride, use_norm,
                     t_valid_in, out_rows, tile_t, out_dtype):
    """One ConvLayerBlock: Conv1d(bias=False) [+ GroupNorm(C groups)] + GELU.

    x:  [B, A_in, C_in] channels-last, A_in % stride == 0, fully initialized,
        with (A_in // stride) >= n_tiles*tile_t + HALO rows.
    wq: [Q, stride*C_in, C_out] pre-packed conv weight, Q = ceil(K/stride).
    Returns y [B, out_rows, C_out]; rows >= t_valid_out are don't-care padding
    that is only ever consumed by the next layer's own padding region.
    """
    B, a_in, c_in = x.shape
    q_shifts, sc, c_out = wq.shape
    assert sc == stride * c_in and q_shifts == -(-kernel_size // stride)
    r_in = a_in // stride
    xr = x.reshape(B, r_in, sc)                     # free reshape, no data movement
    n_t = pl.cdiv(out_rows, tile_t)
    assert tile_t % HALO == 0 and r_in >= n_t * tile_t + HALO
    t_valid_out = (t_valid_in - kernel_size) // stride + 1

    main_spec = pl.BlockSpec((1, tile_t, sc), lambda b, j: (b, j, 0))
    halo_spec = pl.BlockSpec((1, HALO, sc),
                             lambda b, j: (b, (j + 1) * (tile_t // HALO), 0))
    w_spec = pl.BlockSpec((q_shifts, sc, c_out), lambda b, j: (0, 0, 0))
    out_spec = pl.BlockSpec((1, tile_t, c_out), lambda b, j: (b, j, 0))
    scratch = [pltpu.VMEM((tile_t, c_out), jnp.float32)]
    kernel = _make_conv_kernel(q_shifts, tile_t, t_valid_out, use_norm)

    if not use_norm:
        y = pl.pallas_call(
            kernel,
            grid=(B, n_t),
            in_specs=[main_spec, halo_spec, w_spec],
            out_specs=out_spec,
            out_shape=jax.ShapeDtypeStruct((B, out_rows, c_out), out_dtype),
            scratch_shapes=scratch,
            compiler_params=pltpu.CompilerParams(
                dimension_semantics=("parallel", "parallel"),
                vmem_limit_bytes=VMEM_LIMIT),
        )(xr, xr, wq)
        return y, t_valid_out

    # GroupNorm layer: pass 1 = conv + streamed (sum, sumsq) accumulation across
    # time tiles (stats must be global over T_out, not per tile); pass 2 applies
    # the normalization + affine + GELU.
    y_pre, mom = pl.pallas_call(
        kernel,
        grid=(B, n_t),
        in_specs=[main_spec, halo_spec, w_spec],
        out_specs=[out_spec,
                   pl.BlockSpec((1, 2, c_out), lambda b, j: (b, 0, 0))],
        out_shape=[jax.ShapeDtypeStruct((B, out_rows, c_out), ACT_DTYPE),
                   jax.ShapeDtypeStruct((B, 2, c_out), jnp.float32)],
        scratch_shapes=scratch,
        compiler_params=pltpu.CompilerParams(
            dimension_semantics=("parallel", "arbitrary"),
            vmem_limit_bytes=VMEM_LIMIT),
    )(xr, xr, wq)

    mean = mom[:, 0, :] / t_valid_out                     # [B, C]
    var = mom[:, 1, :] / t_valid_out - mean * mean        # biased, matches torch
    rstd = jax.lax.rsqrt(var + 1e-5)                      # GroupNorm eps
    g = gamma[None, :].astype(jnp.float32)
    b_ = beta[None, :].astype(jnp.float32)
    scale = (g * rstd)[:, None, :]                        # [B, 1, C]
    shift = (b_ - mean * g * rstd)[:, None, :]            # [B, 1, C]

    y = pl.pallas_call(
        _norm_gelu_kernel,
        grid=(B, n_t),
        in_specs=[pl.BlockSpec((1, tile_t, c_out), lambda b, j: (b, j, 0)),
                  pl.BlockSpec((1, 1, c_out), lambda b, j: (b, 0, 0)),
                  pl.BlockSpec((1, 1, c_out), lambda b, j: (b, 0, 0))],
        out_specs=pl.BlockSpec((1, tile_t, c_out), lambda b, j: (b, j, 0)),
        out_shape=jax.ShapeDtypeStruct((B, out_rows, c_out), out_dtype),
        compiler_params=pltpu.CompilerParams(
            dimension_semantics=("parallel", "parallel"),
            vmem_limit_bytes=VMEM_LIMIT),
    )(y_pre, scale, shift)
    return y, t_valid_out


def _plan(cfgs, time, tile_target):
    """Static (Python) shape planning, backward over layers.

    Each layer's stride-reshaped input must expose n_tiles*tile + HALO rows so
    the 8-row halo block of the last tile stays in bounds; every layer therefore
    writes an output whose time length is exactly what the next layer needs
    (a few extra, fully-computed rows -- never uninitialized, never jnp.pad'ed).
    """
    L = len(cfgs)
    valid = [time]
    for (_ci, _co, k, s, _n) in cfgs:
        valid.append((valid[-1] - k) // s + 1)

    req_in = [0] * (L + 1)
    req_in[L] = valid[L]                       # final output: exact frame count
    tiles = [0] * L
    for i in reversed(range(L)):
        _ci, _co, k, s, _n = cfgs[i]
        q = -(-k // s)
        if q - 1 > HALO:
            raise ValueError("kernel_size too large for HALO rows of look-ahead")
        out_rows = req_in[i + 1]
        tile = max(HALO, min(tile_target, -(-out_rows // HALO) * HALO))
        n_t = -(-out_rows // tile)
        r_in = n_t * tile + HALO
        if i == 0:
            r_in = max(r_in, -(-time // s))    # keep every real audio sample
        tiles[i] = tile
        req_in[i] = r_in * s
    return valid, req_in, tiles


def feature_extractor(x, length, params, cfgs, *, tile_target=TILE_TARGET,
                      out_dtype=jnp.float32):
    """torchaudio FeatureExtractor.forward: ([B, frame, feature], length)."""
    if x.ndim != 2:
        raise ValueError("Expected the input Tensor to be 2D (batch, time)")
    B, T = x.shape
    _valid, req_in, tiles = _plan(cfgs, T, tile_target)

    # x.unsqueeze(1) (NCW) == trailing singleton channel in channels-last layout.
    h = x.astype(ACT_DTYPE)[:, :, None]                       # [B, T, 1]
    h = jnp.pad(h, ((0, 0), (0, req_in[0] - T), (0, 0)))      # cheap: raw audio only
    t_valid = T
    for i, ((wq, gamma, beta), (_ci, _co, k, s, use_norm)) in enumerate(
            zip(params, cfgs)):
        h, t_valid = conv_layer_block(
            h, wq, gamma, beta,
            kernel_size=k, stride=s, use_norm=use_norm,
            t_valid_in=t_valid, out_rows=req_in[i + 1], tile_t=tiles[i],
            out_dtype=out_dtype if i == len(cfgs) - 1 else ACT_DTYPE)
        if length is not None:
            length = (length - k) // s + 1                    # floor division
            length = jnp.maximum(jnp.zeros_like(length), length)
    # h is already [batch, frame, feature] (== x.transpose(1, 2) in PyTorch).
    return h, length


def pack_conv_weight(w, kernel_size, stride):
    """[C_out, C_in, K] (PyTorch Conv1d) -> [Q, stride*C_in, C_out], Q=ceil(K/s).

    W_q[r*C_in + ci, co] = w[co, ci, q*stride + r] (zero where q*stride+r >= K),
    so  y[f] = sum_q x_reshaped[f + q] @ W_q  reproduces the convolution.
    """
    c_out, c_in, k = w.shape
    q = -(-k // stride)
    wt = jnp.transpose(w, (2, 1, 0))                          # [K, C_in, C_out]
    wt = jnp.pad(wt, ((0, q * stride - k), (0, 0), (0, 0)))
    return wt.reshape(q, stride * c_in, c_out)


def init_params(key, cfgs):
    params = []
    for (c_in, c_out, k, s, _use_norm) in cfgs:
        key, kw, kg, kb = jax.random.split(key, 4)
        w = 0.05 * jax.random.normal(kw, (c_out, c_in, k), jnp.float32)
        wq = pack_conv_weight(w, k, s).astype(ACT_DTYPE)      # packed once, bf16
        g = 1.0 + 0.01 * jax.random.normal(kg, (c_out,), jnp.float32)
        b = 0.01 * jax.random.normal(kb, (c_out,), jnp.float32)
        params.append((wq, g, b))
    return params


if __name__ == "__main__":
    # Small wav2vec2-style stack: (in_ch, out_ch, kernel, stride, use_group_norm).
    # C_out = 128 keeps the output channel (lane) dim dense; real wav2vec2 uses
    # 512 channels, which is also lane-dense.
    cfgs = [
        (1, 128, 10, 5, True),    # first layer has GroupNorm (group_norm mode)
        (128, 128, 3, 2, False),
        (128, 128, 2, 2, False),
    ]

    key = jax.random.PRNGKey(0)
    key, kx = jax.random.split(key)
    batch, time = 2, 400
    x = jax.random.normal(kx, (batch, time), jnp.float32)
    length = jnp.array([400, 320], dtype=jnp.int32)

    params = init_params(key, cfgs)

    run = jax.jit(functools.partial(feature_extractor, params=params, cfgs=cfgs))
    feats, out_len = run(x, length)
    jax.block_until_ready(feats)
    jax.block_until_ready(out_len)

    # feats: [2, 19, 128] f32, out_len: [2] == [19, 15]
    print("KERNEL_OK")
</pallas_src>

<mosaic_0001>
module attributes {stable_mosaic.version = 11 : i64} {
  func.func @kernel(%arg0: i32, %arg1: i32, %arg2: memref<1x144x5xbf16, #tpu.memory_space<vmem>>, %arg3: memref<1x8x5xbf16, #tpu.memory_space<vmem>>, %arg4: memref<2x5x128xbf16, #tpu.memory_space<vmem>>, %arg5: memref<1x144x128xbf16, #tpu.memory_space<vmem>>, %arg6: memref<1x2x128xf32, #tpu.memory_space<vmem>>, %arg7: memref<144x128xf32, #tpu.memory_space<vmem>>) attributes {dimension_semantics = [#tpu.dimension_semantics<parallel>, #tpu.dimension_semantics<arbitrary>], iteration_bounds = array<i64: 2, 1>, scalar_prefetch = 0 : i64, scratch_operands = 1 : i64, tpu.core_type = #tpu.core_type<tc>, window_params = [{transform_indices = @transform_0, window_bounds = array<i64: 1, 144, 5>}, {transform_indices = @transform_1, window_bounds = array<i64: 1, 8, 5>}, {pipeline_mode = #tpu.pipeline_mode<synchronous>, transform_indices = @transform_2, window_bounds = array<i64: 2, 5, 128>}, {transform_indices = @transform_3, window_bounds = array<i64: 1, 144, 128>}, {transform_indices = @transform_4, window_bounds = array<i64: 1, 2, 128>}]} {
    %c0 = arith.constant 0 : index
    %c0_0 = arith.constant 0 : index
    %c0_1 = arith.constant 0 : index
    %0 = vector.load %arg2[%c0, %c0_0, %c0_1] : memref<1x144x5xbf16, #tpu.memory_space<vmem>>, vector<1x144x5xbf16>
    %1 = vector.shape_cast %0 : vector<1x144x5xbf16> to vector<144x5xbf16>
    %c0_2 = arith.constant 0 : index
    %c0_3 = arith.constant 0 : index
    %c0_4 = arith.constant 0 : index
    %2 = vector.load %arg4[%c0_2, %c0_3, %c0_4] : memref<2x5x128xbf16, #tpu.memory_space<vmem>>, vector<1x5x128xbf16>
    %3 = vector.shape_cast %2 : vector<1x5x128xbf16> to vector<5x128xbf16>
    %cst = arith.constant dense<0.000000e+00> : vector<144x128xf32>
    %4 = tpu.matmul %1, %3, %cst {dimension_numbers = #tpu.dot_dimension_numbers<[1], [0], [0], [1], [0, 0, 1, 1], [], []>} : vector<144x5xbf16>, vector<5x128xbf16>, vector<144x128xf32> -> vector<144x128xf32>
    %c0_5 = arith.constant 0 : index
    %c0_6 = arith.constant 0 : index
    %5 = vector.load %arg7[%c0_5, %c0_6] : memref<144x128xf32, #tpu.memory_space<vmem>>, vector<144x128xf32>
    tpu.vector_store %arg7[%c0_5, %c0_6], %4 {strides = array<i32>} : memref<144x128xf32, #tpu.memory_space<vmem>>, vector<144x128xf32>,
    %c0_7 = arith.constant 0 : index
    %c0_8 = arith.constant 0 : index
    %6 = vector.load %arg7[%c0_7, %c0_8] : memref<144x128xf32, #tpu.memory_space<vmem>>, vector<143x128xf32>
    %c0_9 = arith.constant 0 : index
    %c1 = arith.constant 1 : index
    %c0_10 = arith.constant 0 : index
    %7 = vector.load %arg2[%c0_9, %c1, %c0_10] : memref<1x144x5xbf16, #tpu.memory_space<vmem>>, vector<1x143x5xbf16>
    %8 = vector.shape_cast %7 : vector<1x143x5xbf16> to vector<143x5xbf16>
    %c1_11 = arith.constant 1 : index
    %c0_12 = arith.constant 0 : index
    %c0_13 = arith.constant 0 : index
    %9 = vector.load %arg4[%c1_11, %c0_12, %c0_13] : memref<2x5x128xbf16, #tpu.memory_space<vmem>>, vector<1x5x128xbf16>
    %10 = vector.shape_cast %9 : vector<1x5x128xbf16> to vector<5x128xbf16>
    %cst_14 = arith.constant dense<0.000000e+00> : vector<143x128xf32>
    %11 = tpu.matmul %8, %10, %cst_14 {dimension_numbers = #tpu.dot_dimension_numbers<[1], [0], [0], [1], [0, 0, 1, 1], [], []>} : vector<143x5xbf16>, vector<5x128xbf16>, vector<143x128xf32> -> vector<143x128xf32>
    %12 = arith.addf %6, %11 : vector<143x128xf32>
    %c0_15 = arith.constant 0 : index
    %c0_16 = arith.constant 0 : index
    %13 = vector.load %arg7[%c0_15, %c0_16] : memref<144x128xf32, #tpu.memory_space<vmem>>, vector<143x128xf32>
    tpu.vector_store %arg7[%c0_15, %c0_16], %12 {strides = array<i32>} : memref<144x128xf32, #tpu.memory_space<vmem>>, vector<143x128xf32>,
    %c143 = arith.constant 143 : index
    %c0_17 = arith.constant 0 : index
    %14 = vector.load %arg7[%c143, %c0_17] : memref<144x128xf32, #tpu.memory_space<vmem>>, vector<1x128xf32>
    %c0_18 = arith.constant 0 : index
    %c0_19 = arith.constant 0 : index
    %c0_20 = arith.constant 0 : index
    %15 = vector.load %arg3[%c0_18, %c0_19, %c0_20] : memref<1x8x5xbf16, #tpu.memory_space<vmem>>, vector<1x1x5xbf16>
    %16 = vector.shape_cast %15 : vector<1x1x5xbf16> to vector<1x5xbf16>
    %c1_21 = arith.constant 1 : index
    %c0_22 = arith.constant 0 : index
    %c0_23 = arith.constant 0 : index
    %17 = vector.load %arg4[%c1_21, %c0_22, %c0_23] : memref<2x5x128xbf16, #tpu.memory_space<vmem>>, vector<1x5x128xbf16>
    %18 = vector.shape_cast %17 : vector<1x5x128xbf16> to vector<5x128xbf16>
    %cst_24 = arith.constant dense<0.000000e+00> : vector<1x128xf32>
    %19 = tpu.matmul %16, %18, %cst_24 {dimension_numbers = #tpu.dot_dimension_numbers<[1], [0], [0], [1], [0, 0, 1, 1], [], []>} : vector<1x5xbf16>, vector<5x128xbf16>, vector<1x128xf32> -> vector<1x128xf32>
    %20 = arith.addf %14, %19 : vector<1x128xf32>
    %c143_25 = arith.constant 143 : index
    %c0_26 = arith.constant 0 : index
    %21 = vector.load %arg7[%c143_25, %c0_26] : memref<144x128xf32, #tpu.memory_space<vmem>>, vector<1x128xf32>
    tpu.vector_store %arg7[%c143_25, %c0_26], %20 {strides = array<i32>} : memref<144x128xf32, #tpu.memory_space<vmem>>, vector<1x128xf32>,
    %c0_27 = arith.constant 0 : index
    %c0_28 = arith.constant 0 : index
    %22 = vector.load %arg7[%c0_27, %c0_28] : memref<144x128xf32, #tpu.memory_space<vmem>>, vector<144x128xf32>
    %23 = arith.truncf %22 : vector<144x128xf32> to vector<144x128xbf16>
    %c0_29 = arith.constant 0 : index
    %c0_30 = arith.constant 0 : index
    %c0_31 = arith.constant 0 : index
    %24 = vector.load %arg5[%c0_29, %c0_30, %c0_31] : memref<1x144x128xbf16, #tpu.memory_space<vmem>>, vector<1x144x128xbf16>
    %25 = vector.shape_cast %24 : vector<1x144x128xbf16> to vector<144x128xbf16>
    %26 = vector.shape_cast %23 : vector<144x128xbf16> to vector<1x144x128xbf16>
    tpu.vector_store %arg5[%c0_29, %c0_30, %c0_31], %26 {strides = array<i32>} : memref<1x144x128xbf16, #tpu.memory_space<vmem>>, vector<1x144x128xbf16>,
    %c0_i32 = arith.constant 0 : i32
    %27 = arith.cmpi eq, %arg1, %c0_i32 : i32
    %28 = arith.extui %27 : i1 to i32
    %c0_i32_32 = arith.constant 0 : i32
    %29 = arith.cmpi ne, %28, %c0_i32_32 : i32
    scf.if %29 {
      %cst_48 = arith.constant 0.000000e+00 : f32
      %57 = vector.broadcast %cst_48 : f32 to vector<1x2x128xf32>
      %c0_49 = arith.constant 0 : index
      %c0_50 = arith.constant 0 : index
      %c0_51 = arith.constant 0 : index
      %58 = vector.load %arg6[%c0_49, %c0_50, %c0_51] : memref<1x2x128xf32, #tpu.memory_space<vmem>>, vector<1x2x128xf32>
      tpu.vector_store %arg6[%c0_49, %c0_50, %c0_51], %57 {strides = array<i32>} : memref<1x2x128xf32, #tpu.memory_space<vmem>>, vector<1x2x128xf32>,
    } else {
    }
    %c144_i32 = arith.constant 144 : i32
    %30 = arith.muli %arg1, %c144_i32 : i32
    %31 = tpu.iota {dimensions = array<i32: 0>} : vector<144x1xi32>
    %32 = vector.broadcast %30 : i32 to vector<144x1xi32>
    %33 = arith.addi %32, %31 : vector<144x1xi32>
    %c79_i32 = arith.constant 79 : i32
    %34 = vector.broadcast %c79_i32 : i32 to vector<144x1xi32>
    %35 = arith.cmpi slt, %33, %34 : vector<144x1xi32>
    %cst_33 = arith.constant 0.000000e+00 : f32
    %36 = vector.shape_cast %35 : vector<144x1xi1> to vector<144x1xi1>
    %37 = vector.broadcast %36 : vector<144x1xi1> to vector<144x128xi1>
    %38 = vector.broadcast %cst_33 : f32 to vector<144x128xf32>
    %39 = arith.select %37, %22, %38 : vector<144x128xi1>, vector<144x128xf32>
    %c0_34 = arith.constant 0 : index
    %c0_35 = arith.constant 0 : index
    %c0_36 = arith.constant 0 : index
    %40 = vector.load %arg6[%c0_34, %c0_35, %c0_36] : memref<1x2x128xf32, #tpu.memory_space<vmem>>, vector<1x1x128xf32>
    %41 = vector.shape_cast %40 : vector<1x1x128xf32> to vector<1x128xf32>
    %cst_37 = arith.constant dense<0.000000e+00> : vector<128xf32>
    %42 = vector.multi_reduction <add>, %39, %cst_37 [0] : vector<144x128xf32> to vector<128xf32>
    %43 = vector.shape_cast %42 : vector<128xf32> to vector<1x128xf32>
    %44 = arith.addf %41, %43 : vector<1x128xf32>
    %c0_38 = arith.constant 0 : index
    %c0_39 = arith.constant 0 : index
    %c0_40 = arith.constant 0 : index
    %45 = vector.load %arg6[%c0_38, %c0_39, %c0_40] : memref<1x2x128xf32, #tpu.memory_space<vmem>>, vector<1x1x128xf32>
    %46 = vector.shape_cast %45 : vector<1x1x128xf32> to vector<1x128xf32>
    %47 = vector.shape_cast %44 : vector<1x128xf32> to vector<1x1x128xf32>
    tpu.vector_store %arg6[%c0_38, %c0_39, %c0_40], %47 {strides = array<i32>} : memref<1x2x128xf32, #tpu.memory_space<vmem>>, vector<1x1x128xf32>,
    %c0_41 = arith.constant 0 : index
    %c1_42 = arith.constant 1 : index
    %c0_43 = arith.constant 0 : index
    %48 = vector.load %arg6[%c0_41, %c1_42, %c0_43] : memref<1x2x128xf32, #tpu.memory_space<vmem>>, vector<1x1x128xf32>
    %49 = vector.shape_cast %48 : vector<1x1x128xf32> to vector<1x128xf32>
    %50 = arith.mulf %39, %39 : vector<144x128xf32>
    %cst_44 = arith.constant dense<0.000000e+00> : vector<128xf32>
    %51 = vector.multi_reduction <add>, %50, %cst_44 [0] : vector<144x128xf32> to vector<128xf32>
    %52 = vector.shape_cast %51 : vector<128xf32> to vector<1x128xf32>
    %53 = arith.addf %49, %52 : vector<1x128xf32>
    %c0_45 = arith.constant 0 : index
    %c1_46 = arith.constant 1 : index
    %c0_47 = arith.constant 0 : index
    %54 = vector.load %arg6[%c0_45, %c1_46, %c0_47] : memref<1x2x128xf32, #tpu.memory_space<vmem>>, vector<1x1x128xf32>
    %55 = vector.shape_cast %54 : vector<1x1x128xf32> to vector<1x128xf32>
    %56 = vector.shape_cast %53 : vector<1x128xf32> to vector<1x1x128xf32>
    tpu.vector_store %arg6[%c0_45, %c1_46, %c0_47], %56 {strides = array<i32>} : memref<1x2x128xf32, #tpu.memory_space<vmem>>, vector<1x1x128xf32>,
    return
  }
  func.func @transform_0(%arg0: i32, %arg1: i32) -> (i32, i32, i32) {
    %c0_i32 = arith.constant 0 : i32
    %c0_i32_0 = arith.constant 0 : i32
    return %arg0, %arg1, %c0_i32 : i32, i32, i32
  }
  func.func @transform_1(%arg0: i32, %arg1: i32) -> (i32, i32, i32) {
    %c1_i32 = arith.constant 1 : i32
    %0 = arith.addi %arg1, %c1_i32 : i32
    %c18_i32 = arith.constant 18 : i32
    %1 = arith.muli %0, %c18_i32 : i32
    %c0_i32 = arith.constant 0 : i32
    %c0_i32_0 = arith.constant 0 : i32
    return %arg0, %1, %c0_i32 : i32, i32, i32
  }
  func.func @transform_2(%arg0: i32, %arg1: i32) -> (i32, i32, i32) {
    %c0_i32 = arith.constant 0 : i32
    %c0_i32_0 = arith.constant 0 : i32
    %c0_i32_1 = arith.constant 0 : i32
    %c0_i32_2 = arith.constant 0 : i32
    return %c0_i32, %c0_i32_0, %c0_i32_1 : i32, i32, i32
  }
  func.func @transform_3(%arg0: i32, %arg1: i32) -> (i32, i32, i32) {
    %c0_i32 = arith.constant 0 : i32
    %c0_i32_0 = arith.constant 0 : i32
    return %arg0, %arg1, %c0_i32 : i32, i32, i32
  }
  func.func @transform_4(%arg0: i32, %arg1: i32) -> (i32, i32, i32) {
    %c0_i32 = arith.constant 0 : i32
    %c0_i32_0 = arith.constant 0 : i32
    %c0_i32_1 = arith.constant 0 : i32
    return %arg0, %c0_i32, %c0_i32_0 : i32, i32, i32
  }
}

module attributes {stable_mosaic.version = 11 : i64} {
  func.func @_norm_gelu_kernel(%arg0: i32, %arg1: i32, %arg2: memref<1x144x128xbf16, #tpu.memory_space<vmem>>, %arg3: memref<1x1x128xf32, #tpu.memory_space<vmem>>, %arg4: memref<1x1x128xf32, #tpu.memory_space<vmem>>, %arg5: memref<1x144x128xbf16, #tpu.memory_space<vmem>>) attributes {dimension_semantics = [#tpu.dimension_semantics<parallel>, #tpu.dimension_semantics<parallel>], iteration_bounds = array<i64: 2, 1>, scalar_prefetch = 0 : i64, scratch_operands = 0 : i64, tpu.core_type = #tpu.core_type<tc>, window_params = [{transform_indices = @transform_0, window_bounds = array<i64: 1, 144, 128>}, {transform_indices = @transform_1, window_bounds = array<i64: 1, 1, 128>}, {transform_indices = @transform_2, window_bounds = array<i64: 1, 1, 128>}, {transform_indices = @transform_3, window_bounds = array<i64: 1, 144, 128>}]} {
    %c0 = arith.constant 0 : index
    %c0_0 = arith.constant 0 : index
    %c0_1 = arith.constant 0 : index
    %0 = vector.load %arg2[%c0, %c0_0, %c0_1] : memref<1x144x128xbf16, #tpu.memory_space<vmem>>, vector<1x144x128xbf16>
    %1 = vector.shape_cast %0 : vector<1x144x128xbf16> to vector<144x128xbf16>
    %2 = arith.extf %1 : vector<144x128xbf16> to vector<144x128xf32>
    %c0_2 = arith.constant 0 : index
    %c0_3 = arith.constant 0 : index
    %c0_4 = arith.constant 0 : index
    %3 = vector.load %arg3[%c0_2, %c0_3, %c0_4] : memref<1x1x128xf32, #tpu.memory_space<vmem>>, vector<1x1x128xf32>
    %4 = vector.shape_cast %3 : vector<1x1x128xf32> to vector<1x128xf32>
    %5 = vector.broadcast %4 : vector<1x128xf32> to vector<144x128xf32>
    %6 = arith.mulf %2, %5 : vector<144x128xf32>
    %c0_5 = arith.constant 0 : index
    %c0_6 = arith.constant 0 : index
    %c0_7 = arith.constant 0 : index
    %7 = vector.load %arg4[%c0_5, %c0_6, %c0_7] : memref<1x1x128xf32, #tpu.memory_space<vmem>>, vector<1x1x128xf32>
    %8 = vector.shape_cast %7 : vector<1x1x128xf32> to vector<1x128xf32>
    %9 = vector.broadcast %8 : vector<1x128xf32> to vector<144x128xf32>
    %10 = arith.addf %6, %9 : vector<144x128xf32>
    %cst = arith.constant 5.000000e-01 : f32
    %11 = vector.broadcast %cst : f32 to vector<144x128xf32>
    %12 = arith.mulf %11, %10 : vector<144x128xf32>
    %cst_8 = arith.constant 0.707106769 : f32
    %13 = vector.broadcast %cst_8 : f32 to vector<144x128xf32>
    %14 = arith.mulf %10, %13 : vector<144x128xf32>
    %15 = math.erf %14 : vector<144x128xf32>
    %cst_9 = arith.constant 1.000000e+00 : f32
    %16 = vector.broadcast %cst_9 : f32 to vector<144x128xf32>
    %17 = arith.addf %16, %15 : vector<144x128xf32>
    %18 = arith.mulf %12, %17 : vector<144x128xf32>
    %19 = arith.truncf %18 : vector<144x128xf32> to vector<144x128xbf16>
    %c0_10 = arith.constant 0 : index
    %c0_11 = arith.constant 0 : index
    %c0_12 = arith.constant 0 : index
    %20 = vector.load %arg5[%c0_10, %c0_11, %c0_12] : memref<1x144x128xbf16, #tpu.memory_space<vmem>>, vector<1x144x128xbf16>
    %21 = vector.shape_cast %20 : vector<1x144x128xbf16> to vector<144x128xbf16>
    %22 = vector.shape_cast %19 : vector<144x128xbf16> to vector<1x144x128xbf16>
    tpu.vector_store %arg5[%c0_10, %c0_11, %c0_12], %22 {strides = array<i32>} : memref<1x144x128xbf16, #tpu.memory_space<vmem>>, vector<1x144x128xbf16>,
    return
  }
  func.func @transform_0(%arg0: i32, %arg1: i32) -> (i32, i32, i32) {
    %c0_i32 = arith.constant 0 : i32
    %c0_i32_0 = arith.constant 0 : i32
    return %arg0, %arg1, %c0_i32 : i32, i32, i32
  }
  func.func @transform_1(%arg0: i32, %arg1: i32) -> (i32, i32, i32) {
    %c0_i32 = arith.constant 0 : i32
    %c0_i32_0 = arith.constant 0 : i32
    %c0_i32_1 = arith.constant 0 : i32
    return %arg0, %c0_i32, %c0_i32_0 : i32, i32, i32
  }
  func.func @transform_2(%arg0: i32, %arg1: i32) -> (i32, i32, i32) {
    %c0_i32 = arith.constant 0 : i32
    %c0_i32_0 = arith.constant 0 : i32
    %c0_i32_1 = arith.constant 0 : i32
    return %arg0, %c0_i32, %c0_i32_0 : i32, i32, i32
  }
  func.func @transform_3(%arg0: i32, %arg1: i32) -> (i32, i32, i32) {
    %c0_i32 = arith.constant 0 : i32
    %c0_i32_0 = arith.constant 0 : i32
    return %arg0, %arg1, %c0_i32 : i32, i32, i32
  }
}

module attributes {stable_mosaic.version = 11 : i64} {
  func.func @kernel(%arg0: i32, %arg1: i32, %arg2: memref<1x64x256xbf16, #tpu.memory_space<vmem>>, %arg3: memref<1x8x256xbf16, #tpu.memory_space<vmem>>, %arg4: memref<2x256x128xbf16, #tpu.memory_space<vmem>>, %arg5: memref<1x64x128xbf16, #tpu.memory_space<vmem>>, %arg6: memref<64x128xf32, #tpu.memory_space<vmem>>) attributes {dimension_semantics = [#tpu.dimension_semantics<parallel>, #tpu.dimension_semantics<parallel>], iteration_bounds = array<i64: 2, 1>, scalar_prefetch = 0 : i64, scratch_operands = 1 : i64, tpu.core_type = #tpu.core_type<tc>, window_params = [{transform_indices = @transform_0, window_bounds = array<i64: 1, 64, 256>}, {transform_indices = @transform_1, window_bounds = array<i64: 1, 8, 256>}, {pipeline_mode = #tpu.pipeline_mode<synchronous>, transform_indices = @transform_2, window_bounds = array<i64: 2, 256, 128>}, {transform_indices = @transform_3, window_bounds = array<i64: 1, 64, 128>}]} {
    %c0 = arith.constant 0 : index
    %c0_0 = arith.constant 0 : index
    %c0_1 = arith.constant 0 : index
    %0 = vector.load %arg2[%c0, %c0_0, %c0_1] : memref<1x64x256xbf16, #tpu.memory_space<vmem>>, vector<1x64x256xbf16>
    %1 = vector.shape_cast %0 : vector<1x64x256xbf16> to vector<64x256xbf16>
    %c0_2 = arith.constant 0 : index
    %c0_3 = arith.constant 0 : index
    %c0_4 = arith.constant 0 : index
    %2 = vector.load %arg4[%c0_2, %c0_3, %c0_4] : memref<2x256x128xbf16, #tpu.memory_space<vmem>>, vector<1x256x128xbf16>
    %3 = vector.shape_cast %2 : vector<1x256x128xbf16> to vector<256x128xbf16>
    %cst = arith.constant dense<0.000000e+00> : vector<64x128xf32>
    %4 = tpu.matmul %1, %3, %cst {dimension_numbers = #tpu.dot_dimension_numbers<[1], [0], [0], [1], [0, 0, 1, 1], [], []>} : vector<64x256xbf16>, vector<256x128xbf16>, vector<64x128xf32> -> vector<64x128xf32>
    %c0_5 = arith.constant 0 : index
    %c0_6 = arith.constant 0 : index
    %5 = vector.load %arg6[%c0_5, %c0_6] : memref<64x128xf32, #tpu.memory_space<vmem>>, vector<64x128xf32>
    tpu.vector_store %arg6[%c0_5, %c0_6], %4 {strides = array<i32>} : memref<64x128xf32, #tpu.memory_space<vmem>>, vector<64x128xf32>,
    %c0_7 = arith.constant 0 : index
    %c0_8 = arith.constant 0 : index
    %6 = vector.load %arg6[%c0_7, %c0_8] : memref<64x128xf32, #tpu.memory_space<vmem>>, vector<63x128xf32>
    %c0_9 = arith.constant 0 : index
    %c1 = arith.constant 1 : index
    %c0_10 = arith.constant 0 : index
    %7 = vector.load %arg2[%c0_9, %c1, %c0_10] : memref<1x64x256xbf16, #tpu.memory_space<vmem>>, vector<1x63x256xbf16>
    %8 = vector.shape_cast %7 : vector<1x63x256xbf16> to vector<63x256xbf16>
    %c1_11 = arith.constant 1 : index
    %c0_12 = arith.constant 0 : index
    %c0_13 = arith.constant 0 : index
    %9 = vector.load %arg4[%c1_11, %c0_12, %c0_13] : memref<2x256x128xbf16, #tpu.memory_space<vmem>>, vector<1x256x128xbf16>
    %10 = vector.shape_cast %9 : vector<1x256x128xbf16> to vector<256x128xbf16>
    %cst_14 = arith.constant dense<0.000000e+00> : vector<63x128xf32>
    %11 = tpu.matmul %8, %10, %cst_14 {dimension_numbers = #tpu.dot_dimension_numbers<[1], [0], [0], [1], [0, 0, 1, 1], [], []>} : vector<63x256xbf16>, vector<256x128xbf16>, vector<63x128xf32> -> vector<63x128xf32>
    %12 = arith.addf %6, %11 : vector<63x128xf32>
    %c0_15 = arith.constant 0 : index
    %c0_16 = arith.constant 0 : index
    %13 = vector.load %arg6[%c0_15, %c0_16] : memref<64x128xf32, #tpu.memory_space<vmem>>, vector<63x128xf32>
    tpu.vector_store %arg6[%c0_15, %c0_16], %12 {strides = array<i32>} : memref<64x128xf32, #tpu.memory_space<vmem>>, vector<63x128xf32>,
    %c63 = arith.constant 63 : index
    %c0_17 = arith.constant 0 : index
    %14 = vector.load %arg6[%c63, %c0_17] : memref<64x128xf32, #tpu.memory_space<vmem>>, vector<1x128xf32>
    %c0_18 = arith.constant 0 : index
    %c0_19 = arith.constant 0 : index
    %c0_20 = arith.constant 0 : index
    %15 = vector.load %arg3[%c0_18, %c0_19, %c0_20] : memref<1x8x256xbf16, #tpu.memory_space<vmem>>, vector<1x1x256xbf16>
    %16 = vector.shape_cast %15 : vector<1x1x256xbf16> to vector<1x256xbf16>
    %c1_21 = arith.constant 1 : index
    %c0_22 = arith.constant 0 : index
    %c0_23 = arith.constant 0 : index
    %17 = vector.load %arg4[%c1_21, %c0_22, %c0_23] : memref<2x256x128xbf16, #tpu.memory_space<vmem>>, vector<1x256x128xbf16>
    %18 = vector.shape_cast %17 : vector<1x256x128xbf16> to vector<256x128xbf16>
    %cst_24 = arith.constant dense<0.000000e+00> : vector<1x128xf32>
    %19 = tpu.matmul %16, %18, %cst_24 {dimension_numbers = #tpu.dot_dimension_numbers<[1], [0], [0], [1], [0, 0, 1, 1], [], []>} : vector<1x256xbf16>, vector<256x128xbf16>, vector<1x128xf32> -> vector<1x128xf32>
    %20 = arith.addf %14, %19 : vector<1x128xf32>
    %c63_25 = arith.constant 63 : index
    %c0_26 = arith.constant 0 : index
    %21 = vector.load %arg6[%c63_25, %c0_26] : memref<64x128xf32, #tpu.memory_space<vmem>>, vector<1x128xf32>
    tpu.vector_store %arg6[%c63_25, %c0_26], %20 {strides = array<i32>} : memref<64x128xf32, #tpu.memory_space<vmem>>, vector<1x128xf32>,
    %c0_27 = arith.constant 0 : index
    %c0_28 = arith.constant 0 : index
    %22 = vector.load %arg6[%c0_27, %c0_28] : memref<64x128xf32, #tpu.memory_space<vmem>>, vector<64x128xf32>
    %cst_29 = arith.constant 5.000000e-01 : f32
    %23 = vector.broadcast %cst_29 : f32 to vector<64x128xf32>
    %24 = arith.mulf %23, %22 : vector<64x128xf32>
    %cst_30 = arith.constant 0.707106769 : f32
    %25 = vector.broadcast %cst_30 : f32 to vector<64x128xf32>
    %26 = arith.mulf %22, %25 : vector<64x128xf32>
    %27 = math.erf %26 : vector<64x128xf32>
    %cst_31 = arith.constant 1.000000e+00 : f32
    %28 = vector.broadcast %cst_31 : f32 to vector<64x128xf32>
    %29 = arith.addf %28, %27 : vector<64x128xf32>
    %30 = arith.mulf %24, %29 : vector<64x128xf32>
    %31 = arith.truncf %30 : vector<64x128xf32> to vector<64x128xbf16>
    %c0_32 = arith.constant 0 : index
    %c0_33 = arith.constant 0 : index
    %c0_34 = arith.constant 0 : index
    %32 = vector.load %arg5[%c0_32, %c0_33, %c0_34] : memref<1x64x128xbf16, #tpu.memory_space<vmem>>, vector<1x64x128xbf16>
    %33 = vector.shape_cast %32 : vector<1x64x128xbf16> to vector<64x128xbf16>
    %34 = vector.shape_cast %31 : vector<64x128xbf16> to vector<1x64x128xbf16>
    tpu.vector_store %arg5[%c0_32, %c0_33, %c0_34], %34 {strides = array<i32>} : memref<1x64x128xbf16, #tpu.memory_space<vmem>>, vector<1x64x128xbf16>,
    return
  }
  func.func @transform_0(%arg0: i32, %arg1: i32) -> (i32, i32, i32) {
    %c0_i32 = arith.constant 0 : i32
    %c0_i32_0 = arith.constant 0 : i32
    return %arg0, %arg1, %c0_i32 : i32, i32, i32
  }
  func.func @transform_1(%arg0: i32, %arg1: i32) -> (i32, i32, i32) {
    %c1_i32 = arith.constant 1 : i32
    %0 = arith.addi %arg1, %c1_i32 : i32
    %c8_i32 = arith.constant 8 : i32
    %1 = arith.muli %0, %c8_i32 : i32
    %c0_i32 = arith.constant 0 : i32
    %c0_i32_0 = arith.constant 0 : i32
    return %arg0, %1, %c0_i32 : i32, i32, i32
  }
  func.func @transform_2(%arg0: i32, %arg1: i32) -> (i32, i32, i32) {
    %c0_i32 = arith.constant 0 : i32
    %c0_i32_0 = arith.constant 0 : i32
    %c0_i32_1 = arith.constant 0 : i32
    %c0_i32_2 = arith.constant 0 : i32
    return %c0_i32, %c0_i32_0, %c0_i32_1 : i32, i32, i32
  }
  func.func @transform_3(%arg0: i32, %arg1: i32) -> (i32, i32, i32) {
    %c0_i32 = arith.constant 0 : i32
    %c0_i32_0 = arith.constant 0 : i32
    return %arg0, %arg1, %c0_i32 : i32, i32, i32
  }
}

module attributes {stable_mosaic.version = 11 : i64} {
  func.func @kernel(%arg0: i32, %arg1: i32, %arg2: memref<1x24x256xbf16, #tpu.memory_space<vmem>>, %arg3: memref<1x8x256xbf16, #tpu.memory_space<vmem>>, %arg4: memref<1x256x128xbf16, #tpu.memory_space<vmem>>, %arg5: memref<1x24x128xf32, #tpu.memory_space<vmem>>, %arg6: memref<24x128xf32, #tpu.memory_space<vmem>>) attributes {dimension_semantics = [#tpu.dimension_semantics<parallel>, #tpu.dimension_semantics<parallel>], iteration_bounds = array<i64: 2, 1>, scalar_prefetch = 0 : i64, scratch_operands = 1 : i64, tpu.core_type = #tpu.core_type<tc>, window_params = [{transform_indices = @transform_0, window_bounds = array<i64: 1, 24, 256>}, {transform_indices = @transform_1, window_bounds = array<i64: 1, 8, 256>}, {pipeline_mode = #tpu.pipeline_mode<synchronous>, transform_indices = @transform_2, window_bounds = array<i64: 1, 256, 128>}, {transform_indices = @transform_3, window_bounds = array<i64: 1, 24, 128>}]} {
    %c0 = arith.constant 0 : index
    %c0_0 = arith.constant 0 : index
    %c0_1 = arith.constant 0 : index
    %0 = vector.load %arg2[%c0, %c0_0, %c0_1] : memref<1x24x256xbf16, #tpu.memory_space<vmem>>, vector<1x24x256xbf16>
    %1 = vector.shape_cast %0 : vector<1x24x256xbf16> to vector<24x256xbf16>
    %c0_2 = arith.constant 0 : index
    %c0_3 = arith.constant 0 : index
    %c0_4 = arith.constant 0 : index
    %2 = vector.load %arg4[%c0_2, %c0_3, %c0_4] : memref<1x256x128xbf16, #tpu.memory_space<vmem>>, vector<1x256x128xbf16>
    %3 = vector.shape_cast %2 : vector<1x256x128xbf16> to vector<256x128xbf16>
    %cst = arith.constant dense<0.000000e+00> : vector<24x128xf32>
    %4 = tpu.matmul %1, %3, %cst {dimension_numbers = #tpu.dot_dimension_numbers<[1], [0], [0], [1], [0, 0, 1, 1], [], []>} : vector<24x256xbf16>, vector<256x128xbf16>, vector<24x128xf32> -> vector<24x128xf32>
    %c0_5 = arith.constant 0 : index
    %c0_6 = arith.constant 0 : index
    %5 = vector.load %arg6[%c0_5, %c0_6] : memref<24x128xf32, #tpu.memory_space<vmem>>, vector<24x128xf32>
    tpu.vector_store %arg6[%c0_5, %c0_6], %4 {strides = array<i32>} : memref<24x128xf32, #tpu.memory_space<vmem>>, vector<24x128xf32>,
    %c0_7 = arith.constant 0 : index
    %c0_8 = arith.constant 0 : index
    %6 = vector.load %arg6[%c0_7, %c0_8] : memref<24x128xf32, #tpu.memory_space<vmem>>, vector<24x128xf32>
    %cst_9 = arith.constant 5.000000e-01 : f32
    %7 = vector.broadcast %cst_9 : f32 to vector<24x128xf32>
    %8 = arith.mulf %7, %6 : vector<24x128xf32>
    %cst_10 = arith.constant 0.707106769 : f32
    %9 = vector.broadcast %cst_10 : f32 to vector<24x128xf32>
    %10 = arith.mulf %6, %9 : vector<24x128xf32>
    %11 = math.erf %10 : vector<24x128xf32>
    %cst_11 = arith.constant 1.000000e+00 : f32
    %12 = vector.broadcast %cst_11 : f32 to vector<24x128xf32>
    %13 = arith.addf %12, %11 : vector<24x128xf32>
    %14 = arith.mulf %8, %13 : vector<24x128xf32>
    %c0_12 = arith.constant 0 : index
    %c0_13 = arith.constant 0 : index
    %c0_14 = arith.constant 0 : index
    %15 = vector.load %arg5[%c0_12, %c0_13, %c0_14] : memref<1x24x128xf32, #tpu.memory_space<vmem>>, vector<1x24x128xf32>
    %16 = vector.shape_cast %15 : vector<1x24x128xf32> to vector<24x128xf32>
    %17 = vector.shape_cast %14 : vector<24x128xf32> to vector<1x24x128xf32>
    tpu.vector_store %arg5[%c0_12, %c0_13, %c0_14], %17 {strides = array<i32>} : memref<1x24x128xf32, #tpu.memory_space<vmem>>, vector<1x24x128xf32>,
    return
  }
  func.func @transform_0(%arg0: i32, %arg1: i32) -> (i32, i32, i32) {
    %c0_i32 = arith.constant 0 : i32
    %c0_i32_0 = arith.constant 0 : i32
    return %arg0, %arg1, %c0_i32 : i32, i32, i32
  }
  func.func @transform_1(%arg0: i32, %arg1: i32) -> (i32, i32, i32) {
    %c1_i32 = arith.constant 1 : i32
    %0 = arith.addi %arg1, %c1_i32 : i32
    %c3_i32 = arith.constant 3 : i32
    %1 = arith.muli %0, %c3_i32 : i32
    %c0_i32 = arith.constant 0 : i32
    %c0_i32_0 = arith.constant 0 : i32
    return %arg0, %1, %c0_i32 : i32, i32, i32
  }
  func.func @transform_2(%arg0: i32, %arg1: i32) -> (i32, i32, i32) {
    %c0_i32 = arith.constant 0 : i32
    %c0_i32_0 = arith.constant 0 : i32
    %c0_i32_1 = arith.constant 0 : i32
    %c0_i32_2 = arith.constant 0 : i32
    return %c0_i32, %c0_i32_0, %c0_i32_1 : i32, i32, i32
  }
  func.func @transform_3(%arg0: i32, %arg1: i32) -> (i32, i32, i32) {
    %c0_i32 = arith.constant 0 : i32
    %c0_i32_0 = arith.constant 0 : i32
    return %arg0, %arg1, %c0_i32 : i32, i32, i32
  }
}

</mosaic_0001>

<llo_original>
// kernel: feature_extractor.5
$region0: #{feature_extractor.5}
  #allocation0 [shape = 'u32[]', space=smem, size = 0x4, offset = 0x4, fixed_abs, tag = 'smem constant byte address 0x4 - core index']
  #allocation1 [shape = 'u32[144,128]{1,0:T(1,128)}', space=vmem, size = 0x12000, scoped, tag = 'internal scratch']
  %s0 = inlined_call_operand.vmem [shape: bf16[2,144,128], index: 0, kind: input, shape index: {}]
  %s1 = inlined_call_operand.vmem [shape: f32[2,1,128], index: 1, kind: input, shape index: {}]
  %s2 = inlined_call_operand.vmem [shape: f32[2,1,128], index: 2, kind: input, shape index: {}]
  %s3 = inlined_call_operand.vmem [shape: bf16[2,144,128], index: 3, kind: output, shape index: {}]
  %s4 = sld [smem:[#allocation0]]
  $region45: #{feature_extractor.5} parent=0
    _
  %s6 = ssub.s32 1, %s4
  %s7 = scalar_select 0, %s6, %s4
  loop: start=0, step=1, limit=4
  $region2: #{feature_extractor.5} parent=0 // loop_pre_header
    _
  $region3: #{feature_extractor.5} parent=0 // loop_header
    %s9 = sphi 0, %s13
    %p10 = scmp.ge.s32.totalorder %s9, 4
    %s16 = sphi 0, %s28
    %s17 = sphi 0, %s24
    %s18 = sphi 0, %s16
    %s19 = sphi 0, %s17
    %s20 = sphi 0, %s18
    %s21 = sphi 0, %s19
    %s33 = sphi 0, %s35
    %s36 = sphi 0, %s33
    %s37 = sphi 0, %s36
    %s53 = sphi 0, %s37
    %s59 = sphi 0, %s61
    %s62 = sphi 0, %s59
    %s63 = sphi 0, %s62
    %s79 = sphi 0, %s63
    %s85 = sphi 0, %s87
    %s88 = sphi 0, %s85
    %s89 = sphi 0, %s88
    %s105 = sphi 0, %s89
    %s113 = sphi 0, %s115
    %s116 = sphi 0, %s113
    %s117 = sphi 0, %s116
    %s133 = sphi 0, %s117
  $region4: #{feature_extractor.5} parent=0 // loop_header_branch
    %12 = sbr.rel (%p10) target = $region8
  $region5: #{feature_extractor.5} parent=0 // loop_body
    %s14 = ssub.s32 %s9, 1
    %s15 = ssub.s32 %s9, 2
    %s22 = sadd.s32 1, %s17
    %p23 = scmp.ge.s32.totalorder %s22, 1
    %s24 = scalar_select %p23, 0, %s22
    %s25 = sadd.s32 1, %s16
    %s26 = scalar_select %p23, %s25, %s16
    %p27 = scmp.ge.s32.totalorder %s26, 2
    %s28 = scalar_select %p27, 0, %s26
    %s29 = ssub.s32 %s16, %s28
    %s30 = ssub.s32 %s17, %s24
    %s31 = sor.u32 %s29, %s30
    %p32 = scmp.eq.s32.totalorder %s31, 0
    %s34 = sadd.s32 %s33, 1
    %s35 = scalar_select %p32, %s33, %s34
    %p38 = pneg %p32
    %p39 = scmp.eq.s32.totalorder %s9, 1
    %p40 = por %p38, %p39
    %p41 = scmp.ne.s32.totalorder %s33, %s36
    %p42 = scmp.eq.s32.totalorder %s9, 0
    %p43 = por %p41, %p42
    %p44 = scmp.ne.s32.totalorder %s33, %s36
    %p45 = scmp.eq.s32.totalorder %s14, 1
    %p46 = por %p44, %p45
    %p47 = scmp.ne.s32.totalorder %s36, %s37
    %p48 = scmp.eq.s32.totalorder %s14, 0
    %p49 = por %p47, %p48
    %p50 = scmp.ne.s32.totalorder %s36, %s37
    %p51 = scmp.eq.s32.totalorder %s15, 1
    %p52 = por %p50, %p51
    %p54 = scmp.ne.s32.totalorder %s37, %s53
    %p55 = scmp.eq.s32.totalorder %s15, 0
    %p56 = por %p54, %p55
    %s57 = ssub.s32 %s16, %s28
    %p58 = scmp.eq.s32.totalorder %s57, 0
    %s60 = sadd.s32 %s59, 1
    %s61 = scalar_select %p58, %s59, %s60
    %p64 = pneg %p58
    %p65 = scmp.eq.s32.totalorder %s9, 1
    %p66 = por %p64, %p65
    %p67 = scmp.ne.s32.totalorder %s59, %s62
    %p68 = scmp.eq.s32.totalorder %s9, 0
    %p69 = por %p67, %p68
    %p70 = scmp.ne.s32.totalorder %s59, %s62
    %p71 = scmp.eq.s32.totalorder %s14, 1
    %p72 = por %p70, %p71
    %p73 = scmp.ne.s32.totalorder %s62, %s63
    %p74 = scmp.eq.s32.totalorder %s14, 0
    %p75 = por %p73, %p74
    %p76 = scmp.ne.s32.totalorder %s62, %s63
    %p77 = scmp.eq.s32.totalorder %s15, 1
    %p78 = por %p76, %p77
    %p80 = scmp.ne.s32.totalorder %s63, %s79
    %p81 = scmp.eq.s32.totalorder %s15, 0
    %p82 = por %p80, %p81
    %s83 = ssub.s32 %s16, %s28
    %p84 = scmp.eq.s32.totalorder %s83, 0
    %s86 = sadd.s32 %s85, 1
    %s87 = scalar_select %p84, %s85, %s86
    %p90 = pneg %p84
    %p91 = scmp.eq.s32.totalorder %s9, 1
    %p92 = por %p90, %p91
    %p93 = scmp.ne.s32.totalorder %s85, %s88
    %p94 = scmp.eq.s32.totalorder %s9, 0
    %p95 = por %p93, %p94
    %p96 = scmp.ne.s32.totalorder %s85, %s88
    %p97 = scmp.eq.s32.totalorder %s14, 1
    %p98 = por %p96, %p97
    %p99 = scmp.ne.s32.totalorder %s88, %s89
    %p100 = scmp.eq.s32.totalorder %s14, 0
    %p101 = por %p99, %p100
    %p102 = scmp.ne.s32.totalorder %s88, %s89
    %p103 = scmp.eq.s32.totalorder %s15, 1
    %p104 = por %p102, %p103
    %p106 = scmp.ne.s32.totalorder %s89, %s105
    %p107 = scmp.eq.s32.totalorder %s15, 0
    %p108 = por %p106, %p107
    %s109 = ssub.s32 %s16, %s28
    %s110 = ssub.s32 %s17, %s24
    %s111 = sor.u32 %s109, %s110
    %p112 = scmp.eq.s32.totalorder %s111, 0
    %s114 = sadd.s32 %s113, 1
    %s115 = scalar_select %p112, %s113, %s114
    %p118 = pneg %p112
    %p119 = scmp.eq.s32.totalorder %s9, 1
    %p120 = por %p118, %p119
    %p121 = scmp.ne.s32.totalorder %s113, %s116
    %p122 = scmp.eq.s32.totalorder %s9, 0
    %p123 = por %p121, %p122
    %p124 = scmp.ne.s32.totalorder %s113, %s116
    %p125 = scmp.eq.s32.totalorder %s14, 1
    %p126 = por %p124, %p125
    %p127 = scmp.ne.s32.totalorder %s116, %s117
    %p128 = scmp.eq.s32.totalorder %s14, 0
    %p129 = por %p127, %p128
    %p130 = scmp.ne.s32.totalorder %s116, %s117
    %p131 = scmp.eq.s32.totalorder %s15, 1
    %p132 = por %p130, %p131
    %p134 = scmp.ne.s32.totalorder %s117, %s133
    %p135 = scmp.eq.s32.totalorder %s15, 0
    %p136 = por %p134, %p135
    %p137 = scmp.le.s32.totalorder 1, %s9
    %p138 = scmp.lt.s32.totalorder %s9, 3
    %p139 = pnand %p137, %p138
    %p140 = pneg %p139
    // Predicated region
    $region9: #{feature_extractor.5} parent=5 // pred_check
      _
    $region10: #{feature_extractor.5} parent=5 // pred_check_branch
      %142 = sbr.rel (%p139) target = $region12
    $region11: #{feature_extractor.5} parent=5 // pred_region
      %s143 = ssub.s32 %s9, 1
    $region12: #{feature_extractor.5} parent=5 // pred_fallthru
      _
    %p144 = scmp.lt.s32.totalorder %s9, 2
    // Predicated region
    $region13: #{feature_extractor.5} parent=5 // pred_check
      %p145 = pneg %p144
    $region14: #{feature_extractor.5} parent=5 // pred_check_branch
      %147 = sbr.rel (%p145) target = $region16
    $region15: #{feature_extractor.5} parent=5 // pred_region
      // Predicated region
      $region17: #{feature_extractor.5} parent=15 // pred_check
        %p148 = pneg %p43
      $region18: #{feature_extractor.5} parent=15 // pred_check_branch
        %150 = sbr.rel (%p148) target = $region20
      $region19: #{feature_extractor.5} parent=15 // pred_region
        %s151 = smul.u32 18, %s17
        %p152 = scmp.lt.s32.totalorder %s16, 1
        %s153 = scalar_select %p152, %s16, 1
        %p154 = scmp.lt.s32.totalorder %s151, 17
        %s155 = scalar_select %p154, %s151, 17
        %s156 = smul.addr %s153, 18
        %s157 = sadd.s32 %s155, %s156
        %s158 = smul.addr %s157, 4
        %s159 = scalar_lea.vmem %s0, %s158
        %s160 = smul.u32 18, %s17
      $region20: #{feature_extractor.5} parent=15 // pred_fallthru
        _
      // Predicated region
      $region21: #{feature_extractor.5} parent=15 // pred_check
        %p161 = pneg %p69
      $region22: #{feature_extractor.5} parent=15 // pred_check_branch
        %163 = sbr.rel (%p161) target = $region24
      $region23: #{feature_extractor.5} parent=15 // pred_region
        %p164 = scmp.lt.s32.totalorder %s16, 1
        %s165 = scalar_select %p164, %s16, 1
        %s166 = scalar_lea.vmem %s1, %s165
      $region24: #{feature_extractor.5} parent=15 // pred_fallthru
        _
      // Predicated region
      $region25: #{feature_extractor.5} parent=15 // pred_check
        %p167 = pneg %p95
      $region26: #{feature_extractor.5} parent=15 // pred_check_branch
        %169 = sbr.rel (%p167) target = $region28
      $region27: #{feature_extractor.5} parent=15 // pred_region
        %p170 = scmp.lt.s32.totalorder %s16, 1
        %s171 = scalar_select %p170, %s16, 1
        %s172 = scalar_lea.vmem %s2, %s171
      $region28: #{feature_extractor.5} parent=15 // pred_fallthru
        _
    $region16: #{feature_extractor.5} parent=5 // pred_fallthru
      _
    %p173 = scmp.le.s32.totalorder 1, %s9
    %p174 = scmp.lt.s32.totalorder %s9, 3
    %p175 = pnand %p173, %p174
    %p176 = pneg %p175
    // Predicated region
    $region29: #{feature_extractor.5} parent=5 // pred_check
      _
    $region30: #{feature_extractor.5} parent=5 // pred_check_branch
      %178 = sbr.rel (%p175) target = $region32
    $region31: #{feature_extractor.5} parent=5 // pred_region
      %s179 = ssub.s32 %s9, 1
      %s180 = smul.u32 18, %s19
      %p181 = scmp.lt.s32.totalorder %s18, 1
      %s182 = scalar_select %p181, %s18, 1
      %p183 = scmp.lt.s32.totalorder %s180, 17
      %s184 = scalar_select %p183, %s180, 17
      %s185 = smul.addr %s182, 18
      %s186 = sadd.s32 %s184, %s185
      %s187 = smul.addr %s186, 4
      %s188 = scalar_lea.vmem %s0, %s187
      %p189 = pneg %p49
      %p190 = pneg %p46
      %p191 = scmp.lt.s32.totalorder %s18, 1
      %s192 = scalar_select %p191, %s18, 1
      %s193 = scalar_lea.vmem %s1, %s192
      %p194 = pneg %p75
      %p195 = pneg %p72
      %p196 = scmp.lt.s32.totalorder %s18, 1
      %s197 = scalar_select %p196, %s18, 1
      %s198 = scalar_lea.vmem %s2, %s197
      %p199 = pneg %p101
      %p200 = pneg %p98
      %p201 = pneg %p129
      %p202 = pneg %p126
      %s203 = smul.u32 18, %s19
      %p204 = scmp.lt.s32.totalorder %s18, 1
      %s205 = scalar_select %p204, %s18, 1
      %p206 = scmp.lt.s32.totalorder %s203, 17
      %s207 = scalar_select %p206, %s203, 17
      %s208 = smul.addr %s205, 18
      %s209 = sadd.s32 %s207, %s208
      %s210 = smul.addr %s209, 4
      %s211 = scalar_lea.vmem %s3, %s210
      %s212 = smul.u32 18, %s19
      %p213 = scmp.lt.s32.totalorder %s18, 1
      %s214 = scalar_select %p213, %s18, 1
      %p215 = scmp.lt.s32.totalorder %s212, 17
      %s216 = scalar_select %p215, %s212, 17
      %s217 = smul.addr %s214, 18
      %s218 = sadd.s32 %s216, %s217
      %s219 = smul.addr %s218, 4
      %s220 = scalar_lea.vmem %s0, %s219
      %s221 = smul.u32 18, %s19
      %p222 = scmp.lt.s32.totalorder %s18, 1
      %s223 = scalar_select %p222, %s18, 1
      %s224 = scalar_lea.vmem %s1, %s223
      %p225 = scmp.lt.s32.totalorder %s18, 1
      %s226 = scalar_select %p225, %s18, 1
      %s227 = scalar_lea.vmem %s2, %s226
      %s228 = smul.u32 18, %s19
      %p229 = scmp.lt.s32.totalorder %s18, 1
      %s230 = scalar_select %p229, %s18, 1
      %p231 = scmp.lt.s32.totalorder %s228, 17
      %s232 = scalar_select %p231, %s228, 17
      %s233 = smul.addr %s230, 18
      %s234 = sadd.s32 %s232, %s233
      %s235 = smul.addr %s234, 4
      %s236 = scalar_lea.vmem %s3, %s235
      %s237 = smul.u32 18, %s19
      %v238 = vld [vmem:[%s220] sm:$0xf]
      %v239 = vld [vmem:[%s220 + $0x4] sm:$0xf]
      %v240 = vld [vmem:[%s220 + $0x8] sm:$0xf]
      %v241 = vld [vmem:[%s220 + $0xc] sm:$0xf]
      %v242 = vld [vmem:[%s220 + $0x10] sm:$0xf]
      %v243 = vld [vmem:[%s220 + $0x14] sm:$0xf]
      %v244 = vld [vmem:[%s220 + $0x18] sm:$0xf]
      %v245 = vld [vmem:[%s220 + $0x1c] sm:$0xf]
      %v246 = vld [vmem:[%s220 + $0x20] sm:$0xf]
      %v247 = vld [vmem:[%s220 + $0x24] sm:$0xf]
      %v248 = vld [vmem:[%s220 + $0x28] sm:$0xf]
      %v249 = vld [vmem:[%s220 + $0x2c] sm:$0xf]
      %v250 = vld [vmem:[%s220 + $0x30] sm:$0xf]
      %v251 = vld [vmem:[%s220 + $0x34] sm:$0xf]
      %v252 = vld [vmem:[%s220 + $0x38] sm:$0xf]
      %v253 = vld [vmem:[%s220 + $0x3c] sm:$0xf]
      %v254 = vld [vmem:[%s220 + $0x40] sm:$0xf]
      %v255 = vld [vmem:[%s220 + $0x44] sm:$0xf]
      %v256 = vunpack.c.l.bf16 %v238
      %v257 = vunpack.c.l.bf16 %v239
      %v258 = vunpack.c.l.bf16 %v240
      %v259 = vunpack.c.l.bf16 %v241
      %v260 = vunpack.c.l.bf16 %v242
      %v261 = vunpack.c.l.bf16 %v243
      %v262 = vunpack.c.l.bf16 %v244
      %v263 = vunpack.c.l.bf16 %v245
      %v264 = vunpack.c.l.bf16 %v246
      %v265 = vunpack.c.l.bf16 %v247
      %v266 = vunpack.c.l.bf16 %v248
      %v267 = vunpack.c.l.bf16 %v249
      %v268 = vunpack.c.l.bf16 %v250
      %v269 = vunpack.c.l.bf16 %v251
      %v270 = vunpack.c.l.bf16 %v252
      %v271 = vunpack.c.l.bf16 %v253
      %v272 = vunpack.c.l.bf16 %v254
      %v273 = vunpack.c.l.bf16 %v255
      %v274 = vld [vmem:[%s224] sm:$0x1]
      %v276 = vlaneseq
      %v277 = vshrl.u32 %v276, 7
      %v278 = vsub.s32 0, %v277
      %v279 = vrot.slane %v274, %v278
      %v281 = vmul.f32 %v256, %v279
      %v282 = vmul.f32 %v257, %v279
      %v283 = vmul.f32 %v258, %v279
      %v284 = vmul.f32 %v259, %v279
      %v285 = vmul.f32 %v260, %v279
      %v286 = vmul.f32 %v261, %v279
      %v287 = vmul.f32 %v262, %v279
      %v288 = vmul.f32 %v263, %v279
      %v289 = vmul.f32 %v264, %v279
      %v290 = vmul.f32 %v265, %v279
      %v291 = vmul.f32 %v266, %v279
      %v292 = vmul.f32 %v267, %v279
      %v293 = vmul.f32 %v268, %v279
      %v294 = vmul.f32 %v269, %v279
      %v295 = vmul.f32 %v270, %v279
      %v296 = vmul.f32 %v271, %v279
      %v297 = vmul.f32 %v272, %v279
      %v298 = vmul.f32 %v273, %v279
      %v299 = vld [vmem:[%s227] sm:$0x1]
      %v301 = vlaneseq
      %v302 = vshrl.u32 %v301, 7
      %v303 = vsub.s32 0, %v302
      %v304 = vrot.slane %v299, %v303
      %v306 = vadd.f32 %v281, %v304
      %v307 = vadd.f32 %v282, %v304
      %v308 = vadd.f32 %v283, %v304
      %v309 = vadd.f32 %v284, %v304
      %v310 = vadd.f32 %v285, %v304
      %v311 = vadd.f32 %v286, %v304
      %v312 = vadd.f32 %v287, %v304
      %v313 = vadd.f32 %v288, %v304
      %v314 = vadd.f32 %v289, %v304
      %v315 = vadd.f32 %v290, %v304
      %v316 = vadd.f32 %v291, %v304
      %v317 = vadd.f32 %v292, %v304
      %v318 = vadd.f32 %v293, %v304
      %v319 = vadd.f32 %v294, %v304
      %v320 = vadd.f32 %v295, %v304
      %v321 = vadd.f32 %v296, %v304
      %v322 = vadd.f32 %v297, %v304
      %v323 = vadd.f32 %v298, %v304
      %v324 = vmul.f32 %v306, 0.5
      %v325 = vmul.f32 %v307, 0.5
      %v326 = vmul.f32 %v308, 0.5
      %v327 = vmul.f32 %v309, 0.5
      %v328 = vmul.f32 %v310, 0.5
      %v329 = vmul.f32 %v311, 0.5
      %v330 = vmul.f32 %v312, 0.5
      %v331 = vmul.f32 %v313, 0.5
      %v332 = vmul.f32 %v314, 0.5
      %v333 = vmul.f32 %v315, 0.5
      %v334 = vmul.f32 %v316, 0.5
      %v335 = vmul.f32 %v317, 0.5
      %v336 = vmul.f32 %v318, 0.5
      %v337 = vmul.f32 %v319, 0.5
      %v338 = vmul.f32 %v320, 0.5
      %v339 = vmul.f32 %v321, 0.5
      %v340 = vmul.f32 %v322, 0.5
      %v341 = vmul.f32 %v323, 0.5
      %v342 = vmul.f32 %v306, 0.70710677
      %v343 = vmul.f32 %v307, 0.70710677
      %v344 = vmul.f32 %v308, 0.70710677
      %v345 = vmul.f32 %v309, 0.70710677
      %v346 = vmul.f32 %v310, 0.70710677
      %v347 = vmul.f32 %v311, 0.70710677
      %v348 = vmul.f32 %v312, 0.70710677
      %v349 = vmul.f32 %v313, 0.70710677
      %v350 = vmul.f32 %v314, 0.70710677
      %v351 = vmul.f32 %v315, 0.70710677
      %v352 = vmul.f32 %v316, 0.70710677
      %v353 = vmul.f32 %v317, 0.70710677
      %v354 = vmul.f32 %v318, 0.70710677
      %v355 = vmul.f32 %v319, 0.70710677
      %v356 = vmul.f32 %v320, 0.70710677
      %v357 = vmul.f32 %v321, 0.70710677
      %v358 = vmul.f32 %v322, 0.70710677
      %v359 = vmul.f32 %v323, 0.70710677
      %v360 = verf.f32.pop %v342
      %v361 = verf.f32.pop %v343
      %v362 = verf.f32.pop %v344
      %v363 = verf.f32.pop %v345
      %v364 = verf.f32.pop %v346
      %v365 = verf.f32.pop %v347
      %v366 = verf.f32.pop %v348
      %v367 = verf.f32.pop %v349
      %v368 = verf.f32.pop %v350
      %v369 = verf.f32.pop %v351
      %v370 = verf.f32.pop %v352
      %v371 = verf.f32.pop %v353
      %v372 = verf.f32.pop %v354
      %v373 = verf.f32.pop %v355
      %v374 = verf.f32.pop %v356
      %v375 = verf.f32.pop %v357
      %v376 = verf.f32.pop %v358
      %v377 = verf.f32.pop %v359
      %v378 = vadd.f32 %v360, 1.0
      %v379 = vadd.f32 %v361, 1.0
      %v380 = vadd.f32 %v362, 1.0
      %v381 = vadd.f32 %v363, 1.0
      %v382 = vadd.f32 %v364, 1.0
      %v383 = vadd.f32 %v365, 1.0
      %v384 = vadd.f32 %v366, 1.0
      %v385 = vadd.f32 %v367, 1.0
      %v386 = vadd.f32 %v368, 1.0
      %v387 = vadd.f32 %v369, 1.0
      %v388 = vadd.f32 %v370, 1.0
      %v389 = vadd.f32 %v371, 1.0
      %v390 = vadd.f32 %v372, 1.0
      %v391 = vadd.f32 %v373, 1.0
      %v392 = vadd.f32 %v374, 1.0
      %v393 = vadd.f32 %v375, 1.0
      %v394 = vadd.f32 %v376, 1.0
      %v395 = vadd.f32 %v377, 1.0
      %v396 = vmul.f32 %v324, %v378
      %v397 = vmul.f32 %v325, %v379
      %v398 = vmul.f32 %v326, %v380
      %v399 = vmul.f32 %v327, %v381
      %v400 = vmul.f32 %v328, %v382
      %v401 = vmul.f32 %v329, %v383
      %v402 = vmul.f32 %v330, %v384
      %v403 = vmul.f32 %v331, %v385
      %v404 = vmul.f32 %v332, %v386
      %v405 = vmul.f32 %v333, %v387
      %v406 = vmul.f32 %v334, %v388
      %v407 = vmul.f32 %v335, %v389
      %v408 = vmul.f32 %v336, %v390
      %v409 = vmul.f32 %v337, %v391
      %v410 = vmul.f32 %v338, %v392
      %v411 = vmul.f32 %v339, %v393
      %v412 = vmul.f32 %v340, %v394
      %v413 = vmul.f32 %v341, %v395
      %v414 = vpack.c.bf16 %v397, %v396
      %v415 = vpack.c.bf16 %v399, %v398
      %v416 = vpack.c.bf16 %v401, %v400
      %v417 = vpack.c.bf16 %v403, %v402
      %v418 = vpack.c.bf16 %v405, %v404
      %v419 = vpack.c.bf16 %v407, %v406
      %v420 = vpack.c.bf16 %v409, %v408
      %v421 = vpack.c.bf16 %v411, %v410
      %v422 = vpack.c.bf16 %v413, %v412
      %v432 = vunpack.c.l.b16 %v414
      %v433 = vunpack.c.h.b16 %v414
      %v434 = vunpack.c.l.b16 %v415
      %v435 = vunpack.c.h.b16 %v415
      %v436 = vunpack.c.l.b16 %v416
      %v437 = vunpack.c.h.b16 %v416
      %v438 = vunpack.c.l.b16 %v417
      %v439 = vunpack.c.h.b16 %v417
      %v440 = vunpack.c.l.b16 %v418
      %v441 = vunpack.c.h.b16 %v418
      %v442 = vunpack.c.l.b16 %v419
      %v443 = vunpack.c.h.b16 %v419
      %v444 = vunpack.c.l.b16 %v420
      %v445 = vunpack.c.h.b16 %v420
      %v446 = vunpack.c.l.b16 %v421
      %v447 = vunpack.c.h.b16 %v421
      %v448 = vunpack.c.l.b16 %v422
      %v449 = vunpack.c.h.b16 %v422
      %v450 = vpack.c.b16 %v432, %v432
      %v451 = vpack.c.b16 %v433, %v433
      %v452 = vpack.c.b16 %v434, %v434
      %v453 = vpack.c.b16 %v435, %v435
      %v454 = vpack.c.b16 %v436, %v436
      %v455 = vpack.c.b16 %v437, %v437
      %v456 = vpack.c.b16 %v438, %v438
      %v457 = vpack.c.b16 %v439, %v439
      %v458 = vpack.c.b16 %v440, %v440
      %v459 = vpack.c.b16 %v441, %v441
      %v460 = vpack.c.b16 %v442, %v442
      %v461 = vpack.c.b16 %v443, %v443
      %v462 = vpack.c.b16 %v444, %v444
      %v463 = vpack.c.b16 %v445, %v445
      %v464 = vpack.c.b16 %v446, %v446
      %v465 = vpack.c.b16 %v447, %v447
      %v466 = vpack.c.b16 %v448, %v448
      %v467 = vpack.c.b16 %v449, %v449
      %486 = vst [vmem:[%s236] sm:$0xf] %v450
      %487 = vst [vmem:[%s236 + $0x4] sm:$0xf] %v451
      %488 = vst [vmem:[%s236 + $0x8] sm:$0xf] %v452
      %489 = vst [vmem:[%s236 + $0xc] sm:$0xf] %v453
      %490 = vst [vmem:[%s236 + $0x10] sm:$0xf] %v454
      %491 = vst [vmem:[%s236 + $0x14] sm:$0xf] %v455
      %492 = vst [vmem:[%s236 + $0x18] sm:$0xf] %v456
      %493 = vst [vmem:[%s236 + $0x1c] sm:$0xf] %v457
      %494 = vst [vmem:[%s236 + $0x20] sm:$0xf] %v458
      %495 = vst [vmem:[%s236 + $0x24] sm:$0xf] %v459
      %496 = vst [vmem:[%s236 + $0x28] sm:$0xf] %v460
      %497 = vst [vmem:[%s236 + $0x2c] sm:$0xf] %v461
      %498 = vst [vmem:[%s236 + $0x30] sm:$0xf] %v462
      %499 = vst [vmem:[%s236 + $0x34] sm:$0xf] %v463
      %500 = vst [vmem:[%s236 + $0x38] sm:$0xf] %v464
      %501 = vst [vmem:[%s236 + $0x3c] sm:$0xf] %v465
      %502 = vst [vmem:[%s236 + $0x40] sm:$0xf] %v466
      %503 = vst [vmem:[%s236 + $0x44] sm:$0xf] %v467
      %s504 = smul.u32 18, %s19
      %p505 = scmp.lt.s32.totalorder %s18, 1
      %s506 = scalar_select %p505, %s18, 1
      %p507 = scmp.lt.s32.totalorder %s504, 17
      %s508 = scalar_select %p507, %s504, 17
      %s509 = smul.addr %s506, 18
      %s510 = sadd.s32 %s508, %s509
      %s511 = smul.addr %s510, 4
      %s512 = scalar_lea.vmem %s3, %s511
      // Predicated region
      $region33: #{feature_extractor.5} parent=31 // pred_check
        %p513 = pneg %p126
      $region34: #{feature_extractor.5} parent=31 // pred_check_branch
        %515 = sbr.rel (%p513) target = $region36
      $region35: #{feature_extractor.5} parent=31 // pred_region
        %s516 = smul.u32 18, %s19
      $region36: #{feature_extractor.5} parent=31 // pred_fallthru
        _
    $region32: #{feature_extractor.5} parent=5 // pred_fallthru
      _
    %p517 = scmp.le.s32.totalorder 2, %s9
    // Predicated region
    $region37: #{feature_extractor.5} parent=5 // pred_check
      %p518 = pneg %p517
    $region38: #{feature_extractor.5} parent=5 // pred_check_branch
      %520 = sbr.rel (%p518) target = $region40
    $region39: #{feature_extractor.5} parent=5 // pred_region
      %s521 = ssub.s32 %s9, 2
      // Predicated region
      $region41: #{feature_extractor.5} parent=39 // pred_check
        %p522 = pneg %p132
      $region42: #{feature_extractor.5} parent=39 // pred_check_branch
        %524 = sbr.rel (%p522) target = $region44
      $region43: #{feature_extractor.5} parent=39 // pred_region
        %s525 = smul.u32 18, %s21
        %p526 = scmp.lt.s32.totalorder %s20, 1
        %s527 = scalar_select %p526, %s20, 1
        %p528 = scmp.lt.s32.totalorder %s525, 17
        %s529 = scalar_select %p528, %s525, 17
        %s530 = smul.addr %s527, 18
        %s531 = sadd.s32 %s529, %s530
        %s532 = smul.addr %s531, 4
        %s533 = scalar_lea.vmem %s3, %s532
      $region44: #{feature_extractor.5} parent=39 // pred_fallthru
        _
    $region40: #{feature_extractor.5} parent=5 // pred_fallthru
      _
  $region6: #{feature_extractor.5} parent=0 // loop_footer
    %s13 = sadd.s32 1, %s9
  $region7: #{feature_extractor.5} parent=0 // loop_footer_branch
    %8 = sbr.rel target = $region3
  $region8: #{feature_extractor.5} parent=0 // loop_exit
    _

// kernel: feature_extractor.4
$region0: #{feature_extractor.4}
  #allocation0 [shape = 'u32[]', space=smem, size = 0x4, offset = 0x4, fixed_abs, tag = 'smem constant byte address 0x4 - core index']
  #allocation1 [shape = 'u32[144,128]{1,0:T(1,128)}', space=vmem, size = 0x12000, scoped, tag = 'internal scratch']
  #allocation2 [shape = 'f32[144,128]{1,0:T(8,128)}', space=vmem, size = 0x12000, scoped, tag = 'scratch operand']
  %s0 = inlined_call_operand.vmem [shape: bf16[2,152,5], index: 0, kind: input, shape index: {}, may-alias: {0,1}]
  %s1 = inlined_call_operand.vmem [shape: bf16[2,152,5], index: 1, kind: input, shape index: {}, may-alias: {0,1}]
  %s2 = inlined_call_operand.vmem [shape: bf16[2,5,128], index: 2, kind: input, shape index: {}]
  %s3 = inlined_call_operand.vmem [shape: bf16[2,144,128], index: 3, kind: output, shape index: {0}]
  %s4 = inlined_call_operand.vmem [shape: f32[2,2,128], index: 4, kind: output, shape index: {1}]
  %5 = xla_tuple %s3, %s4
  %s6 = sld [smem:[#allocation0]]
  $region57: #{feature_extractor.4} parent=0
    _
  %s8 = ssub.s32 1, %s6
  %s9 = scalar_select 0, %s8, %s6
  loop: start=0, step=1, limit=4
  $region2: #{feature_extractor.4} parent=0 // loop_pre_header
    _
  $region3: #{feature_extractor.4} parent=0 // loop_header
    %s11 = sphi 0, %s15
    %p12 = scmp.ge.s32.totalorder %s11, 4
    %s18 = sphi 0, %s30
    %s19 = sphi 0, %s26
    %s20 = sphi 0, %s18
    %s21 = sphi 0, %s19
    %s22 = sphi 0, %s20
    %s23 = sphi 0, %s21
    %s35 = sphi 0, %s37
    %s38 = sphi 0, %s35
    %s39 = sphi 0, %s38
    %s55 = sphi 0, %s39
    %s67 = sphi 0, %s69
    %s70 = sphi 0, %s67
    %s71 = sphi 0, %s70
    %s87 = sphi 0, %s71
    %s91 = sphi 0, %s91
    %s93 = sphi 0, %s91
    %s94 = sphi 0, %s93
    %s108 = sphi 0, %s94
    %s116 = sphi 0, %s118
    %s119 = sphi 0, %s116
    %s120 = sphi 0, %s119
    %s136 = sphi 0, %s120
    %s142 = sphi 0, %s144
    %s145 = sphi 0, %s142
    %s146 = sphi 0, %s145
    %s162 = sphi 0, %s146
  $region4: #{feature_extractor.4} parent=0 // loop_header_branch
    %14 = sbr.rel (%p12) target = $region8
  $region5: #{feature_extractor.4} parent=0 // loop_body
    %s16 = ssub.s32 %s11, 1
    %s17 = ssub.s32 %s11, 2
    %s24 = sadd.s32 1, %s19
    %p25 = scmp.ge.s32.totalorder %s24, 1
    %s26 = scalar_select %p25, 0, %s24
    %s27 = sadd.s32 1, %s18
    %s28 = scalar_select %p25, %s27, %s18
    %p29 = scmp.ge.s32.totalorder %s28, 2
    %s30 = scalar_select %p29, 0, %s28
    %s31 = ssub.s32 %s18, %s30
    %s32 = ssub.s32 %s19, %s26
    %s33 = sor.u32 %s31, %s32
    %p34 = scmp.eq.s32.totalorder %s33, 0
    %s36 = sadd.s32 %s35, 1
    %s37 = scalar_select %p34, %s35, %s36
    %p40 = pneg %p34
    %p41 = scmp.eq.s32.totalorder %s11, 1
    %p42 = por %p40, %p41
    %p43 = scmp.ne.s32.totalorder %s35, %s38
    %p44 = scmp.eq.s32.totalorder %s11, 0
    %p45 = por %p43, %p44
    %p46 = scmp.ne.s32.totalorder %s35, %s38
    %p47 = scmp.eq.s32.totalorder %s16, 1
    %p48 = por %p46, %p47
    %p49 = scmp.ne.s32.totalorder %s38, %s39
    %p50 = scmp.eq.s32.totalorder %s16, 0
    %p51 = por %p49, %p50
    %p52 = scmp.ne.s32.totalorder %s38, %s39
    %p53 = scmp.eq.s32.totalorder %s17, 1
    %p54 = por %p52, %p53
    %p56 = scmp.ne.s32.totalorder %s39, %s55
    %p57 = scmp.eq.s32.totalorder %s17, 0
    %p58 = por %p56, %p57
    %s59 = sadd.s32 %s19, 1
    %s60 = smul.u32 %s59, 18
    %s61 = sadd.s32 %s26, 1
    %s62 = smul.u32 %s61, 18
    %s63 = ssub.s32 %s18, %s30
    %s64 = ssub.s32 %s60, %s62
    %s65 = sor.u32 %s63, %s64
    %p66 = scmp.eq.s32.totalorder %s65, 0
    %s68 = sadd.s32 %s67, 1
    %s69 = scalar_select %p66, %s67, %s68
    %p72 = pneg %p66
    %p73 = scmp.eq.s32.totalorder %s11, 1
    %p74 = por %p72, %p73
    %p75 = scmp.ne.s32.totalorder %s67, %s70
    %p76 = scmp.eq.s32.totalorder %s11, 0
    %p77 = por %p75, %p76
    %p78 = scmp.ne.s32.totalorder %s67, %s70
    %p79 = scmp.eq.s32.totalorder %s16, 1
    %p80 = por %p78, %p79
    %p81 = scmp.ne.s32.totalorder %s70, %s71
    %p82 = scmp.eq.s32.totalorder %s16, 0
    %p83 = por %p81, %p82
    %p84 = scmp.ne.s32.totalorder %s70, %s71
    %p85 = scmp.eq.s32.totalorder %s17, 1
    %p86 = por %p84, %p85
    %p88 = scmp.ne.s32.totalorder %s71, %s87
    %p89 = scmp.eq.s32.totalorder %s17, 0
    %p90 = por %p88, %p89
    %s92 = sadd.s32 %s91, 1
    %p95 = scmp.eq.s32.totalorder %s11, 1
    %p96 = scmp.ne.s32.totalorder %s91, %s93
    %p97 = scmp.eq.s32.totalorder %s11, 0
    %p98 = por %p96, %p97
    %p99 = scmp.ne.s32.totalorder %s91, %s93
    %p100 = scmp.eq.s32.totalorder %s16, 1
    %p101 = por %p99, %p100
    %p102 = scmp.ne.s32.totalorder %s93, %s94
    %p103 = scmp.eq.s32.totalorder %s16, 0
    %p104 = por %p102, %p103
    %p105 = scmp.ne.s32.totalorder %s93, %s94
    %p106 = scmp.eq.s32.totalorder %s17, 1
    %p107 = por %p105, %p106
    %p109 = scmp.ne.s32.totalorder %s94, %s108
    %p110 = scmp.eq.s32.totalorder %s17, 0
    %p111 = por %p109, %p110
    %s112 = ssub.s32 %s18, %s30
    %s113 = ssub.s32 %s19, %s26
    %s114 = sor.u32 %s112, %s113
    %p115 = scmp.eq.s32.totalorder %s114, 0
    %s117 = sadd.s32 %s116, 1
    %s118 = scalar_select %p115, %s116, %s117
    %p121 = pneg %p115
    %p122 = scmp.eq.s32.totalorder %s11, 1
    %p123 = por %p121, %p122
    %p124 = scmp.ne.s32.totalorder %s116, %s119
    %p125 = scmp.eq.s32.totalorder %s11, 0
    %p126 = por %p124, %p125
    %p127 = scmp.ne.s32.totalorder %s116, %s119
    %p128 = scmp.eq.s32.totalorder %s16, 1
    %p129 = por %p127, %p128
    %p130 = scmp.ne.s32.totalorder %s119, %s120
    %p131 = scmp.eq.s32.totalorder %s16, 0
    %p132 = por %p130, %p131
    %p133 = scmp.ne.s32.totalorder %s119, %s120
    %p134 = scmp.eq.s32.totalorder %s17, 1
    %p135 = por %p133, %p134
    %p137 = scmp.ne.s32.totalorder %s120, %s136
    %p138 = scmp.eq.s32.totalorder %s17, 0
    %p139 = por %p137, %p138
    %s140 = ssub.s32 %s18, %s30
    %p141 = scmp.eq.s32.totalorder %s140, 0
    %s143 = sadd.s32 %s142, 1
    %s144 = scalar_select %p141, %s142, %s143
    %p147 = pneg %p141
    %p148 = scmp.eq.s32.totalorder %s11, 1
    %p149 = por %p147, %p148
    %p150 = scmp.ne.s32.totalorder %s142, %s145
    %p151 = scmp.eq.s32.totalorder %s11, 0
    %p152 = por %p150, %p151
    %p153 = scmp.ne.s32.totalorder %s142, %s145
    %p154 = scmp.eq.s32.totalorder %s16, 1
    %p155 = por %p153, %p154
    %p156 = scmp.ne.s32.totalorder %s145, %s146
    %p157 = scmp.eq.s32.totalorder %s16, 0
    %p158 = por %p156, %p157
    %p159 = scmp.ne.s32.totalorder %s145, %s146
    %p160 = scmp.eq.s32.totalorder %s17, 1
    %p161 = por %p159, %p160
    %p163 = scmp.ne.s32.totalorder %s146, %s162
    %p164 = scmp.eq.s32.totalorder %s17, 0
    %p165 = por %p163, %p164
    %p166 = scmp.le.s32.totalorder 1, %s11
    %p167 = scmp.lt.s32.totalorder %s11, 3
    %p168 = pnand %p166, %p167
    %p169 = pneg %p168
    // Predicated region
    $region9: #{feature_extractor.4} parent=5 // pred_check
      _
    $region10: #{feature_extractor.4} parent=5 // pred_check_branch
      %171 = sbr.rel (%p168) target = $region12
    $region11: #{feature_extractor.4} parent=5 // pred_region
      %s172 = ssub.s32 %s11, 1
      // Predicated region
      $region13: #{feature_extractor.4} parent=11 // pred_check
        %p173 = pneg %p104
      $region14: #{feature_extractor.4} parent=11 // pred_check_branch
        %175 = sbr.rel (%p173) target = $region16
      $region15: #{feature_extractor.4} parent=11 // pred_region
        _
      $region16: #{feature_extractor.4} parent=11 // pred_fallthru
        _
    $region12: #{feature_extractor.4} parent=5 // pred_fallthru
      _
    %p176 = scmp.lt.s32.totalorder %s11, 2
    // Predicated region
    $region17: #{feature_extractor.4} parent=5 // pred_check
      %p177 = pneg %p176
    $region18: #{feature_extractor.4} parent=5 // pred_check_branch
      %179 = sbr.rel (%p177) target = $region20
    $region19: #{feature_extractor.4} parent=5 // pred_region
      // Predicated region
      $region21: #{feature_extractor.4} parent=19 // pred_check
        %p180 = pneg %p45
      $region22: #{feature_extractor.4} parent=19 // pred_check_branch
        %182 = sbr.rel (%p180) target = $region24
      $region23: #{feature_extractor.4} parent=19 // pred_region
        %s183 = smul.u32 18, %s19
        %s184 = ssub.s32 19, %s183
        %p185 = scmp.lt.s32.totalorder %s184, 18
        %s186 = scalar_select %p185, %s184, 18
        %s187 = smul.u32 64, %s186
        %p188 = scmp.lt.s32.totalorder %s18, 1
        %s189 = scalar_select %p188, %s18, 1
        %p190 = scmp.lt.s32.totalorder %s183, 18
        %s191 = scalar_select %p190, %s183, 18
        %s192 = smul.addr %s189, 19
        %s193 = sadd.s32 %s191, %s192
        %s194 = smul.addr %s193, 4
        %s195 = scalar_lea.vmem %s0, %s194
        %s196 = smul.u32 18, %s19
        %s197 = ssub.s32 19, %s196
        %p198 = scmp.lt.s32.totalorder %s197, 18
        %s199 = scalar_select %p198, %s197, 18
        %s200 = smul.u32 64, %s199
      $region24: #{feature_extractor.4} parent=19 // pred_fallthru
        _
      // Predicated region
      $region25: #{feature_extractor.4} parent=19 // pred_check
        %p201 = pneg %p77
      $region26: #{feature_extractor.4} parent=19 // pred_check_branch
        %203 = sbr.rel (%p201) target = $region28
      $region27: #{feature_extractor.4} parent=19 // pred_region
        %s204 = sadd.s32 %s19, 1
        %s205 = smul.u32 %s204, 18
        %p206 = scmp.lt.s32.totalorder %s18, 1
        %s207 = scalar_select %p206, %s18, 1
        %p208 = scmp.lt.s32.totalorder %s205, 18
        %s209 = scalar_select %p208, %s205, 18
        %s210 = smul.addr %s207, 19
        %s211 = sadd.s32 %s209, %s210
        %s212 = smul.addr %s211, 4
        %s213 = scalar_lea.vmem %s1, %s212
        %s214 = sadd.s32 %s19, 1
        %s215 = smul.u32 %s214, 18
      $region28: #{feature_extractor.4} parent=19 // pred_fallthru
        _
    $region20: #{feature_extractor.4} parent=5 // pred_fallthru
      _
    %p216 = scmp.le.s32.totalorder 1, %s11
    %p217 = scmp.lt.s32.totalorder %s11, 3
    %p218 = pnand %p216, %p217
    %p219 = pneg %p218
    // Predicated region
    $region29: #{feature_extractor.4} parent=5 // pred_check
      _
    $region30: #{feature_extractor.4} parent=5 // pred_check_branch
      %221 = sbr.rel (%p218) target = $region32
    $region31: #{feature_extractor.4} parent=5 // pred_region
      %s222 = ssub.s32 %s11, 1
      %s223 = smul.u32 18, %s21
      %s224 = ssub.s32 19, %s223
      %p225 = scmp.lt.s32.totalorder %s224, 18
      %s226 = scalar_select %p225, %s224, 18
      %s227 = smul.u32 64, %s226
      %p228 = scmp.lt.s32.totalorder %s20, 1
      %s229 = scalar_select %p228, %s20, 1
      %p230 = scmp.lt.s32.totalorder %s223, 18
      %s231 = scalar_select %p230, %s223, 18
      %s232 = smul.addr %s229, 19
      %s233 = sadd.s32 %s231, %s232
      %s234 = smul.addr %s233, 4
      %s235 = scalar_lea.vmem %s0, %s234
      %p236 = pneg %p51
      %p237 = pneg %p48
      %s238 = sadd.s32 %s21, 1
      %s239 = smul.u32 %s238, 18
      %p240 = scmp.lt.s32.totalorder %s20, 1
      %s241 = scalar_select %p240, %s20, 1
      %p242 = scmp.lt.s32.totalorder %s239, 18
      %s243 = scalar_select %p242, %s239, 18
      %s244 = smul.addr %s241, 19
      %s245 = sadd.s32 %s243, %s244
      %s246 = smul.addr %s245, 4
      %s247 = scalar_lea.vmem %s1, %s246
      %p248 = pneg %p83
      %p249 = pneg %p80
      %p250 = pneg %p104
      %p251 = pneg %p101
      %p252 = pneg %p132
      %p253 = pneg %p129
      %s254 = smul.u32 18, %s21
      %p255 = scmp.lt.s32.totalorder %s20, 1
      %s256 = scalar_select %p255, %s20, 1
      %p257 = scmp.lt.s32.totalorder %s254, 17
      %s258 = scalar_select %p257, %s254, 17
      %s259 = smul.addr %s256, 18
      %s260 = sadd.s32 %s258, %s259
      %s261 = smul.addr %s260, 4
      %s262 = scalar_lea.vmem %s3, %s261
      %p263 = pneg %p158
      %p264 = pneg %p155
      %p265 = scmp.lt.s32.totalorder %s20, 1
      %s266 = scalar_select %p265, %s20, 1
      %s267 = smul.addr %s266, 2
      %s268 = scalar_lea.vmem %s4, %s267
      %s269 = smul.u32 18, %s21
      %s270 = ssub.s32 19, %s269
      %p271 = scmp.lt.s32.totalorder %s270, 18
      %s272 = scalar_select %p271, %s270, 18
      %s273 = smul.u32 64, %s272
      %p274 = scmp.lt.s32.totalorder %s20, 1
      %s275 = scalar_select %p274, %s20, 1
      %p276 = scmp.lt.s32.totalorder %s269, 18
      %s277 = scalar_select %p276, %s269, 18
      %s278 = smul.addr %s275, 19
      %s279 = sadd.s32 %s277, %s278
      %s280 = smul.addr %s279, 4
      %s281 = scalar_lea.vmem %s0, %s280
      %s282 = smul.u32 18, %s21
      %s283 = ssub.s32 19, %s282
      %p284 = scmp.lt.s32.totalorder %s283, 18
      %s285 = scalar_select %p284, %s283, 18
      %s286 = smul.u32 64, %s285
      %s287 = sadd.s32 %s21, 1
      %s288 = smul.u32 %s287, 18
      %p289 = scmp.lt.s32.totalorder %s20, 1
      %s290 = scalar_select %p289, %s20, 1
      %p291 = scmp.lt.s32.totalorder %s288, 18
      %s292 = scalar_select %p291, %s288, 18
      %s293 = smul.addr %s290, 19
      %s294 = sadd.s32 %s292, %s293
      %s295 = smul.addr %s294, 4
      %s296 = scalar_lea.vmem %s1, %s295
      %s297 = sadd.s32 %s21, 1
      %s298 = smul.u32 %s297, 18
      %s299 = smul.u32 18, %s21
      %p300 = scmp.lt.s32.totalorder %s20, 1
      %s301 = scalar_select %p300, %s20, 1
      %p302 = scmp.lt.s32.totalorder %s299, 17
      %s303 = scalar_select %p302, %s299, 17
      %s304 = smul.addr %s301, 18
      %s305 = sadd.s32 %s303, %s304
      %s306 = smul.addr %s305, 4
      %s307 = scalar_lea.vmem %s3, %s306
      %s308 = smul.u32 18, %s21
      %p309 = scmp.lt.s32.totalorder %s20, 1
      %s310 = scalar_select %p309, %s20, 1
      %s311 = smul.addr %s310, 2
      %s312 = scalar_lea.vmem %s4, %s311
      %v314 = vld [vmem:[%s281] sm:$0xf]
      %v315 = vld [vmem:[%s281 + $0x4] sm:$0xf]
      %v316 = vld [vmem:[%s281 + $0x8] sm:$0xf]
      %v317 = vld [vmem:[%s281 + $0xc] sm:$0xf]
      %v318 = vld [vmem:[%s281 + $0x10] sm:$0xf]
      %v319 = vld [vmem:[%s281 + $0x14] sm:$0xf]
      %v320 = vld [vmem:[%s281 + $0x18] sm:$0xf]
      %v321 = vld [vmem:[%s281 + $0x1c] sm:$0xf]
      %v322 = vld [vmem:[%s281 + $0x20] sm:$0xf]
      %v323 = vld [vmem:[%s281 + $0x24] sm:$0xf]
      %v324 = vld [vmem:[%s281 + $0x28] sm:$0xf]
      %v325 = vld [vmem:[%s281 + $0x2c] sm:$0xf]
      %v326 = vld [vmem:[%s281 + $0x30] sm:$0xf]
      %v327 = vld [vmem:[%s281 + $0x34] sm:$0xf]
      %v328 = vld [vmem:[%s281 + $0x38] sm:$0xf]
      %v329 = vld [vmem:[%s281 + $0x3c] sm:$0xf]
      %v330 = vld [vmem:[%s281 + $0x40] sm:$0xf]
      %v331 = vld [vmem:[%s281 + $0x44] sm:$0xf]
      %v332 = vld [vmem:[%s2] sm:$0x7]
      %v351 = vunpack.c.l.b16 %v314
      %v352 = vunpack.c.l.b16 %v315
      %v353 = vunpack.c.l.b16 %v316
      %v354 = vunpack.c.l.b16 %v317
      %v355 = vunpack.c.l.b16 %v318
      %v356 = vunpack.c.l.b16 %v319
      %v357 = vunpack.c.l.b16 %v320
      %v358 = vunpack.c.l.b16 %v321
      %v359 = vunpack.c.l.b16 %v322
      %v360 = vunpack.c.l.b16 %v323
      %v361 = vunpack.c.l.b16 %v324
      %v362 = vunpack.c.l.b16 %v325
      %v363 = vunpack.c.l.b16 %v326
      %v364 = vunpack.c.l.b16 %v327
      %v365 = vunpack.c.l.b16 %v328
      %v366 = vunpack.c.l.b16 %v329
      %v367 = vunpack.c.l.b16 %v330
      %v368 = vunpack.c.l.b16 %v331
      %v369 = vpack.c.b16 %v352, %v351
      %v370 = vpack.c.b16 %v354, %v353
      %v371 = vpack.c.b16 %v356, %v355
      %v372 = vpack.c.b16 %v358, %v357
      %v373 = vpack.c.b16 %v360, %v359
      %v374 = vpack.c.b16 %v362, %v361
      %v375 = vpack.c.b16 %v364, %v363
      %v376 = vpack.c.b16 %v366, %v365
      %v377 = vpack.c.b16 %v368, %v367
      %vm378 = vcmask 39936
      %v380 = vsel %vm378, %v369, 0
      %v383 = vsel %vm378, %v370, 0
      %v386 = vsel %vm378, %v371, 0
      %v389 = vsel %vm378, %v372, 0
      %v392 = vsel %vm378, %v373, 0
      %v395 = vsel %vm378, %v374, 0
      %v398 = vsel %vm378, %v375, 0
      %v401 = vsel %vm378, %v376, 0
      %v404 = vsel %vm378, %v377, 0
      %vm406 = vcmask 1041408
      %vm407 = vcmask 1042432
      %v408 = vsel %vm406, 4294967295, 65535
      %v409 = vsel %vm407, %v408, 0
      %v411 = vand.u32 %v332, %v409
      %413 = vmatprep.subr.bf16.mxu0 0
      %414 = vmatpush1.bf16.msra.mxu0 0
      %415 = vmatprep.subr.bf16.mxu0 0
      %416 = vmatpush1.bf16.msra.mxu0 0
      %417 = vmatprep.subr.bf16.mxu0 0
      %418 = vmatpush1.bf16.msra.mxu0 0
      %419 = vmatprep.subr.bf16.mxu0 0
      %420 = vmatpush1.bf16.msra.mxu0 0
      %421 = vmatprep.subr.bf16.mxu0 0
      %422 = vmatpush1.bf16.msra.mxu0 0
      %423 = vmatprep.subr.bf16.mxu0 0
      %424 = vmatpush1.bf16.msra.mxu0 0
      %425 = vmatprep.subr.bf16.mxu0 0
      %426 = vmatpush1.bf16.msra.mxu0 0
      %427 = vmatprep.subr.bf16.mxu0 0
      %428 = vmatpush1.bf16.msra.mxu0 %v411
      %429 = vmatprep.subr.bf16.mxu0 0
      %430 = vmatpush2.bf16.msra.mxu0 0
      %431 = vmatprep.subr.bf16.mxu0 0
      %432 = vmatpush2.bf16.msra.mxu0 0
      %433 = vmatprep.subr.bf16.mxu0 0
      %434 = vmatpush2.bf16.msra.mxu0 0
      %435 = vmatprep.subr.bf16.mxu0 0
      %436 = vmatpush2.bf16.msra.mxu0 0
      %437 = vmatprep.subr.bf16.mxu0 0
      %438 = vmatpush2.bf16.msra.mxu0 0
      %439 = vmatprep.subr.bf16.mxu0 0
      %440 = vmatpush2.bf16.msra.mxu0 0
      %441 = vmatprep.subr.bf16.mxu0 0
      %442 = vmatpush2.bf16.msra.mxu0 0
      %443 = vmatprep.subr.bf16.mxu0 0
      %444 = vmatpush2.bf16.msra.mxu0 0
      %445 = vmatprep.mubr.bf16.mxu0 0
      %446 = vmatmul.mubr.bf16.gmra.mxu0 %v380
      %v447 = vpop.f32.mrf.mxu0
      %v448 = vadd.f32 0.0, %v447
      %v449 = vpop.f32.mrf.mxu0
      %v450 = vpop.f32.mrf.mxu0
      %v451 = vadd.f32 0.0, %v450
      %v452 = vpop.f32.mrf.mxu0
      %453 = vmatprep.mubr.bf16.mxu0 0
      %454 = vmatmul.mubr.bf16.gmra.mxu0 %v383
      %v455 = vpop.f32.mrf.mxu0
      %v456 = vadd.f32 0.0, %v455
      %v457 = vpop.f32.mrf.mxu0
      %v458 = vpop.f32.mrf.mxu0
      %v459 = vadd.f32 0.0, %v458
      %v460 = vpop.f32.mrf.mxu0
      %461 = vmatprep.mubr.bf16.mxu0 0
      %462 = vmatmul.mubr.bf16.gmra.mxu0 %v386
      %v463 = vpop.f32.mrf.mxu0
      %v464 = vadd.f32 0.0, %v463
      %v465 = vpop.f32.mrf.mxu0
      %v466 = vpop.f32.mrf.mxu0
      %v467 = vadd.f32 0.0, %v466
      %v468 = vpop.f32.mrf.mxu0
      %469 = vmatprep.mubr.bf16.mxu0 0
      %470 = vmatmul.mubr.bf16.gmra.mxu0 %v389
      %v471 = vpop.f32.mrf.mxu0
      %v472 = vadd.f32 0.0, %v471
      %v473 = vpop.f32.mrf.mxu0
      %v474 = vpop.f32.mrf.mxu0
      %v475 = vadd.f32 0.0, %v474
      %v476 = vpop.f32.mrf.mxu0
      %477 = vmatprep.mubr.bf16.mxu0 0
      %478 = vmatmul.mubr.bf16.gmra.mxu0 %v392
      %v479 = vpop.f32.mrf.mxu0
      %v480 = vadd.f32 0.0, %v479
      %v481 = vpop.f32.mrf.mxu0
      %v482 = vpop.f32.mrf.mxu0
      %v483 = vadd.f32 0.0, %v482
      %v484 = vpop.f32.mrf.mxu0
      %485 = vmatprep.mubr.bf16.mxu0 0
      %486 = vmatmul.mubr.bf16.gmra.mxu0 %v395
      %v487 = vpop.f32.mrf.mxu0
      %v488 = vadd.f32 0.0, %v487
      %v489 = vpop.f32.mrf.mxu0
      %v490 = vpop.f32.mrf.mxu0
      %v491 = vadd.f32 0.0, %v490
      %v492 = vpop.f32.mrf.mxu0
      %493 = vmatprep.mubr.bf16.mxu0 0
      %494 = vmatmul.mubr.bf16.gmra.mxu0 %v398
      %v495 = vpop.f32.mrf.mxu0
      %v496 = vadd.f32 0.0, %v495
      %v497 = vpop.f32.mrf.mxu0
      %v498 = vpop.f32.mrf.mxu0
      %v499 = vadd.f32 0.0, %v498
      %v500 = vpop.f32.mrf.mxu0
      %501 = vmatprep.mubr.bf16.mxu0 0
      %502 = vmatmul.mubr.bf16.gmra.mxu0 %v401
      %v503 = vpop.f32.mrf.mxu0
      %v504 = vadd.f32 0.0, %v503
      %v505 = vpop.f32.mrf.mxu0
      %v506 = vpop.f32.mrf.mxu0
      %v507 = vadd.f32 0.0, %v506
      %v508 = vpop.f32.mrf.mxu0
      %509 = vmatprep.mubr.bf16.mxu0 0
      %510 = vmatmul.mubr.bf16.gmra.mxu0 %v404
      %v511 = vpop.f32.mrf.mxu0
      %v512 = vadd.f32 0.0, %v511
      %v513 = vpop.f32.mrf.mxu0
      %v514 = vpop.f32.mrf.mxu0
      %v515 = vadd.f32 0.0, %v514
      %v516 = vpop.f32.mrf.mxu0
      %517 = vdwg.mxu0
      %518 = vst [vmem:[#allocation2] sm:$0xff] %v448
      %519 = vst [vmem:[#allocation2 + $0x8] sm:$0xff] %v451
      %520 = vst [vmem:[#allocation2 + $0x10] sm:$0xff] %v456
      %521 = vst [vmem:[#allocation2 + $0x18] sm:$0xff] %v459
      %522 = vst [vmem:[#allocation2 + $0x20] sm:$0xff] %v464
      %523 = vst [vmem:[#allocation2 + $0x28] sm:$0xff] %v467
      %524 = vst [vmem:[#allocation2 + $0x30] sm:$0xff] %v472
      %525 = vst [vmem:[#allocation2 + $0x38] sm:$0xff] %v475
      %526 = vst [vmem:[#allocation2 + $0x40] sm:$0xff] %v480
      %527 = vst [vmem:[#allocation2 + $0x48] sm:$0xff] %v483
      %528 = vst [vmem:[#allocation2 + $0x50] sm:$0xff] %v488
      %529 = vst [vmem:[#allocation2 + $0x58] sm:$0xff] %v491
      %530 = vst [vmem:[#allocation2 + $0x60] sm:$0xff] %v496
      %531 = vst [vmem:[#allocation2 + $0x68] sm:$0xff] %v499
      %532 = vst [vmem:[#allocation2 + $0x70] sm:$0xff] %v504
      %533 = vst [vmem:[#allocation2 + $0x78] sm:$0xff] %v507
      %534 = vst [vmem:[#allocation2 + $0x80] sm:$0xff] %v512
      %535 = vst [vmem:[#allocation2 + $0x88] sm:$0xff] %v515
      %v536 = vld [vmem:[#allocation2] sm:$0xff]
      %v537 = vld [vmem:[#allocation2 + $0x8] sm:$0xff]
      %v538 = vld [vmem:[#allocation2 + $0x10] sm:$0xff]
      %v539 = vld [vmem:[#allocation2 + $0x18] sm:$0xff]
      %v540 = vld [vmem:[#allocation2 + $0x20] sm:$0xff]
      %v541 = vld [vmem:[#allocation2 + $0x28] sm:$0xff]
      %v542 = vld [vmem:[#allocation2 + $0x30] sm:$0xff]
      %v543 = vld [vmem:[#allocation2 + $0x38] sm:$0xff]
      %v544 = vld [vmem:[#allocation2 + $0x40] sm:$0xff]
      %v545 = vld [vmem:[#allocation2 + $0x48] sm:$0xff]
      %v546 = vld [vmem:[#allocation2 + $0x50] sm:$0xff]
      %v547 = vld [vmem:[#allocation2 + $0x58] sm:$0xff]
      %v548 = vld [vmem:[#allocation2 + $0x60] sm:$0xff]
      %v549 = vld [vmem:[#allocation2 + $0x68] sm:$0xff]
      %v550 = vld [vmem:[#allocation2 + $0x70] sm:$0xff]
      %v551 = vld [vmem:[#allocation2 + $0x78] sm:$0xff]
      %v552 = vld [vmem:[#allocation2 + $0x80] sm:$0xff]
      %v553 = vld [vmem:[#allocation2 + $0x88] sm:$0x7f]
      %v554 = vld [vmem:[%s281] sm:$0xf]
      %v555 = vld [vmem:[%s281 + $0x4] sm:$0xf]
      %v556 = vld [vmem:[%s281 + $0x8] sm:$0xf]
      %v557 = vld [vmem:[%s281 + $0xc] sm:$0xf]
      %v558 = vld [vmem:[%s281 + $0x10] sm:$0xf]
      %v559 = vld [vmem:[%s281 + $0x14] sm:$0xf]
      %v560 = vld [vmem:[%s281 + $0x18] sm:$0xf]
      %v561 = vld [vmem:[%s281 + $0x1c] sm:$0xf]
      %v562 = vld [vmem:[%s281 + $0x20] sm:$0xf]
      %v563 = vld [vmem:[%s281 + $0x24] sm:$0xf]
      %v564 = vld [vmem:[%s281 + $0x28] sm:$0xf]
      %v565 = vld [vmem:[%s281 + $0x2c] sm:$0xf]
      %v566 = vld [vmem:[%s281 + $0x30] sm:$0xf]
      %v567 = vld [vmem:[%s281 + $0x34] sm:$0xf]
      %v568 = vld [vmem:[%s281 + $0x38] sm:$0xf]
      %v569 = vld [vmem:[%s281 + $0x3c] sm:$0xf]
      %v570 = vld [vmem:[%s281 + $0x40] sm:$0xf]
      %v571 = vld [vmem:[%s281 + $0x44] sm:$0xf]
      %s572 = scalar_lea.vmem %s2, 4
      %v573 = vld [vmem:[%s572] sm:$0x7]
      %v592 = vunpack.c.l.b16 %v554
      %v593 = vunpack.c.l.b16 %v555
      %v594 = vunpack.c.l.b16 %v556
      %v595 = vunpack.c.l.b16 %v557
      %v596 = vunpack.c.l.b16 %v558
      %v597 = vunpack.c.l.b16 %v559
      %v598 = vunpack.c.l.b16 %v560
      %v599 = vunpack.c.l.b16 %v561
      %v600 = vunpack.c.l.b16 %v562
      %v601 = vunpack.c.l.b16 %v563
      %v602 = vunpack.c.l.b16 %v564
      %v603 = vunpack.c.l.b16 %v565
      %v604 = vunpack.c.l.b16 %v566
      %v605 = vunpack.c.l.b16 %v567
      %v606 = vunpack.c.l.b16 %v568
      %v607 = vunpack.c.l.b16 %v569
      %v608 = vunpack.c.l.b16 %v570
      %v609 = vunpack.c.l.b16 %v571
      %v610 = vpack.c.b16 %v593, %v592
      %v611 = vpack.c.b16 %v595, %v594
      %v612 = vpack.c.b16 %v597, %v596
      %v613 = vpack.c.b16 %v599, %v598
      %v614 = vpack.c.b16 %v601, %v600
      %v615 = vpack.c.b16 %v603, %v602
      %v616 = vpack.c.b16 %v605, %v604
      %v617 = vpack.c.b16 %v607, %v606
      %v618 = vpack.c.b16 %v609, %v608
      %vm619 = vsmask.f32 7424
      %v621 = vshrl.u32 %v610, 16
      %v623 = vshll.u32 %v610, 16
      %v625 = vrot.slane %v623, 1
      %v626 = vor.u32 %v621, %v625
      %v628 = vshll.u32 %v611, 16
      %v630 = vrot.slane %v628, 1
      %v631 = vsel %vm619, %v626, %v630
      %v632 = vshrl.u32 %v611, 16
      %v634 = vor.u32 %v632, %v630
      %v636 = vshll.u32 %v612, 16
      %v638 = vrot.slane %v636, 1
      %v639 = vsel %vm619, %v634, %v638
      %v640 = vshrl.u32 %v612, 16
      %v642 = vor.u32 %v640, %v638
      %v644 = vshll.u32 %v613, 16
      %v646 = vrot.slane %v644, 1
      %v647 = vsel %vm619, %v642, %v646
      %v648 = vshrl.u32 %v613, 16
      %v650 = vor.u32 %v648, %v646
      %v652 = vshll.u32 %v614, 16
      %v654 = vrot.slane %v652, 1
      %v655 = vsel %vm619, %v650, %v654
      %v656 = vshrl.u32 %v614, 16
      %v658 = vor.u32 %v656, %v654
      %v660 = vshll.u32 %v615, 16
      %v662 = vrot.slane %v660, 1
      %v663 = vsel %vm619, %v658, %v662
      %v664 = vshrl.u32 %v615, 16
      %v666 = vor.u32 %v664, %v662
      %v668 = vshll.u32 %v616, 16
      %v670 = vrot.slane %v668, 1
      %v671 = vsel %vm619, %v666, %v670
      %v672 = vshrl.u32 %v616, 16
      %v674 = vor.u32 %v672, %v670
      %v676 = vshll.u32 %v617, 16
      %v678 = vrot.slane %v676, 1
      %v679 = vsel %vm619, %v674, %v678
      %v680 = vshrl.u32 %v617, 16
      %v682 = vor.u32 %v680, %v678
      %v684 = vshll.u32 %v618, 16
      %v686 = vrot.slane %v684, 1
      %v687 = vsel %vm619, %v682, %v686
      %v688 = vshrl.u32 %v618, 16
      %v690 = vor.u32 %v688, %v686
      %v692 = vsel %vm378, %v631, 0
      %v695 = vsel %vm378, %v639, 0
      %v698 = vsel %vm378, %v647, 0
      %v701 = vsel %vm378, %v655, 0
      %v704 = vsel %vm378, %v663, 0
      %v707 = vsel %vm378, %v671, 0
      %v710 = vsel %vm378, %v679, 0
      %v713 = vsel %vm378, %v687, 0
      %v716 = vsel %vm378, %v690, 0
      %v719 = vand.u32 %v573, %v409
      %721 = vmatprep.subr.bf16.mxu0 0
      %722 = vmatpush1.bf16.msra.mxu0 0
      %723 = vmatprep.subr.bf16.mxu0 0
      %724 = vmatpush1.bf16.msra.mxu0 0
      %725 = vmatprep.subr.bf16.mxu0 0
      %726 = vmatpush1.bf16.msra.mxu0 0
      %727 = vmatprep.subr.bf16.mxu0 0
      %728 = vmatpush1.bf16.msra.mxu0 0
      %729 = vmatprep.subr.bf16.mxu0 0
      %730 = vmatpush1.bf16.msra.mxu0 0
      %731 = vmatprep.subr.bf16.mxu0 0
      %732 = vmatpush1.bf16.msra.mxu0 0
      %733 = vmatprep.subr.bf16.mxu0 0
      %734 = vmatpush1.bf16.msra.mxu0 0
      %735 = vmatprep.subr.bf16.mxu0 0
      %736 = vmatpush1.bf16.msra.mxu0 %v719
      %737 = vmatprep.subr.bf16.mxu0 0
      %738 = vmatpush2.bf16.msra.mxu0 0
      %739 = vmatprep.subr.bf16.mxu0 0
      %740 = vmatpush2.bf16.msra.mxu0 0
      %741 = vmatprep.subr.bf16.mxu0 0
      %742 = vmatpush2.bf16.msra.mxu0 0
      %743 = vmatprep.subr.bf16.mxu0 0
      %744 = vmatpush2.bf16.msra.mxu0 0
      %745 = vmatprep.subr.bf16.mxu0 0
      %746 = vmatpush2.bf16.msra.mxu0 0
      %747 = vmatprep.subr.bf16.mxu0 0
      %748 = vmatpush2.bf16.msra.mxu0 0
      %749 = vmatprep.subr.bf16.mxu0 0
      %750 = vmatpush2.bf16.msra.mxu0 0
      %751 = vmatprep.subr.bf16.mxu0 0
      %752 = vmatpush2.bf16.msra.mxu0 0
      %753 = vmatprep.mubr.bf16.mxu0 0
      %754 = vmatmul.mubr.bf16.gmra.mxu0 %v692
      %v755 = vpop.f32.mrf.mxu0
      %v756 = vadd.f32 0.0, %v755
      %v757 = vpop.f32.mrf.mxu0
      %v758 = vpop.f32.mrf.mxu0
      %v759 = vadd.f32 0.0, %v758
      %v760 = vpop.f32.mrf.mxu0
      %761 = vmatprep.mubr.bf16.mxu0 0
      %762 = vmatmul.mubr.bf16.gmra.mxu0 %v695
      %v763 = vpop.f32.mrf.mxu0
      %v764 = vadd.f32 0.0, %v763
      %v765 = vpop.f32.mrf.mxu0
      %v766 = vpop.f32.mrf.mxu0
      %v767 = vadd.f32 0.0, %v766
      %v768 = vpop.f32.mrf.mxu0
      %769 = vmatprep.mubr.bf16.mxu0 0
      %770 = vmatmul.mubr.bf16.gmra.mxu0 %v698
      %v771 = vpop.f32.mrf.mxu0
      %v772 = vadd.f32 0.0, %v771
      %v773 = vpop.f32.mrf.mxu0
      %v774 = vpop.f32.mrf.mxu0
      %v775 = vadd.f32 0.0, %v774
      %v776 = vpop.f32.mrf.mxu0
      %777 = vmatprep.mubr.bf16.mxu0 0
      %778 = vmatmul.mubr.bf16.gmra.mxu0 %v701
      %v779 = vpop.f32.mrf.mxu0
      %v780 = vadd.f32 0.0, %v779
      %v781 = vpop.f32.mrf.mxu0
      %v782 = vpop.f32.mrf.mxu0
      %v783 = vadd.f32 0.0, %v782
      %v784 = vpop.f32.mrf.mxu0
      %785 = vmatprep.mubr.bf16.mxu0 0
      %786 = vmatmul.mubr.bf16.gmra.mxu0 %v704
      %v787 = vpop.f32.mrf.mxu0
      %v788 = vadd.f32 0.0, %v787
      %v789 = vpop.f32.mrf.mxu0
      %v790 = vpop.f32.mrf.mxu0
      %v791 = vadd.f32 0.0, %v790
      %v792 = vpop.f32.mrf.mxu0
      %793 = vmatprep.mubr.bf16.mxu0 0
      %794 = vmatmul.mubr.bf16.gmra.mxu0 %v707
      %v795 = vpop.f32.mrf.mxu0
      %v796 = vadd.f32 0.0, %v795
      %v797 = vpop.f32.mrf.mxu0
      %v798 = vpop.f32.mrf.mxu0
      %v799 = vadd.f32 0.0, %v798
      %v800 = vpop.f32.mrf.mxu0
      %801 = vmatprep.mubr.bf16.mxu0 0
      %802 = vmatmul.mubr.bf16.gmra.mxu0 %v710
      %v803 = vpop.f32.mrf.mxu0
      %v804 = vadd.f32 0.0, %v803
      %v805 = vpop.f32.mrf.mxu0
      %v806 = vpop.f32.mrf.mxu0
      %v807 = vadd.f32 0.0, %v806
      %v808 = vpop.f32.mrf.mxu0
      %809 = vmatprep.mubr.bf16.mxu0 0
      %810 = vmatmul.mubr.bf16.gmra.mxu0 %v713
      %v811 = vpop.f32.mrf.mxu0
      %v812 = vadd.f32 0.0, %v811
      %v813 = vpop.f32.mrf.mxu0
      %v814 = vpop.f32.mrf.mxu0
      %v815 = vadd.f32 0.0, %v814
      %v816 = vpop.f32.mrf.mxu0
      %817 = vmatprep.mubr.bf16.mxu0 0
      %818 = vmatmul.mubr.bf16.gmra.mxu0 %v716
      %v819 = vpop.f32.mrf.mxu0
      %v820 = vadd.f32 0.0, %v819
      %v821 = vpop.f32.mrf.mxu0
      %v822 = vpop.f32.mrf.mxu0
      %v823 = vadd.f32 0.0, %v822
      %v824 = vpop.f32.mrf.mxu0
      %825 = vdwg.mxu0
      %v826 = vadd.f32 %v536, %v756
      %v827 = vadd.f32 %v537, %v759
      %v828 = vadd.f32 %v538, %v764
      %v829 = vadd.f32 %v539, %v767
      %v830 = vadd.f32 %v540, %v772
      %v831 = vadd.f32 %v541, %v775
      %v832 = vadd.f32 %v542, %v780
      %v833 = vadd.f32 %v543, %v783
      %v834 = vadd.f32 %v544, %v788
      %v835 = vadd.f32 %v545, %v791
      %v836 = vadd.f32 %v546, %v796
      %v837 = vadd.f32 %v547, %v799
      %v838 = vadd.f32 %v548, %v804
      %v839 = vadd.f32 %v549, %v807
      %v840 = vadd.f32 %v550, %v812
      %v841 = vadd.f32 %v551, %v815
      %v842 = vadd.f32 %v552, %v820
      %v843 = vadd.f32 %v553, %v823
      %844 = vst [vmem:[#allocation2] sm:$0xff] %v826
      %845 = vst [vmem:[#allocation2 + $0x8] sm:$0xff] %v827
      %846 = vst [vmem:[#allocation2 + $0x10] sm:$0xff] %v828
      %847 = vst [vmem:[#allocation2 + $0x18] sm:$0xff] %v829
      %848 = vst [vmem:[#allocation2 + $0x20] sm:$0xff] %v830
      %849 = vst [vmem:[#allocation2 + $0x28] sm:$0xff] %v831
      %850 = vst [vmem:[#allocation2 + $0x30] sm:$0xff] %v832
      %851 = vst [vmem:[#allocation2 + $0x38] sm:$0xff] %v833
      %852 = vst [vmem:[#allocation2 + $0x40] sm:$0xff] %v834
      %853 = vst [vmem:[#allocation2 + $0x48] sm:$0xff] %v835
      %854 = vst [vmem:[#allocation2 + $0x50] sm:$0xff] %v836
      %855 = vst [vmem:[#allocation2 + $0x58] sm:$0xff] %v837
      %856 = vst [vmem:[#allocation2 + $0x60] sm:$0xff] %v838
      %857 = vst [vmem:[#allocation2 + $0x68] sm:$0xff] %v839
      %858 = vst [vmem:[#allocation2 + $0x70] sm:$0xff] %v840
      %859 = vst [vmem:[#allocation2 + $0x78] sm:$0xff] %v841
      %860 = vst [vmem:[#allocation2 + $0x80] sm:$0xff] %v842
      %861 = vst [vmem:[#allocation2 + $0x88] sm:$0x7f] %v843
      %v862 = vld [vmem:[#allocation2 + $0x8f] sm:$0x1]
      %v863 = vld [vmem:[%s296] sm:$0x1]
      %v864 = vld [vmem:[%s572] sm:$0x7]
      %v866 = vsel %vm378, %v863, 0
      %v869 = vand.u32 %v864, %v409
      %871 = vmatprep.subr.bf16.mxu0 0
      %872 = vmatpush1.bf16.msra.mxu0 0
      %873 = vmatprep.subr.bf16.mxu0 0
      %874 = vmatpush1.bf16.msra.mxu0 0
      %875 = vmatprep.subr.bf16.mxu0 0
      %876 = vmatpush1.bf16.msra.mxu0 0
      %877 = vmatprep.subr.bf16.mxu0 0
      %878 = vmatpush1.bf16.msra.mxu0 0
      %879 = vmatprep.subr.bf16.mxu0 0
      %880 = vmatpush1.bf16.msra.mxu0 0
      %881 = vmatprep.subr.bf16.mxu0 0
      %882 = vmatpush1.bf16.msra.mxu0 0
      %883 = vmatprep.subr.bf16.mxu0 0
      %884 = vmatpush1.bf16.msra.mxu0 0
      %885 = vmatprep.subr.bf16.mxu0 0
      %886 = vmatpush1.bf16.msra.mxu0 %v869
      %887 = vmatprep.subr.bf16.mxu0 0
      %888 = vmatpush2.bf16.msra.mxu0 0
      %889 = vmatprep.subr.bf16.mxu0 0
      %890 = vmatpush2.bf16.msra.mxu0 0
      %891 = vmatprep.subr.bf16.mxu0 0
      %892 = vmatpush2.bf16.msra.mxu0 0
      %893 = vmatprep.subr.bf16.mxu0 0
      %894 = vmatpush2.bf16.msra.mxu0 0
      %895 = vmatprep.subr.bf16.mxu0 0
      %896 = vmatpush2.bf16.msra.mxu0 0
      %897 = vmatprep.subr.bf16.mxu0 0
      %898 = vmatpush2.bf16.msra.mxu0 0
      %899 = vmatprep.subr.bf16.mxu0 0
      %900 = vmatpush2.bf16.msra.mxu0 0
      %901 = vmatprep.subr.bf16.mxu0 0
      %902 = vmatpush2.bf16.msra.mxu0 0
      %903 = vmatprep.mubr.bf16.mxu0 0
      %904 = vmatmul.mubr.bf16.gmra.mxu0 %v866
      %v905 = vpop.f32.mrf.mxu0
      %v906 = vadd.f32 0.0, %v905
      %v907 = vpop.f32.mrf.mxu0
      %v908 = vpop.f32.mrf.mxu0
      %v909 = vpop.f32.mrf.mxu0
      %910 = vdwg.mxu0
      %v911 = vadd.f32 %v862, %v906
      %912 = vst [vmem:[#allocation2 + $0x8f] sm:$0x1] %v911
      %v913 = vld [vmem:[#allocation2] sm:$0xff]
      %v914 = vld [vmem:[#allocation2 + $0x8] sm:$0xff]
      %v915 = vld [vmem:[#allocation2 + $0x10] sm:$0xff]
      %v916 = vld [vmem:[#allocation2 + $0x18] sm:$0xff]
      %v917 = vld [vmem:[#allocation2 + $0x20] sm:$0xff]
      %v918 = vld [vmem:[#allocation2 + $0x28] sm:$0xff]
      %v919 = vld [vmem:[#allocation2 + $0x30] sm:$0xff]
      %v920 = vld [vmem:[#allocation2 + $0x38] sm:$0xff]
      %v921 = vld [vmem:[#allocation2 + $0x40] sm:$0xff]
      %v922 = vld [vmem:[#allocation2 + $0x48] sm:$0xff]
      %v923 = vld [vmem:[#allocation2 + $0x50] sm:$0xff]
      %v924 = vld [vmem:[#allocation2 + $0x58] sm:$0xff]
      %v925 = vld [vmem:[#allocation2 + $0x60] sm:$0xff]
      %v926 = vld [vmem:[#allocation2 + $0x68] sm:$0xff]
      %v927 = vld [vmem:[#allocation2 + $0x70] sm:$0xff]
      %v928 = vld [vmem:[#allocation2 + $0x78] sm:$0xff]
      %v929 = vld [vmem:[#allocation2 + $0x80] sm:$0xff]
      %v930 = vld [vmem:[#allocation2 + $0x88] sm:$0xff]
      %v931 = vpack.c.bf16 %v914, %v913
      %v932 = vpack.c.bf16 %v916, %v915
      %v933 = vpack.c.bf16 %v918, %v917
      %v934 = vpack.c.bf16 %v920, %v919
      %v935 = vpack.c.bf16 %v922, %v921
      %v936 = vpack.c.bf16 %v924, %v923
      %v937 = vpack.c.bf16 %v926, %v925
      %v938 = vpack.c.bf16 %v928, %v927
      %v939 = vpack.c.bf16 %v930, %v929
      %v949 = vunpack.c.l.b16 %v931
      %v950 = vunpack.c.h.b16 %v931
      %v951 = vunpack.c.l.b16 %v932
      %v952 = vunpack.c.h.b16 %v932
      %v953 = vunpack.c.l.b16 %v933
      %v954 = vunpack.c.h.b16 %v933
      %v955 = vunpack.c.l.b16 %v934
      %v956 = vunpack.c.h.b16 %v934
      %v957 = vunpack.c.l.b16 %v935
      %v958 = vunpack.c.h.b16 %v935
      %v959 = vunpack.c.l.b16 %v936
      %v960 = vunpack.c.h.b16 %v936
      %v961 = vunpack.c.l.b16 %v937
      %v962 = vunpack.c.h.b16 %v937
      %v963 = vunpack.c.l.b16 %v938
      %v964 = vunpack.c.h.b16 %v938
      %v965 = vunpack.c.l.b16 %v939
      %v966 = vunpack.c.h.b16 %v939
      %v967 = vpack.c.b16 %v949, %v949
      %v968 = vpack.c.b16 %v950, %v950
      %v969 = vpack.c.b16 %v951, %v951
      %v970 = vpack.c.b16 %v952, %v952
      %v971 = vpack.c.b16 %v953, %v953
      %v972 = vpack.c.b16 %v954, %v954
      %v973 = vpack.c.b16 %v955, %v955
      %v974 = vpack.c.b16 %v956, %v956
      %v975 = vpack.c.b16 %v957, %v957
      %v976 = vpack.c.b16 %v958, %v958
      %v977 = vpack.c.b16 %v959, %v959
      %v978 = vpack.c.b16 %v960, %v960
      %v979 = vpack.c.b16 %v961, %v961
      %v980 = vpack.c.b16 %v962, %v962
      %v981 = vpack.c.b16 %v963, %v963
      %v982 = vpack.c.b16 %v964, %v964
      %v983 = vpack.c.b16 %v965, %v965
      %v984 = vpack.c.b16 %v966, %v966
      %1003 = vst [vmem:[%s307] sm:$0xf] %v967
      %1004 = vst [vmem:[%s307 + $0x4] sm:$0xf] %v968
      %1005 = vst [vmem:[%s307 + $0x8] sm:$0xf] %v969
      %1006 = vst [vmem:[%s307 + $0xc] sm:$0xf] %v970
      %1007 = vst [vmem:[%s307 + $0x10] sm:$0xf] %v971
      %1008 = vst [vmem:[%s307 + $0x14] sm:$0xf] %v972
      %1009 = vst [vmem:[%s307 + $0x18] sm:$0xf] %v973
      %1010 = vst [vmem:[%s307 + $0x1c] sm:$0xf] %v974
      %1011 = vst [vmem:[%s307 + $0x20] sm:$0xf] %v975
      %1012 = vst [vmem:[%s307 + $0x24] sm:$0xf] %v976
      %1013 = vst [vmem:[%s307 + $0x28] sm:$0xf] %v977
      %1014 = vst [vmem:[%s307 + $0x2c] sm:$0xf] %v978
      %1015 = vst [vmem:[%s307 + $0x30] sm:$0xf] %v979
      %1016 = vst [vmem:[%s307 + $0x34] sm:$0xf] %v980
      %1017 = vst [vmem:[%s307 + $0x38] sm:$0xf] %v981
      %1018 = vst [vmem:[%s307 + $0x3c] sm:$0xf] %v982
      %1019 = vst [vmem:[%s307 + $0x40] sm:$0xf] %v983
      %1020 = vst [vmem:[%s307 + $0x44] sm:$0xf] %v984
      %p1021 = scmp.eq.s32.totalorder %s21, 0
      // Predicated region
      $region33: #{feature_extractor.4} parent=31 // pred_check
        %p1022 = pneg %p1021
      $region34: #{feature_extractor.4} parent=31 // pred_check_branch
        %1024 = sbr.rel (%p1022) target = $region36
      $region35: #{feature_extractor.4} parent=31 // pred_region
        %1025 = vst [vmem:[%s312] sm:$0x3] 0.0
      $region36: #{feature_extractor.4} parent=31 // pred_fallthru
        _
      %s1026 = smul.u32 %s21, 144
      %v1027 = vlaneseq
      %v1028 = vshrl.u32 %v1027, 7
      %v1029 = vadd.s32 %v1028, 8
      %v1030 = vadd.s32 %v1028, 16
      %v1031 = vadd.s32 %v1028, 24
      %v1032 = vadd.s32 %v1028, 32
      %v1033 = vadd.s32 %v1028, 40
      %v1034 = vadd.s32 %v1028, 48
      %v1035 = vadd.s32 %v1028, 56
      %v1036 = vadd.s32 %v1028, 64
      %v1037 = vadd.s32 %v1028, 72
      %v1038 = vadd.s32 %v1028, 80
      %v1039 = vadd.s32 %v1028, 88
      %v1040 = vadd.s32 %v1028, 96
      %v1041 = vadd.s32 %v1028, 104
      %v1042 = vadd.s32 %v1028, 112
      %v1043 = vadd.s32 %v1028, 120
      %v1044 = vadd.s32 %v1028, 128
      %v1045 = vadd.s32 %v1028, 136
      %v1046 = vstv %s1026
      %v1047 = vadd.s32 %v1046, %v1028
      %v1048 = vadd.s32 %v1046, %v1029
      %v1049 = vadd.s32 %v1046, %v1030
      %v1050 = vadd.s32 %v1046, %v1031
      %v1051 = vadd.s32 %v1046, %v1032
      %v1052 = vadd.s32 %v1046, %v1033
      %v1053 = vadd.s32 %v1046, %v1034
      %v1054 = vadd.s32 %v1046, %v1035
      %v1055 = vadd.s32 %v1046, %v1036
      %v1056 = vadd.s32 %v1046, %v1037
      %v1057 = vadd.s32 %v1046, %v1038
      %v1058 = vadd.s32 %v1046, %v1039
      %v1059 = vadd.s32 %v1046, %v1040
      %v1060 = vadd.s32 %v1046, %v1041
      %v1061 = vadd.s32 %v1046, %v1042
      %v1062 = vadd.s32 %v1046, %v1043
      %v1063 = vadd.s32 %v1046, %v1044
      %v1064 = vadd.s32 %v1046, %v1045
      %vm1065 = vcmp.lt.s32.totalorder %v1047, 79
      %vm1066 = vcmp.lt.s32.totalorder %v1048, 79
      %vm1067 = vcmp.lt.s32.totalorder %v1049, 79
      %vm1068 = vcmp.lt.s32.totalorder %v1050, 79
      %vm1069 = vcmp.lt.s32.totalorder %v1051, 79
      %vm1070 = vcmp.lt.s32.totalorder %v1052, 79
      %vm1071 = vcmp.lt.s32.totalorder %v1053, 79
      %vm1072 = vcmp.lt.s32.totalorder %v1054, 79
      %vm1073 = vcmp.lt.s32.totalorder %v1055, 79
      %vm1074 = vcmp.lt.s32.totalorder %v1056, 79
      %vm1075 = vcmp.lt.s32.totalorder %v1057, 79
      %vm1076 = vcmp.lt.s32.totalorder %v1058, 79
      %vm1077 = vcmp.lt.s32.totalorder %v1059, 79
      %vm1078 = vcmp.lt.s32.totalorder %v1060, 79
      %vm1079 = vcmp.lt.s32.totalorder %v1061, 79
      %vm1080 = vcmp.lt.s32.totalorder %v1062, 79
      %vm1081 = vcmp.lt.s32.totalorder %v1063, 79
      %vm1082 = vcmp.lt.s32.totalorder %v1064, 79
      %v1083 = vsel %vm1065, 1, 0
      %v1084 = vsel %vm1066, 1, 0
      %v1085 = vsel %vm1067, 1, 0
      %v1086 = vsel %vm1068, 1, 0
      %v1087 = vsel %vm1069, 1, 0
      %v1088 = vsel %vm1070, 1, 0
      %v1089 = vsel %vm1071, 1, 0
      %v1090 = vsel %vm1072, 1, 0
      %v1091 = vsel %vm1073, 1, 0
      %v1092 = vsel %vm1074, 1, 0
      %v1093 = vsel %vm1075, 1, 0
      %v1094 = vsel %vm1076, 1, 0
      %v1095 = vsel %vm1077, 1, 0
      %v1096 = vsel %vm1078, 1, 0
      %v1097 = vsel %vm1079, 1, 0
      %v1098 = vsel %vm1080, 1, 0
      %v1099 = vsel %vm1081, 1, 0
      %v1100 = vsel %vm1082, 1, 0
      %vm1101 = vcmp.eq.s32.totalorder %v1083, 1
      %vm1102 = vcmp.eq.s32.totalorder %v1084, 1
      %vm1103 = vcmp.eq.s32.totalorder %v1085, 1
      %vm1104 = vcmp.eq.s32.totalorder %v1086, 1
      %vm1105 = vcmp.eq.s32.totalorder %v1087, 1
      %vm1106 = vcmp.eq.s32.totalorder %v1088, 1
      %vm1107 = vcmp.eq.s32.totalorder %v1089, 1
      %vm1108 = vcmp.eq.s32.totalorder %v1090, 1
      %vm1109 = vcmp.eq.s32.totalorder %v1091, 1
      %vm1110 = vcmp.eq.s32.totalorder %v1092, 1
      %vm1111 = vcmp.eq.s32.totalorder %v1093, 1
      %vm1112 = vcmp.eq.s32.totalorder %v1094, 1
      %vm1113 = vcmp.eq.s32.totalorder %v1095, 1
      %vm1114 = vcmp.eq.s32.totalorder %v1096, 1
      %vm1115 = vcmp.eq.s32.totalorder %v1097, 1
      %vm1116 = vcmp.eq.s32.totalorder %v1098, 1
      %vm1117 = vcmp.eq.s32.totalorder %v1099, 1
      %vm1118 = vcmp.eq.s32.totalorder %v1100, 1
      %v1119 = vsel %vm1101, %v913, 0.0
      %v1120 = vsel %vm1102, %v914, 0.0
      %v1121 = vsel %vm1103, %v915, 0.0
      %v1122 = vsel %vm1104, %v916, 0.0
      %v1123 = vsel %vm1105, %v917, 0.0
      %v1124 = vsel %vm1106, %v918, 0.0
      %v1125 = vsel %vm1107, %v919, 0.0
      %v1126 = vsel %vm1108, %v920, 0.0
      %v1127 = vsel %vm1109, %v921, 0.0
      %v1128 = vsel %vm1110, %v922, 0.0
      %v1129 = vsel %vm1111, %v923, 0.0
      %v1130 = vsel %vm1112, %v924, 0.0
      %v1131 = vsel %vm1113, %v925, 0.0
      %v1132 = vsel %vm1114, %v926, 0.0
      %v1133 = vsel %vm1115, %v927, 0.0
      %v1134 = vsel %vm1116, %v928, 0.0
      %v1135 = vsel %vm1117, %v929, 0.0
      %v1136 = vsel %vm1118, %v930, 0.0
      %v1137 = vld [vmem:[%s312] sm:$0x1]
      %v1138 = vadd.f32 %v1119, %v1120
      %v1139 = vadd.f32 %v1138, %v1121
      %v1140 = vadd.f32 %v1139, %v1122
      %v1141 = vadd.f32 %v1140, %v1123
      %v1142 = vadd.f32 %v1141, %v1124
      %v1143 = vadd.f32 %v1142, %v1125
      %v1144 = vadd.f32 %v1143, %v1126
      %v1145 = vadd.f32 %v1144, %v1127
      %v1146 = vadd.f32 %v1145, %v1128
      %v1147 = vadd.f32 %v1146, %v1129
      %v1148 = vadd.f32 %v1147, %v1130
      %v1149 = vadd.f32 %v1148, %v1131
      %v1150 = vadd.f32 %v1149, %v1132
      %v1151 = vadd.f32 %v1150, %v1133
      %v1152 = vadd.f32 %v1151, %v1134
      %v1153 = vadd.f32 %v1152, %v1135
      %v1154 = vadd.f32 %v1153, %v1136
      %v1155 = vrot.slane %v1154, 4
      %v1156 = vadd.f32 %v1154, %v1155
      %v1157 = vrot.slane %v1156, 2
      %v1158 = vadd.f32 %v1156, %v1157
      %v1159 = vrot.slane %v1158, 1
      %v1160 = vadd.f32 %v1158, %v1159
      %v1161 = vadd.f32 %v1137, %v1160
      %1162 = vst [vmem:[%s312] sm:$0x1] %v1161
      %v1163 = vld [vmem:[%s312 + $0x1] sm:$0x1]
      %v1164 = vmul.f32 %v1119, %v1119
      %v1165 = vmul.f32 %v1120, %v1120
      %v1166 = vmul.f32 %v1121, %v1121
      %v1167 = vmul.f32 %v1122, %v1122
      %v1168 = vmul.f32 %v1123, %v1123
      %v1169 = vmul.f32 %v1124, %v1124
      %v1170 = vmul.f32 %v1125, %v1125
      %v1171 = vmul.f32 %v1126, %v1126
      %v1172 = vmul.f32 %v1127, %v1127
      %v1173 = vmul.f32 %v1128, %v1128
      %v1174 = vmul.f32 %v1129, %v1129
      %v1175 = vmul.f32 %v1130, %v1130
      %v1176 = vmul.f32 %v1131, %v1131
      %v1177 = vmul.f32 %v1132, %v1132
      %v1178 = vmul.f32 %v1133, %v1133
      %v1179 = vmul.f32 %v1134, %v1134
      %v1180 = vmul.f32 %v1135, %v1135
      %v1181 = vmul.f32 %v1136, %v1136
      %v1182 = vadd.f32 %v1164, %v1165
      %v1183 = vadd.f32 %v1182, %v1166
      %v1184 = vadd.f32 %v1183, %v1167
      %v1185 = vadd.f32 %v1184, %v1168
      %v1186 = vadd.f32 %v1185, %v1169
      %v1187 = vadd.f32 %v1186, %v1170
      %v1188 = vadd.f32 %v1187, %v1171
      %v1189 = vadd.f32 %v1188, %v1172
      %v1190 = vadd.f32 %v1189, %v1173
      %v1191 = vadd.f32 %v1190, %v1174
      %v1192 = vadd.f32 %v1191, %v1175
      %v1193 = vadd.f32 %v1192, %v1176
      %v1194 = vadd.f32 %v1193, %v1177
      %v1195 = vadd.f32 %v1194, %v1178
      %v1196 = vadd.f32 %v1195, %v1179
      %v1197 = vadd.f32 %v1196, %v1180
      %v1198 = vadd.f32 %v1197, %v1181
      %v1199 = vrot.slane %v1198, 4
      %v1200 = vadd.f32 %v1198, %v1199
      %v1201 = vrot.slane %v1200, 2
      %v1202 = vadd.f32 %v1200, %v1201
      %v1203 = vrot.slane %v1202, 1
      %v1204 = vadd.f32 %v1202, %v1203
      %v1205 = vadd.f32 %v1163, %v1204
      %1206 = vst [vmem:[%s312 + $0x1] sm:$0x1] %v1205
      %s1207 = smul.u32 18, %s21
      %p1208 = scmp.lt.s32.totalorder %s20, 1
      %s1209 = scalar_select %p1208, %s20, 1
      %p1210 = scmp.lt.s32.totalorder %s1207, 17
      %s1211 = scalar_select %p1210, %s1207, 17
      %s1212 = smul.addr %s1209, 18
      %s1213 = sadd.s32 %s1211, %s1212
      %s1214 = smul.addr %s1213, 4
      %s1215 = scalar_lea.vmem %s3, %s1214
      %p1216 = scmp.lt.s32.totalorder %s20, 1
      %s1217 = scalar_select %p1216, %s20, 1
      %s1218 = smul.addr %s1217, 2
      %s1219 = scalar_lea.vmem %s4, %s1218
      // Predicated region
      $region37: #{feature_extractor.4} parent=31 // pred_check
        %p1220 = pneg %p129
      $region38: #{feature_extractor.4} parent=31 // pred_check_branch
        %1222 = sbr.rel (%p1220) target = $region40
      $region39: #{feature_extractor.4} parent=31 // pred_region
        %s1223 = smul.u32 18, %s21
      $region40: #{feature_extractor.4} parent=31 // pred_fallthru
        _
      // Predicated region
      $region41: #{feature_extractor.4} parent=31 // pred_check
        %p1224 = pneg %p155
      $region42: #{feature_extractor.4} parent=31 // pred_check_branch
        %1226 = sbr.rel (%p1224) target = $region44
      $region43: #{feature_extractor.4} parent=31 // pred_region
        _
      $region44: #{feature_extractor.4} parent=31 // pred_fallthru
        _
    $region32: #{feature_extractor.4} parent=5 // pred_fallthru
      _
    %p1227 = scmp.le.s32.totalorder 2, %s11
    // Predicated region
    $region45: #{feature_extractor.4} parent=5 // pred_check
      %p1228 = pneg %p1227
    $region46: #{feature_extractor.4} parent=5 // pred_check_branch
      %1230 = sbr.rel (%p1228) target = $region48
    $region47: #{feature_extractor.4} parent=5 // pred_region
      %s1231 = ssub.s32 %s11, 2
      // Predicated region
      $region49: #{feature_extractor.4} parent=47 // pred_check
        %p1232 = pneg %p135
      $region50: #{feature_extractor.4} parent=47 // pred_check_branch
        %1234 = sbr.rel (%p1232) target = $region52
      $region51: #{feature_extractor.4} parent=47 // pred_region
        %s1235 = smul.u32 18, %s23
        %p1236 = scmp.lt.s32.totalorder %s22, 1
        %s1237 = scalar_select %p1236, %s22, 1
        %p1238 = scmp.lt.s32.totalorder %s1235, 17
        %s1239 = scalar_select %p1238, %s1235, 17
        %s1240 = smul.addr %s1237, 18
        %s1241 = sadd.s32 %s1239, %s1240
        %s1242 = smul.addr %s1241, 4
        %s1243 = scalar_lea.vmem %s3, %s1242
      $region52: #{feature_extractor.4} parent=47 // pred_fallthru
        _
      // Predicated region
      $region53: #{feature_extractor.4} parent=47 // pred_check
        %p1244 = pneg %p161
      $region54: #{feature_extractor.4} parent=47 // pred_check_branch
        %1246 = sbr.rel (%p1244) target = $region56
      $region55: #{feature_extractor.4} parent=47 // pred_region
        %p1247 = scmp.lt.s32.totalorder %s22, 1
        %s1248 = scalar_select %p1247, %s22, 1
        %s1249 = smul.addr %s1248, 2
        %s1250 = scalar_lea.vmem %s4, %s1249
      $region56: #{feature_extractor.4} parent=47 // pred_fallthru
        _
    $region48: #{feature_extractor.4} parent=5 // pred_fallthru
      _
  $region6: #{feature_extractor.4} parent=0 // loop_footer
    %s15 = sadd.s32 1, %s11
  $region7: #{feature_extractor.4} parent=0 // loop_footer_branch
    %10 = sbr.rel target = $region3
  $region8: #{feature_extractor.4} parent=0 // loop_exit
    _

// kernel: feature_extractor.6
$region0: #{feature_extractor.6}
  #allocation0 [shape = 'u32[]', space=smem, size = 0x4, offset = 0x4, fixed_abs, tag = 'smem constant byte address 0x4 - core index']
  #allocation1 [shape = 'u32[144,128]{1,0:T(1,128)}', space=vmem, size = 0x12000, scoped, tag = 'internal scratch']
  #allocation2 [shape = 'f32[64,128]{1,0:T(8,128)}', space=vmem, size = 0x8000, scoped, tag = 'scratch operand']
  %s0 = inlined_call_operand.vmem [shape: bf16[2,72,256], index: 0, kind: input, shape index: {}, may-alias: {0,1}]
  %s1 = inlined_call_operand.vmem [shape: bf16[2,72,256], index: 1, kind: input, shape index: {}, may-alias: {0,1}]
  %s2 = inlined_call_operand.vmem [shape: bf16[2,256,128], index: 2, kind: input, shape index: {}]
  %s3 = inlined_call_operand.vmem [shape: bf16[2,64,128], index: 3, kind: output, shape index: {}]
  %s4 = sld [smem:[#allocation0]]
  $region45: #{feature_extractor.6} parent=0
    _
  %s6 = ssub.s32 1, %s4
  %s7 = scalar_select 0, %s6, %s4
  loop: start=0, step=1, limit=4
  $region2: #{feature_extractor.6} parent=0 // loop_pre_header
    _
  $region3: #{feature_extractor.6} parent=0 // loop_header
    %s9 = sphi 0, %s13
    %p10 = scmp.ge.s32.totalorder %s9, 4
    %s16 = sphi 0, %s28
    %s17 = sphi 0, %s24
    %s18 = sphi 0, %s16
    %s19 = sphi 0, %s17
    %s20 = sphi 0, %s18
    %s21 = sphi 0, %s19
    %s33 = sphi 0, %s35
    %s36 = sphi 0, %s33
    %s37 = sphi 0, %s36
    %s53 = sphi 0, %s37
    %s65 = sphi 0, %s67
    %s68 = sphi 0, %s65
    %s69 = sphi 0, %s68
    %s85 = sphi 0, %s69
    %s89 = sphi 0, %s89
    %s91 = sphi 0, %s89
    %s92 = sphi 0, %s91
    %s106 = sphi 0, %s92
    %s114 = sphi 0, %s116
    %s117 = sphi 0, %s114
    %s118 = sphi 0, %s117
    %s134 = sphi 0, %s118
  $region4: #{feature_extractor.6} parent=0 // loop_header_branch
    %12 = sbr.rel (%p10) target = $region8
  $region5: #{feature_extractor.6} parent=0 // loop_body
    %s14 = ssub.s32 %s9, 1
    %s15 = ssub.s32 %s9, 2
    %s22 = sadd.s32 1, %s17
    %p23 = scmp.ge.s32.totalorder %s22, 1
    %s24 = scalar_select %p23, 0, %s22
    %s25 = sadd.s32 1, %s16
    %s26 = scalar_select %p23, %s25, %s16
    %p27 = scmp.ge.s32.totalorder %s26, 2
    %s28 = scalar_select %p27, 0, %s26
    %s29 = ssub.s32 %s16, %s28
    %s30 = ssub.s32 %s17, %s24
    %s31 = sor.u32 %s29, %s30
    %p32 = scmp.eq.s32.totalorder %s31, 0
    %s34 = sadd.s32 %s33, 1
    %s35 = scalar_select %p32, %s33, %s34
    %p38 = pneg %p32
    %p39 = scmp.eq.s32.totalorder %s9, 1
    %p40 = por %p38, %p39
    %p41 = scmp.ne.s32.totalorder %s33, %s36
    %p42 = scmp.eq.s32.totalorder %s9, 0
    %p43 = por %p41, %p42
    %p44 = scmp.ne.s32.totalorder %s33, %s36
    %p45 = scmp.eq.s32.totalorder %s14, 1
    %p46 = por %p44, %p45
    %p47 = scmp.ne.s32.totalorder %s36, %s37
    %p48 = scmp.eq.s32.totalorder %s14, 0
    %p49 = por %p47, %p48
    %p50 = scmp.ne.s32.totalorder %s36, %s37
    %p51 = scmp.eq.s32.totalorder %s15, 1
    %p52 = por %p50, %p51
    %p54 = scmp.ne.s32.totalorder %s37, %s53
    %p55 = scmp.eq.s32.totalorder %s15, 0
    %p56 = por %p54, %p55
    %s57 = sadd.s32 %s17, 1
    %s58 = smul.u32 %s57, 8
    %s59 = sadd.s32 %s24, 1
    %s60 = smul.u32 %s59, 8
    %s61 = ssub.s32 %s16, %s28
    %s62 = ssub.s32 %s58, %s60
    %s63 = sor.u32 %s61, %s62
    %p64 = scmp.eq.s32.totalorder %s63, 0
    %s66 = sadd.s32 %s65, 1
    %s67 = scalar_select %p64, %s65, %s66
    %p70 = pneg %p64
    %p71 = scmp.eq.s32.totalorder %s9, 1
    %p72 = por %p70, %p71
    %p73 = scmp.ne.s32.totalorder %s65, %s68
    %p74 = scmp.eq.s32.totalorder %s9, 0
    %p75 = por %p73, %p74
    %p76 = scmp.ne.s32.totalorder %s65, %s68
    %p77 = scmp.eq.s32.totalorder %s14, 1
    %p78 = por %p76, %p77
    %p79 = scmp.ne.s32.totalorder %s68, %s69
    %p80 = scmp.eq.s32.totalorder %s14, 0
    %p81 = por %p79, %p80
    %p82 = scmp.ne.s32.totalorder %s68, %s69
    %p83 = scmp.eq.s32.totalorder %s15, 1
    %p84 = por %p82, %p83
    %p86 = scmp.ne.s32.totalorder %s69, %s85
    %p87 = scmp.eq.s32.totalorder %s15, 0
    %p88 = por %p86, %p87
    %s90 = sadd.s32 %s89, 1
    %p93 = scmp.eq.s32.totalorder %s9, 1
    %p94 = scmp.ne.s32.totalorder %s89, %s91
    %p95 = scmp.eq.s32.totalorder %s9, 0
    %p96 = por %p94, %p95
    %p97 = scmp.ne.s32.totalorder %s89, %s91
    %p98 = scmp.eq.s32.totalorder %s14, 1
    %p99 = por %p97, %p98
    %p100 = scmp.ne.s32.totalorder %s91, %s92
    %p101 = scmp.eq.s32.totalorder %s14, 0
    %p102 = por %p100, %p101
    %p103 = scmp.ne.s32.totalorder %s91, %s92
    %p104 = scmp.eq.s32.totalorder %s15, 1
    %p105 = por %p103, %p104
    %p107 = scmp.ne.s32.totalorder %s92, %s106
    %p108 = scmp.eq.s32.totalorder %s15, 0
    %p109 = por %p107, %p108
    %s110 = ssub.s32 %s16, %s28
    %s111 = ssub.s32 %s17, %s24
    %s112 = sor.u32 %s110, %s111
    %p113 = scmp.eq.s32.totalorder %s112, 0
    %s115 = sadd.s32 %s114, 1
    %s116 = scalar_select %p113, %s114, %s115
    %p119 = pneg %p113
    %p120 = scmp.eq.s32.totalorder %s9, 1
    %p121 = por %p119, %p120
    %p122 = scmp.ne.s32.totalorder %s114, %s117
    %p123 = scmp.eq.s32.totalorder %s9, 0
    %p124 = por %p122, %p123
    %p125 = scmp.ne.s32.totalorder %s114, %s117
    %p126 = scmp.eq.s32.totalorder %s14, 1
    %p127 = por %p125, %p126
    %p128 = scmp.ne.s32.totalorder %s117, %s118
    %p129 = scmp.eq.s32.totalorder %s14, 0
    %p130 = por %p128, %p129
    %p131 = scmp.ne.s32.totalorder %s117, %s118
    %p132 = scmp.eq.s32.totalorder %s15, 1
    %p133 = por %p131, %p132
    %p135 = scmp.ne.s32.totalorder %s118, %s134
    %p136 = scmp.eq.s32.totalorder %s15, 0
    %p137 = por %p135, %p136
    %p138 = scmp.le.s32.totalorder 1, %s9
    %p139 = scmp.lt.s32.totalorder %s9, 3
    %p140 = pnand %p138, %p139
    %p141 = pneg %p140
    // Predicated region
    $region9: #{feature_extractor.6} parent=5 // pred_check
      _
    $region10: #{feature_extractor.6} parent=5 // pred_check_branch
      %143 = sbr.rel (%p140) target = $region12
    $region11: #{feature_extractor.6} parent=5 // pred_region
      %s144 = ssub.s32 %s9, 1
      // Predicated region
      $region13: #{feature_extractor.6} parent=11 // pred_check
        %p145 = pneg %p102
      $region14: #{feature_extractor.6} parent=11 // pred_check_branch
        %147 = sbr.rel (%p145) target = $region16
      $region15: #{feature_extractor.6} parent=11 // pred_region
        _
      $region16: #{feature_extractor.6} parent=11 // pred_fallthru
        _
    $region12: #{feature_extractor.6} parent=5 // pred_fallthru
      _
    %p148 = scmp.lt.s32.totalorder %s9, 2
    // Predicated region
    $region17: #{feature_extractor.6} parent=5 // pred_check
      %p149 = pneg %p148
    $region18: #{feature_extractor.6} parent=5 // pred_check_branch
      %151 = sbr.rel (%p149) target = $region20
    $region19: #{feature_extractor.6} parent=5 // pred_region
      // Predicated region
      $region21: #{feature_extractor.6} parent=19 // pred_check
        %p152 = pneg %p43
      $region22: #{feature_extractor.6} parent=19 // pred_check_branch
        %154 = sbr.rel (%p152) target = $region24
      $region23: #{feature_extractor.6} parent=19 // pred_region
        %s155 = smul.u32 8, %s17
        %s156 = ssub.s32 9, %s155
        %p157 = scmp.lt.s32.totalorder %s156, 8
        %s158 = scalar_select %p157, %s156, 8
        %s159 = smul.u32 64, %s158
        %s160 = smul.u32 %s159, 2
        %p161 = scmp.lt.s32.totalorder %s16, 1
        %s162 = scalar_select %p161, %s16, 1
        %p163 = scmp.lt.s32.totalorder %s155, 8
        %s164 = scalar_select %p163, %s155, 8
        %s165 = smul.addr %s164, 2
        %s166 = smul.addr %s162, 18
        %s167 = sadd.s32 %s165, %s166
        %s168 = smul.addr %s167, 4
        %s169 = scalar_lea.vmem %s0, %s168
        %s170 = smul.u32 8, %s17
        %s171 = ssub.s32 9, %s170
        %p172 = scmp.lt.s32.totalorder %s171, 8
        %s173 = scalar_select %p172, %s171, 8
        %s174 = smul.u32 64, %s173
        %s175 = smul.u32 %s174, 2
      $region24: #{feature_extractor.6} parent=19 // pred_fallthru
        _
      // Predicated region
      $region25: #{feature_extractor.6} parent=19 // pred_check
        %p176 = pneg %p75
      $region26: #{feature_extractor.6} parent=19 // pred_check_branch
        %178 = sbr.rel (%p176) target = $region28
      $region27: #{feature_extractor.6} parent=19 // pred_region
        %s179 = sadd.s32 %s17, 1
        %s180 = smul.u32 %s179, 8
        %p181 = scmp.lt.s32.totalorder %s16, 1
        %s182 = scalar_select %p181, %s16, 1
        %p183 = scmp.lt.s32.totalorder %s180, 8
        %s184 = scalar_select %p183, %s180, 8
        %s185 = smul.addr %s184, 2
        %s186 = smul.addr %s182, 18
        %s187 = sadd.s32 %s185, %s186
        %s188 = smul.addr %s187, 4
        %s189 = scalar_lea.vmem %s1, %s188
        %s190 = sadd.s32 %s17, 1
        %s191 = smul.u32 %s190, 8
      $region28: #{feature_extractor.6} parent=19 // pred_fallthru
        _
    $region20: #{feature_extractor.6} parent=5 // pred_fallthru
      _
    %p192 = scmp.le.s32.totalorder 1, %s9
    %p193 = scmp.lt.s32.totalorder %s9, 3
    %p194 = pnand %p192, %p193
    %p195 = pneg %p194
    // Predicated region
    $region29: #{feature_extractor.6} parent=5 // pred_check
      _
    $region30: #{feature_extractor.6} parent=5 // pred_check_branch
      %197 = sbr.rel (%p194) target = $region32
    $region31: #{feature_extractor.6} parent=5 // pred_region
      %s198 = ssub.s32 %s9, 1
      %s199 = smul.u32 8, %s19
      %s200 = ssub.s32 9, %s199
      %p201 = scmp.lt.s32.totalorder %s200, 8
      %s202 = scalar_select %p201, %s200, 8
      %s203 = smul.u32 64, %s202
      %s204 = smul.u32 %s203, 2
      %p205 = scmp.lt.s32.totalorder %s18, 1
      %s206 = scalar_select %p205, %s18, 1
      %p207 = scmp.lt.s32.totalorder %s199, 8
      %s208 = scalar_select %p207, %s199, 8
      %s209 = smul.addr %s208, 2
      %s210 = smul.addr %s206, 18
      %s211 = sadd.s32 %s209, %s210
      %s212 = smul.addr %s211, 4
      %s213 = scalar_lea.vmem %s0, %s212
      %p214 = pneg %p49
      %p215 = pneg %p46
      %s216 = sadd.s32 %s19, 1
      %s217 = smul.u32 %s216, 8
      %p218 = scmp.lt.s32.totalorder %s18, 1
      %s219 = scalar_select %p218, %s18, 1
      %p220 = scmp.lt.s32.totalorder %s217, 8
      %s221 = scalar_select %p220, %s217, 8
      %s222 = smul.addr %s221, 2
      %s223 = smul.addr %s219, 18
      %s224 = sadd.s32 %s222, %s223
      %s225 = smul.addr %s224, 4
      %s226 = scalar_lea.vmem %s1, %s225
      %p227 = pneg %p81
      %p228 = pneg %p78
      %p229 = pneg %p102
      %p230 = pneg %p99
      %p231 = pneg %p130
      %p232 = pneg %p127
      %s233 = smul.u32 8, %s19
      %p234 = scmp.lt.s32.totalorder %s18, 1
      %s235 = scalar_select %p234, %s18, 1
      %p236 = scmp.lt.s32.totalorder %s233, 7
      %s237 = scalar_select %p236, %s233, 7
      %s238 = smul.addr %s235, 8
      %s239 = sadd.s32 %s237, %s238
      %s240 = smul.addr %s239, 4
      %s241 = scalar_lea.vmem %s3, %s240
      %s242 = smul.u32 8, %s19
      %s243 = ssub.s32 9, %s242
      %p244 = scmp.lt.s32.totalorder %s243, 8
      %s245 = scalar_select %p244, %s243, 8
      %s246 = smul.u32 64, %s245
      %s247 = smul.u32 %s246, 2
      %p248 = scmp.lt.s32.totalorder %s18, 1
      %s249 = scalar_select %p248, %s18, 1
      %p250 = scmp.lt.s32.totalorder %s242, 8
      %s251 = scalar_select %p250, %s242, 8
      %s252 = smul.addr %s251, 2
      %s253 = smul.addr %s249, 18
      %s254 = sadd.s32 %s252, %s253
      %s255 = smul.addr %s254, 4
      %s256 = scalar_lea.vmem %s0, %s255
      %s257 = smul.u32 8, %s19
      %s258 = ssub.s32 9, %s257
      %p259 = scmp.lt.s32.totalorder %s258, 8
      %s260 = scalar_select %p259, %s258, 8
      %s261 = smul.u32 64, %s260
      %s262 = smul.u32 %s261, 2
      %s263 = sadd.s32 %s19, 1
      %s264 = smul.u32 %s263, 8
      %p265 = scmp.lt.s32.totalorder %s18, 1
      %s266 = scalar_select %p265, %s18, 1
      %p267 = scmp.lt.s32.totalorder %s264, 8
      %s268 = scalar_select %p267, %s264, 8
      %s269 = smul.addr %s268, 2
      %s270 = smul.addr %s266, 18
      %s271 = sadd.s32 %s269, %s270
      %s272 = smul.addr %s271, 4
      %s273 = scalar_lea.vmem %s1, %s272
      %s274 = sadd.s32 %s19, 1
      %s275 = smul.u32 %s274, 8
      %s276 = smul.u32 8, %s19
      %p277 = scmp.lt.s32.totalorder %s18, 1
      %s278 = scalar_select %p277, %s18, 1
      %p279 = scmp.lt.s32.totalorder %s276, 7
      %s280 = scalar_select %p279, %s276, 7
      %s281 = smul.addr %s278, 8
      %s282 = sadd.s32 %s280, %s281
      %s283 = smul.addr %s282, 4
      %s284 = scalar_lea.vmem %s3, %s283
      %s285 = smul.u32 8, %s19
      %v287 = vld [vmem:[%s256] sm:$0xff]
      %v288 = vld [vmem:[%s256 + $0x8] sm:$0xff]
      %v289 = vld [vmem:[%s256 + $0x10] sm:$0xff]
      %v290 = vld [vmem:[%s256 + $0x18] sm:$0xff]
      %v291 = vld [vmem:[%s256 + $0x20] sm:$0xff]
      %v292 = vld [vmem:[%s256 + $0x28] sm:$0xff]
      %v293 = vld [vmem:[%s256 + $0x30] sm:$0xff]
      %v294 = vld [vmem:[%s256 + $0x38] sm:$0xff]
      %v295 = vld [vmem:[%s2] sm:$0xf]
      %v296 = vld [vmem:[%s2 + $0x4] sm:$0xf]
      %v297 = vld [vmem:[%s2 + $0x8] sm:$0xf]
      %v298 = vld [vmem:[%s2 + $0xc] sm:$0xf]
      %v299 = vld [vmem:[%s2 + $0x10] sm:$0xf]
      %v300 = vld [vmem:[%s2 + $0x14] sm:$0xf]
      %v301 = vld [vmem:[%s2 + $0x18] sm:$0xf]
      %v302 = vld [vmem:[%s2 + $0x1c] sm:$0xf]
      %v303 = vld [vmem:[%s2 + $0x20] sm:$0xf]
      %v304 = vld [vmem:[%s2 + $0x24] sm:$0xf]
      %v305 = vld [vmem:[%s2 + $0x28] sm:$0xf]
      %v306 = vld [vmem:[%s2 + $0x2c] sm:$0xf]
      %v307 = vld [vmem:[%s2 + $0x30] sm:$0xf]
      %v308 = vld [vmem:[%s2 + $0x34] sm:$0xf]
      %v309 = vld [vmem:[%s2 + $0x38] sm:$0xf]
      %v310 = vld [vmem:[%s2 + $0x3c] sm:$0xf]
      %v311 = vld [vmem:[%s2 + $0x40] sm:$0xf]
      %v312 = vld [vmem:[%s2 + $0x44] sm:$0xf]
      %v313 = vld [vmem:[%s2 + $0x48] sm:$0xf]
      %v314 = vld [vmem:[%s2 + $0x4c] sm:$0xf]
      %v315 = vld [vmem:[%s2 + $0x50] sm:$0xf]
      %v316 = vld [vmem:[%s2 + $0x54] sm:$0xf]
      %v317 = vld [vmem:[%s2 + $0x58] sm:$0xf]
      %v318 = vld [vmem:[%s2 + $0x5c] sm:$0xf]
      %v319 = vld [vmem:[%s2 + $0x60] sm:$0xf]
      %v320 = vld [vmem:[%s2 + $0x64] sm:$0xf]
      %v321 = vld [vmem:[%s2 + $0x68] sm:$0xf]
      %v322 = vld [vmem:[%s2 + $0x6c] sm:$0xf]
      %v323 = vld [vmem:[%s2 + $0x70] sm:$0xf]
      %v324 = vld [vmem:[%s2 + $0x74] sm:$0xf]
      %v325 = vld [vmem:[%s2 + $0x78] sm:$0xf]
      %v326 = vld [vmem:[%s2 + $0x7c] sm:$0xf]
      %v335 = vunpack.c.l.b16 %v287
      %v336 = vunpack.c.h.b16 %v287
      %v337 = vunpack.c.l.b16 %v288
      %v338 = vunpack.c.h.b16 %v288
      %v339 = vunpack.c.l.b16 %v289
      %v340 = vunpack.c.h.b16 %v289
      %v341 = vunpack.c.l.b16 %v290
      %v342 = vunpack.c.h.b16 %v290
      %v343 = vunpack.c.l.b16 %v291
      %v344 = vunpack.c.h.b16 %v291
      %v345 = vunpack.c.l.b16 %v292
      %v346 = vunpack.c.h.b16 %v292
      %v347 = vunpack.c.l.b16 %v293
      %v348 = vunpack.c.h.b16 %v293
      %v349 = vunpack.c.l.b16 %v294
      %v350 = vunpack.c.h.b16 %v294
      %v351 = vpack.c.b16 %v337, %v335
      %v352 = vpack.c.b16 %v338, %v336
      %v353 = vpack.c.b16 %v341, %v339
      %v354 = vpack.c.b16 %v342, %v340
      %v355 = vpack.c.b16 %v345, %v343
      %v356 = vpack.c.b16 %v346, %v344
      %v357 = vpack.c.b16 %v349, %v347
      %v358 = vpack.c.b16 %v350, %v348
      %v399 = vunpack.c.l.b16 %v295
      %v400 = vunpack.c.l.b16 %v296
      %v401 = vunpack.c.l.b16 %v297
      %v402 = vunpack.c.l.b16 %v298
      %v403 = vunpack.c.l.b16 %v299
      %v404 = vunpack.c.l.b16 %v300
      %v405 = vunpack.c.l.b16 %v301
      %v406 = vunpack.c.l.b16 %v302
      %v407 = vunpack.c.l.b16 %v303
      %v408 = vunpack.c.l.b16 %v304
      %v409 = vunpack.c.l.b16 %v305
      %v410 = vunpack.c.l.b16 %v306
      %v411 = vunpack.c.l.b16 %v307
      %v412 = vunpack.c.l.b16 %v308
      %v413 = vunpack.c.l.b16 %v309
      %v414 = vunpack.c.l.b16 %v310
      %v415 = vunpack.c.l.b16 %v311
      %v416 = vunpack.c.l.b16 %v312
      %v417 = vunpack.c.l.b16 %v313
      %v418 = vunpack.c.l.b16 %v314
      %v419 = vunpack.c.l.b16 %v315
      %v420 = vunpack.c.l.b16 %v316
      %v421 = vunpack.c.l.b16 %v317
      %v422 = vunpack.c.l.b16 %v318
      %v423 = vunpack.c.l.b16 %v319
      %v424 = vunpack.c.l.b16 %v320
      %v425 = vunpack.c.l.b16 %v321
      %v426 = vunpack.c.l.b16 %v322
      %v427 = vunpack.c.l.b16 %v323
      %v428 = vunpack.c.l.b16 %v324
      %v429 = vunpack.c.l.b16 %v325
      %v430 = vunpack.c.l.b16 %v326
      %v431 = vpack.c.b16 %v400, %v399
      %v432 = vpack.c.b16 %v402, %v401
      %v433 = vpack.c.b16 %v404, %v403
      %v434 = vpack.c.b16 %v406, %v405
      %v435 = vpack.c.b16 %v408, %v407
      %v436 = vpack.c.b16 %v410, %v409
      %v437 = vpack.c.b16 %v412, %v411
      %v438 = vpack.c.b16 %v414, %v413
      %v439 = vpack.c.b16 %v416, %v415
      %v440 = vpack.c.b16 %v418, %v417
      %v441 = vpack.c.b16 %v420, %v419
      %v442 = vpack.c.b16 %v422, %v421
      %v443 = vpack.c.b16 %v424, %v423
      %v444 = vpack.c.b16 %v426, %v425
      %v445 = vpack.c.b16 %v428, %v427
      %v446 = vpack.c.b16 %v430, %v429
      %463 = vmatprep.subr.bf16.mxu0 0
      %464 = vmatpush1.bf16.msra.mxu0 %v438
      %465 = vmatprep.subr.bf16.mxu0 0
      %466 = vmatpush1.bf16.msra.mxu0 %v437
      %467 = vmatprep.subr.bf16.mxu0 0
      %468 = vmatpush1.bf16.msra.mxu0 %v436
      %469 = vmatprep.subr.bf16.mxu0 0
      %470 = vmatpush1.bf16.msra.mxu0 %v435
      %471 = vmatprep.subr.bf16.mxu0 0
      %472 = vmatpush1.bf16.msra.mxu0 %v434
      %473 = vmatprep.subr.bf16.mxu0 0
      %474 = vmatpush1.bf16.msra.mxu0 %v433
      %475 = vmatprep.subr.bf16.mxu0 0
      %476 = vmatpush1.bf16.msra.mxu0 %v432
      %477 = vmatprep.subr.bf16.mxu0 0
      %478 = vmatpush1.bf16.msra.mxu0 %v431
      %479 = vmatprep.subr.bf16.mxu0 0
      %480 = vmatpush2.bf16.msra.mxu0 %v446
      %481 = vmatprep.subr.bf16.mxu0 0
      %482 = vmatpush2.bf16.msra.mxu0 %v445
      %483 = vmatprep.subr.bf16.mxu0 0
      %484 = vmatpush2.bf16.msra.mxu0 %v444
      %485 = vmatprep.subr.bf16.mxu0 0
      %486 = vmatpush2.bf16.msra.mxu0 %v443
      %487 = vmatprep.subr.bf16.mxu0 0
      %488 = vmatpush2.bf16.msra.mxu0 %v442
      %489 = vmatprep.subr.bf16.mxu0 0
      %490 = vmatpush2.bf16.msra.mxu0 %v441
      %491 = vmatprep.subr.bf16.mxu0 0
      %492 = vmatpush2.bf16.msra.mxu0 %v440
      %493 = vmatprep.subr.bf16.mxu0 0
      %494 = vmatpush2.bf16.msra.mxu0 %v439
      %495 = vmatprep.mubr.bf16.mxu0 %v352
      %496 = vmatmul.mubr.bf16.gmra.mxu0 %v351
      %v497 = vpop.f32.mrf.mxu0
      %v498 = vadd.f32 0.0, %v497
      %v499 = vpop.f32.mrf.mxu0
      %v500 = vpop.f32.mrf.mxu0
      %v501 = vadd.f32 0.0, %v500
      %v502 = vpop.f32.mrf.mxu0
      %503 = vmatprep.mubr.bf16.mxu0 %v354
      %504 = vmatmul.mubr.bf16.gmra.mxu0 %v353
      %v505 = vpop.f32.mrf.mxu0
      %v506 = vadd.f32 0.0, %v505
      %v507 = vpop.f32.mrf.mxu0
      %v508 = vpop.f32.mrf.mxu0
      %v509 = vadd.f32 0.0, %v508
      %v510 = vpop.f32.mrf.mxu0
      %511 = vmatprep.mubr.bf16.mxu0 %v356
      %512 = vmatmul.mubr.bf16.gmra.mxu0 %v355
      %v513 = vpop.f32.mrf.mxu0
      %v514 = vadd.f32 0.0, %v513
      %v515 = vpop.f32.mrf.mxu0
      %v516 = vpop.f32.mrf.mxu0
      %v517 = vadd.f32 0.0, %v516
      %v518 = vpop.f32.mrf.mxu0
      %519 = vmatprep.mubr.bf16.mxu0 %v358
      %520 = vmatmul.mubr.bf16.gmra.mxu0 %v357
      %v521 = vpop.f32.mrf.mxu0
      %v522 = vadd.f32 0.0, %v521
      %v523 = vpop.f32.mrf.mxu0
      %v524 = vpop.f32.mrf.mxu0
      %v525 = vadd.f32 0.0, %v524
      %v526 = vpop.f32.mrf.mxu0
      %527 = vdwg.mxu0
      %528 = vst [vmem:[#allocation2] sm:$0xff] %v498
      %529 = vst [vmem:[#allocation2 + $0x8] sm:$0xff] %v501
      %530 = vst [vmem:[#allocation2 + $0x10] sm:$0xff] %v506
      %531 = vst [vmem:[#allocation2 + $0x18] sm:$0xff] %v509
      %532 = vst [vmem:[#allocation2 + $0x20] sm:$0xff] %v514
      %533 = vst [vmem:[#allocation2 + $0x28] sm:$0xff] %v517
      %534 = vst [vmem:[#allocation2 + $0x30] sm:$0xff] %v522
      %535 = vst [vmem:[#allocation2 + $0x38] sm:$0xff] %v525
      %v536 = vld [vmem:[#allocation2] sm:$0xff]
      %v537 = vld [vmem:[#allocation2 + $0x8] sm:$0xff]
      %v538 = vld [vmem:[#allocation2 + $0x10] sm:$0xff]
      %v539 = vld [vmem:[#allocation2 + $0x18] sm:$0xff]
      %v540 = vld [vmem:[#allocation2 + $0x20] sm:$0xff]
      %v541 = vld [vmem:[#allocation2 + $0x28] sm:$0xff]
      %v542 = vld [vmem:[#allocation2 + $0x30] sm:$0xff]
      %v543 = vld [vmem:[#allocation2 + $0x38] sm:$0x7f]
      %v544 = vld [vmem:[%s256] sm:$0xff]
      %v545 = vld [vmem:[%s256 + $0x8] sm:$0xff]
      %v546 = vld [vmem:[%s256 + $0x10] sm:$0xff]
      %v547 = vld [vmem:[%s256 + $0x18] sm:$0xff]
      %v548 = vld [vmem:[%s256 + $0x20] sm:$0xff]
      %v549 = vld [vmem:[%s256 + $0x28] sm:$0xff]
      %v550 = vld [vmem:[%s256 + $0x30] sm:$0xff]
      %v551 = vld [vmem:[%s256 + $0x38] sm:$0xff]
      %s552 = scalar_lea.vmem %s2, 128
      %v553 = vld [vmem:[%s552] sm:$0xf]
      %v554 = vld [vmem:[%s552 + $0x4] sm:$0xf]
      %v555 = vld [vmem:[%s552 + $0x8] sm:$0xf]
      %v556 = vld [vmem:[%s552 + $0xc] sm:$0xf]
      %v557 = vld [vmem:[%s552 + $0x10] sm:$0xf]
      %v558 = vld [vmem:[%s552 + $0x14] sm:$0xf]
      %v559 = vld [vmem:[%s552 + $0x18] sm:$0xf]
      %v560 = vld [vmem:[%s552 + $0x1c] sm:$0xf]
      %v561 = vld [vmem:[%s552 + $0x20] sm:$0xf]
      %v562 = vld [vmem:[%s552 + $0x24] sm:$0xf]
      %v563 = vld [vmem:[%s552 + $0x28] sm:$0xf]
      %v564 = vld [vmem:[%s552 + $0x2c] sm:$0xf]
      %v565 = vld [vmem:[%s552 + $0x30] sm:$0xf]
      %v566 = vld [vmem:[%s552 + $0x34] sm:$0xf]
      %v567 = vld [vmem:[%s552 + $0x38] sm:$0xf]
      %v568 = vld [vmem:[%s552 + $0x3c] sm:$0xf]
      %v569 = vld [vmem:[%s552 + $0x40] sm:$0xf]
      %v570 = vld [vmem:[%s552 + $0x44] sm:$0xf]
      %v571 = vld [vmem:[%s552 + $0x48] sm:$0xf]
      %v572 = vld [vmem:[%s552 + $0x4c] sm:$0xf]
      %v573 = vld [vmem:[%s552 + $0x50] sm:$0xf]
      %v574 = vld [vmem:[%s552 + $0x54] sm:$0xf]
      %v575 = vld [vmem:[%s552 + $0x58] sm:$0xf]
      %v576 = vld [vmem:[%s552 + $0x5c] sm:$0xf]
      %v577 = vld [vmem:[%s552 + $0x60] sm:$0xf]
      %v578 = vld [vmem:[%s552 + $0x64] sm:$0xf]
      %v579 = vld [vmem:[%s552 + $0x68] sm:$0xf]
      %v580 = vld [vmem:[%s552 + $0x6c] sm:$0xf]
      %v581 = vld [vmem:[%s552 + $0x70] sm:$0xf]
      %v582 = vld [vmem:[%s552 + $0x74] sm:$0xf]
      %v583 = vld [vmem:[%s552 + $0x78] sm:$0xf]
      %v584 = vld [vmem:[%s552 + $0x7c] sm:$0xf]
      %v593 = vunpack.c.l.b16 %v544
      %v594 = vunpack.c.h.b16 %v544
      %v595 = vunpack.c.l.b16 %v545
      %v596 = vunpack.c.h.b16 %v545
      %v597 = vunpack.c.l.b16 %v546
      %v598 = vunpack.c.h.b16 %v546
      %v599 = vunpack.c.l.b16 %v547
      %v600 = vunpack.c.h.b16 %v547
      %v601 = vunpack.c.l.b16 %v548
      %v602 = vunpack.c.h.b16 %v548
      %v603 = vunpack.c.l.b16 %v549
      %v604 = vunpack.c.h.b16 %v549
      %v605 = vunpack.c.l.b16 %v550
      %v606 = vunpack.c.h.b16 %v550
      %v607 = vunpack.c.l.b16 %v551
      %v608 = vunpack.c.h.b16 %v551
      %v609 = vpack.c.b16 %v595, %v593
      %v610 = vpack.c.b16 %v596, %v594
      %v611 = vpack.c.b16 %v599, %v597
      %v612 = vpack.c.b16 %v600, %v598
      %v613 = vpack.c.b16 %v603, %v601
      %v614 = vpack.c.b16 %v604, %v602
      %v615 = vpack.c.b16 %v607, %v605
      %v616 = vpack.c.b16 %v608, %v606
      %vm617 = vsmask.f32 7424
      %v619 = vshrl.u32 %v609, 16
      %v621 = vshll.u32 %v609, 16
      %v623 = vrot.slane %v621, 1
      %v624 = vor.u32 %v619, %v623
      %v626 = vshll.u32 %v611, 16
      %v628 = vrot.slane %v626, 1
      %v629 = vsel %vm617, %v624, %v628
      %v631 = vshrl.u32 %v610, 16
      %v633 = vshll.u32 %v610, 16
      %v635 = vrot.slane %v633, 1
      %v636 = vor.u32 %v631, %v635
      %v638 = vshll.u32 %v612, 16
      %v640 = vrot.slane %v638, 1
      %v641 = vsel %vm617, %v636, %v640
      %v642 = vshrl.u32 %v611, 16
      %v644 = vor.u32 %v642, %v628
      %v646 = vshll.u32 %v613, 16
      %v648 = vrot.slane %v646, 1
      %v649 = vsel %vm617, %v644, %v648
      %v650 = vshrl.u32 %v612, 16
      %v652 = vor.u32 %v650, %v640
      %v654 = vshll.u32 %v614, 16
      %v656 = vrot.slane %v654, 1
      %v657 = vsel %vm617, %v652, %v656
      %v658 = vshrl.u32 %v613, 16
      %v660 = vor.u32 %v658, %v648
      %v662 = vshll.u32 %v615, 16
      %v664 = vrot.slane %v662, 1
      %v665 = vsel %vm617, %v660, %v664
      %v666 = vshrl.u32 %v614, 16
      %v668 = vor.u32 %v666, %v656
      %v670 = vshll.u32 %v616, 16
      %v672 = vrot.slane %v670, 1
      %v673 = vsel %vm617, %v668, %v672
      %v674 = vshrl.u32 %v615, 16
      %v676 = vor.u32 %v674, %v664
      %v677 = vshrl.u32 %v616, 16
      %v679 = vor.u32 %v677, %v672
      %v720 = vunpack.c.l.b16 %v553
      %v721 = vunpack.c.l.b16 %v554
      %v722 = vunpack.c.l.b16 %v555
      %v723 = vunpack.c.l.b16 %v556
      %v724 = vunpack.c.l.b16 %v557
      %v725 = vunpack.c.l.b16 %v558
      %v726 = vunpack.c.l.b16 %v559
      %v727 = vunpack.c.l.b16 %v560
      %v728 = vunpack.c.l.b16 %v561
      %v729 = vunpack.c.l.b16 %v562
      %v730 = vunpack.c.l.b16 %v563
      %v731 = vunpack.c.l.b16 %v564
      %v732 = vunpack.c.l.b16 %v565
      %v733 = vunpack.c.l.b16 %v566
      %v734 = vunpack.c.l.b16 %v567
      %v735 = vunpack.c.l.b16 %v568
      %v736 = vunpack.c.l.b16 %v569
      %v737 = vunpack.c.l.b16 %v570
      %v738 = vunpack.c.l.b16 %v571
      %v739 = vunpack.c.l.b16 %v572
      %v740 = vunpack.c.l.b16 %v573
      %v741 = vunpack.c.l.b16 %v574
      %v742 = vunpack.c.l.b16 %v575
      %v743 = vunpack.c.l.b16 %v576
      %v744 = vunpack.c.l.b16 %v577
      %v745 = vunpack.c.l.b16 %v578
      %v746 = vunpack.c.l.b16 %v579
      %v747 = vunpack.c.l.b16 %v580
      %v748 = vunpack.c.l.b16 %v581
      %v749 = vunpack.c.l.b16 %v582
      %v750 = vunpack.c.l.b16 %v583
      %v751 = vunpack.c.l.b16 %v584
      %v752 = vpack.c.b16 %v721, %v720
      %v753 = vpack.c.b16 %v723, %v722
      %v754 = vpack.c.b16 %v725, %v724
      %v755 = vpack.c.b16 %v727, %v726
      %v756 = vpack.c.b16 %v729, %v728
      %v757 = vpack.c.b16 %v731, %v730
      %v758 = vpack.c.b16 %v733, %v732
      %v759 = vpack.c.b16 %v735, %v734
      %v760 = vpack.c.b16 %v737, %v736
      %v761 = vpack.c.b16 %v739, %v738
      %v762 = vpack.c.b16 %v741, %v740
      %v763 = vpack.c.b16 %v743, %v742
      %v764 = vpack.c.b16 %v745, %v744
      %v765 = vpack.c.b16 %v747, %v746
      %v766 = vpack.c.b16 %v749, %v748
      %v767 = vpack.c.b16 %v751, %v750
      %784 = vmatprep.subr.bf16.mxu0 0
      %785 = vmatpush1.bf16.msra.mxu0 %v759
      %786 = vmatprep.subr.bf16.mxu0 0
      %787 = vmatpush1.bf16.msra.mxu0 %v758
      %788 = vmatprep.subr.bf16.mxu0 0
      %789 = vmatpush1.bf16.msra.mxu0 %v757
      %790 = vmatprep.subr.bf16.mxu0 0
      %791 = vmatpush1.bf16.msra.mxu0 %v756
      %792 = vmatprep.subr.bf16.mxu0 0
      %793 = vmatpush1.bf16.msra.mxu0 %v755
      %794 = vmatprep.subr.bf16.mxu0 0
      %795 = vmatpush1.bf16.msra.mxu0 %v754
      %796 = vmatprep.subr.bf16.mxu0 0
      %797 = vmatpush1.bf16.msra.mxu0 %v753
      %798 = vmatprep.subr.bf16.mxu0 0
      %799 = vmatpush1.bf16.msra.mxu0 %v752
      %800 = vmatprep.subr.bf16.mxu0 0
      %801 = vmatpush2.bf16.msra.mxu0 %v767
      %802 = vmatprep.subr.bf16.mxu0 0
      %803 = vmatpush2.bf16.msra.mxu0 %v766
      %804 = vmatprep.subr.bf16.mxu0 0
      %805 = vmatpush2.bf16.msra.mxu0 %v765
      %806 = vmatprep.subr.bf16.mxu0 0
      %807 = vmatpush2.bf16.msra.mxu0 %v764
      %808 = vmatprep.subr.bf16.mxu0 0
      %809 = vmatpush2.bf16.msra.mxu0 %v763
      %810 = vmatprep.subr.bf16.mxu0 0
      %811 = vmatpush2.bf16.msra.mxu0 %v762
      %812 = vmatprep.subr.bf16.mxu0 0
      %813 = vmatpush2.bf16.msra.mxu0 %v761
      %814 = vmatprep.subr.bf16.mxu0 0
      %815 = vmatpush2.bf16.msra.mxu0 %v760
      %816 = vmatprep.mubr.bf16.mxu0 %v641
      %817 = vmatmul.mubr.bf16.gmra.mxu0 %v629
      %v818 = vpop.f32.mrf.mxu0
      %v819 = vadd.f32 0.0, %v818
      %v820 = vpop.f32.mrf.mxu0
      %v821 = vpop.f32.mrf.mxu0
      %v822 = vadd.f32 0.0, %v821
      %v823 = vpop.f32.mrf.mxu0
      %824 = vmatprep.mubr.bf16.mxu0 %v657
      %825 = vmatmul.mubr.bf16.gmra.mxu0 %v649
      %v826 = vpop.f32.mrf.mxu0
      %v827 = vadd.f32 0.0, %v826
      %v828 = vpop.f32.mrf.mxu0
      %v829 = vpop.f32.mrf.mxu0
      %v830 = vadd.f32 0.0, %v829
      %v831 = vpop.f32.mrf.mxu0
      %832 = vmatprep.mubr.bf16.mxu0 %v673
      %833 = vmatmul.mubr.bf16.gmra.mxu0 %v665
      %v834 = vpop.f32.mrf.mxu0
      %v835 = vadd.f32 0.0, %v834
      %v836 = vpop.f32.mrf.mxu0
      %v837 = vpop.f32.mrf.mxu0
      %v838 = vadd.f32 0.0, %v837
      %v839 = vpop.f32.mrf.mxu0
      %840 = vmatprep.mubr.bf16.mxu0 %v679
      %841 = vmatmul.mubr.bf16.gmra.mxu0 %v676
      %v842 = vpop.f32.mrf.mxu0
      %v843 = vadd.f32 0.0, %v842
      %v844 = vpop.f32.mrf.mxu0
      %v845 = vpop.f32.mrf.mxu0
      %v846 = vadd.f32 0.0, %v845
      %v847 = vpop.f32.mrf.mxu0
      %848 = vdwg.mxu0
      %v849 = vadd.f32 %v536, %v819
      %v850 = vadd.f32 %v537, %v822
      %v851 = vadd.f32 %v538, %v827
      %v852 = vadd.f32 %v539, %v830
      %v853 = vadd.f32 %v540, %v835
      %v854 = vadd.f32 %v541, %v838
      %v855 = vadd.f32 %v542, %v843
      %v856 = vadd.f32 %v543, %v846
      %857 = vst [vmem:[#allocation2] sm:$0xff] %v849
      %858 = vst [vmem:[#allocation2 + $0x8] sm:$0xff] %v850
      %859 = vst [vmem:[#allocation2 + $0x10] sm:$0xff] %v851
      %860 = vst [vmem:[#allocation2 + $0x18] sm:$0xff] %v852
      %861 = vst [vmem:[#allocation2 + $0x20] sm:$0xff] %v853
      %862 = vst [vmem:[#allocation2 + $0x28] sm:$0xff] %v854
      %863 = vst [vmem:[#allocation2 + $0x30] sm:$0xff] %v855
      %864 = vst [vmem:[#allocation2 + $0x38] sm:$0x7f] %v856
      %v865 = vld [vmem:[#allocation2 + $0x3f] sm:$0x1]
      %v866 = vld [vmem:[%s273] sm:$0x11]
      %v867 = vld [vmem:[%s552] sm:$0xf]
      %v868 = vld [vmem:[%s552 + $0x4] sm:$0xf]
      %v869 = vld [vmem:[%s552 + $0x8] sm:$0xf]
      %v870 = vld [vmem:[%s552 + $0xc] sm:$0xf]
      %v871 = vld [vmem:[%s552 + $0x10] sm:$0xf]
      %v872 = vld [vmem:[%s552 + $0x14] sm:$0xf]
      %v873 = vld [vmem:[%s552 + $0x18] sm:$0xf]
      %v874 = vld [vmem:[%s552 + $0x1c] sm:$0xf]
      %v875 = vld [vmem:[%s552 + $0x20] sm:$0xf]
      %v876 = vld [vmem:[%s552 + $0x24] sm:$0xf]
      %v877 = vld [vmem:[%s552 + $0x28] sm:$0xf]
      %v878 = vld [vmem:[%s552 + $0x2c] sm:$0xf]
      %v879 = vld [vmem:[%s552 + $0x30] sm:$0xf]
      %v880 = vld [vmem:[%s552 + $0x34] sm:$0xf]
      %v881 = vld [vmem:[%s552 + $0x38] sm:$0xf]
      %v882 = vld [vmem:[%s552 + $0x3c] sm:$0xf]
      %v883 = vld [vmem:[%s552 + $0x40] sm:$0xf]
      %v884 = vld [vmem:[%s552 + $0x44] sm:$0xf]
      %v885 = vld [vmem:[%s552 + $0x48] sm:$0xf]
      %v886 = vld [vmem:[%s552 + $0x4c] sm:$0xf]
      %v887 = vld [vmem:[%s552 + $0x50] sm:$0xf]
      %v888 = vld [vmem:[%s552 + $0x54] sm:$0xf]
      %v889 = vld [vmem:[%s552 + $0x58] sm:$0xf]
      %v890 = vld [vmem:[%s552 + $0x5c] sm:$0xf]
      %v891 = vld [vmem:[%s552 + $0x60] sm:$0xf]
      %v892 = vld [vmem:[%s552 + $0x64] sm:$0xf]
      %v893 = vld [vmem:[%s552 + $0x68] sm:$0xf]
      %v894 = vld [vmem:[%s552 + $0x6c] sm:$0xf]
      %v895 = vld [vmem:[%s552 + $0x70] sm:$0xf]
      %v896 = vld [vmem:[%s552 + $0x74] sm:$0xf]
      %v897 = vld [vmem:[%s552 + $0x78] sm:$0xf]
      %v898 = vld [vmem:[%s552 + $0x7c] sm:$0xf]
      %v900 = vunpack.c.l.b16 %v866
      %v901 = vunpack.c.h.b16 %v866
      %v902 = vpack.c.b16 %v900, %v900
      %v903 = vpack.c.b16 %v901, %v901
      %v938 = vunpack.c.l.b16 %v867
      %v939 = vunpack.c.l.b16 %v868
      %v940 = vunpack.c.l.b16 %v869
      %v941 = vunpack.c.l.b16 %v870
      %v942 = vunpack.c.l.b16 %v871
      %v943 = vunpack.c.l.b16 %v872
      %v944 = vunpack.c.l.b16 %v873
      %v945 = vunpack.c.l.b16 %v874
      %v946 = vunpack.c.l.b16 %v875
      %v947 = vunpack.c.l.b16 %v876
      %v948 = vunpack.c.l.b16 %v877
      %v949 = vunpack.c.l.b16 %v878
      %v950 = vunpack.c.l.b16 %v879
      %v951 = vunpack.c.l.b16 %v880
      %v952 = vunpack.c.l.b16 %v881
      %v953 = vunpack.c.l.b16 %v882
      %v954 = vunpack.c.l.b16 %v883
      %v955 = vunpack.c.l.b16 %v884
      %v956 = vunpack.c.l.b16 %v885
      %v957 = vunpack.c.l.b16 %v886
      %v958 = vunpack.c.l.b16 %v887
      %v959 = vunpack.c.l.b16 %v888
      %v960 = vunpack.c.l.b16 %v889
      %v961 = vunpack.c.l.b16 %v890
      %v962 = vunpack.c.l.b16 %v891
      %v963 = vunpack.c.l.b16 %v892
      %v964 = vunpack.c.l.b16 %v893
      %v965 = vunpack.c.l.b16 %v894
      %v966 = vunpack.c.l.b16 %v895
      %v967 = vunpack.c.l.b16 %v896
      %v968 = vunpack.c.l.b16 %v897
      %v969 = vunpack.c.l.b16 %v898
      %v970 = vpack.c.b16 %v939, %v938
      %v971 = vpack.c.b16 %v941, %v940
      %v972 = vpack.c.b16 %v943, %v942
      %v973 = vpack.c.b16 %v945, %v944
      %v974 = vpack.c.b16 %v947, %v946
      %v975 = vpack.c.b16 %v949, %v948
      %v976 = vpack.c.b16 %v951, %v950
      %v977 = vpack.c.b16 %v953, %v952
      %v978 = vpack.c.b16 %v955, %v954
      %v979 = vpack.c.b16 %v957, %v956
      %v980 = vpack.c.b16 %v959, %v958
      %v981 = vpack.c.b16 %v961, %v960
      %v982 = vpack.c.b16 %v963, %v962
      %v983 = vpack.c.b16 %v965, %v964
      %v984 = vpack.c.b16 %v967, %v966
      %v985 = vpack.c.b16 %v969, %v968
      %1002 = vmatprep.subr.bf16.mxu0 0
      %1003 = vmatpush1.bf16.msra.mxu0 %v977
      %1004 = vmatprep.subr.bf16.mxu0 0
      %1005 = vmatpush1.bf16.msra.mxu0 %v976
      %1006 = vmatprep.subr.bf16.mxu0 0
      %1007 = vmatpush1.bf16.msra.mxu0 %v975
      %1008 = vmatprep.subr.bf16.mxu0 0
      %1009 = vmatpush1.bf16.msra.mxu0 %v974
      %1010 = vmatprep.subr.bf16.mxu0 0
      %1011 = vmatpush1.bf16.msra.mxu0 %v973
      %1012 = vmatprep.subr.bf16.mxu0 0
      %1013 = vmatpush1.bf16.msra.mxu0 %v972
      %1014 = vmatprep.subr.bf16.mxu0 0
      %1015 = vmatpush1.bf16.msra.mxu0 %v971
      %1016 = vmatprep.subr.bf16.mxu0 0
      %1017 = vmatpush1.bf16.msra.mxu0 %v970
      %1018 = vmatprep.subr.bf16.mxu0 0
      %1019 = vmatpush2.bf16.msra.mxu0 %v985
      %1020 = vmatprep.subr.bf16.mxu0 0
      %1021 = vmatpush2.bf16.msra.mxu0 %v984
      %1022 = vmatprep.subr.bf16.mxu0 0
      %1023 = vmatpush2.bf16.msra.mxu0 %v983
      %1024 = vmatprep.subr.bf16.mxu0 0
      %1025 = vmatpush2.bf16.msra.mxu0 %v982
      %1026 = vmatprep.subr.bf16.mxu0 0
      %1027 = vmatpush2.bf16.msra.mxu0 %v981
      %1028 = vmatprep.subr.bf16.mxu0 0
      %1029 = vmatpush2.bf16.msra.mxu0 %v980
      %1030 = vmatprep.subr.bf16.mxu0 0
      %1031 = vmatpush2.bf16.msra.mxu0 %v979
      %1032 = vmatprep.subr.bf16.mxu0 0
      %1033 = vmatpush2.bf16.msra.mxu0 %v978
      %1034 = vmatprep.mubr.bf16.mxu0 %v903
      %1035 = vmatmul.mubr.bf16.gmra.mxu0 %v902
      %v1036 = vpop.f32.mrf.mxu0
      %v1037 = vadd.f32 0.0, %v1036
      %v1038 = vpop.f32.mrf.mxu0
      %v1039 = vpop.f32.mrf.mxu0
      %v1040 = vpop.f32.mrf.mxu0
      %1041 = vdwg.mxu0
      %v1042 = vadd.f32 %v865, %v1037
      %1043 = vst [vmem:[#allocation2 + $0x3f] sm:$0x1] %v1042
      %v1044 = vld [vmem:[#allocation2] sm:$0xff]
      %v1045 = vld [vmem:[#allocation2 + $0x8] sm:$0xff]
      %v1046 = vld [vmem:[#allocation2 + $0x10] sm:$0xff]
      %v1047 = vld [vmem:[#allocation2 + $0x18] sm:$0xff]
      %v1048 = vld [vmem:[#allocation2 + $0x20] sm:$0xff]
      %v1049 = vld [vmem:[#allocation2 + $0x28] sm:$0xff]
      %v1050 = vld [vmem:[#allocation2 + $0x30] sm:$0xff]
      %v1051 = vld [vmem:[#allocation2 + $0x38] sm:$0xff]
      %v1052 = vmul.f32 %v1044, 0.5
      %v1053 = vmul.f32 %v1045, 0.5
      %v1054 = vmul.f32 %v1046, 0.5
      %v1055 = vmul.f32 %v1047, 0.5
      %v1056 = vmul.f32 %v1048, 0.5
      %v1057 = vmul.f32 %v1049, 0.5
      %v1058 = vmul.f32 %v1050, 0.5
      %v1059 = vmul.f32 %v1051, 0.5
      %v1060 = vmul.f32 %v1044, 0.70710677
      %v1061 = vmul.f32 %v1045, 0.70710677
      %v1062 = vmul.f32 %v1046, 0.70710677
      %v1063 = vmul.f32 %v1047, 0.70710677
      %v1064 = vmul.f32 %v1048, 0.70710677
      %v1065 = vmul.f32 %v1049, 0.70710677
      %v1066 = vmul.f32 %v1050, 0.70710677
      %v1067 = vmul.f32 %v1051, 0.70710677
      %v1068 = verf.f32.pop %v1060
      %v1069 = verf.f32.pop %v1061
      %v1070 = verf.f32.pop %v1062
      %v1071 = verf.f32.pop %v1063
      %v1072 = verf.f32.pop %v1064
      %v1073 = verf.f32.pop %v1065
      %v1074 = verf.f32.pop %v1066
      %v1075 = verf.f32.pop %v1067
      %v1076 = vadd.f32 %v1068, 1.0
      %v1077 = vadd.f32 %v1069, 1.0
      %v1078 = vadd.f32 %v1070, 1.0
      %v1079 = vadd.f32 %v1071, 1.0
      %v1080 = vadd.f32 %v1072, 1.0
      %v1081 = vadd.f32 %v1073, 1.0
      %v1082 = vadd.f32 %v1074, 1.0
      %v1083 = vadd.f32 %v1075, 1.0
      %v1084 = vmul.f32 %v1052, %v1076
      %v1085 = vmul.f32 %v1053, %v1077
      %v1086 = vmul.f32 %v1054, %v1078
      %v1087 = vmul.f32 %v1055, %v1079
      %v1088 = vmul.f32 %v1056, %v1080
      %v1089 = vmul.f32 %v1057, %v1081
      %v1090 = vmul.f32 %v1058, %v1082
      %v1091 = vmul.f32 %v1059, %v1083
      %v1092 = vpack.c.bf16 %v1085, %v1084
      %v1093 = vpack.c.bf16 %v1087, %v1086
      %v1094 = vpack.c.bf16 %v1089, %v1088
      %v1095 = vpack.c.bf16 %v1091, %v1090
      %v1100 = vunpack.c.l.b16 %v1092
      %v1101 = vunpack.c.h.b16 %v1092
      %v1102 = vunpack.c.l.b16 %v1093
      %v1103 = vunpack.c.h.b16 %v1093
      %v1104 = vunpack.c.l.b16 %v1094
      %v1105 = vunpack.c.h.b16 %v1094
      %v1106 = vunpack.c.l.b16 %v1095
      %v1107 = vunpack.c.h.b16 %v1095
      %v1108 = vpack.c.b16 %v1100, %v1100
      %v1109 = vpack.c.b16 %v1101, %v1101
      %v1110 = vpack.c.b16 %v1102, %v1102
      %v1111 = vpack.c.b16 %v1103, %v1103
      %v1112 = vpack.c.b16 %v1104, %v1104
      %v1113 = vpack.c.b16 %v1105, %v1105
      %v1114 = vpack.c.b16 %v1106, %v1106
      %v1115 = vpack.c.b16 %v1107, %v1107
      %1124 = vst [vmem:[%s284] sm:$0xf] %v1108
      %1125 = vst [vmem:[%s284 + $0x4] sm:$0xf] %v1109
      %1126 = vst [vmem:[%s284 + $0x8] sm:$0xf] %v1110
      %1127 = vst [vmem:[%s284 + $0xc] sm:$0xf] %v1111
      %1128 = vst [vmem:[%s284 + $0x10] sm:$0xf] %v1112
      %1129 = vst [vmem:[%s284 + $0x14] sm:$0xf] %v1113
      %1130 = vst [vmem:[%s284 + $0x18] sm:$0xf] %v1114
      %1131 = vst [vmem:[%s284 + $0x1c] sm:$0xf] %v1115
      %s1132 = smul.u32 8, %s19
      %p1133 = scmp.lt.s32.totalorder %s18, 1
      %s1134 = scalar_select %p1133, %s18, 1
      %p1135 = scmp.lt.s32.totalorder %s1132, 7
      %s1136 = scalar_select %p1135, %s1132, 7
      %s1137 = smul.addr %s1134, 8
      %s1138 = sadd.s32 %s1136, %s1137
      %s1139 = smul.addr %s1138, 4
      %s1140 = scalar_lea.vmem %s3, %s1139
      // Predicated region
      $region33: #{feature_extractor.6} parent=31 // pred_check
        %p1141 = pneg %p127
      $region34: #{feature_extractor.6} parent=31 // pred_check_branch
        %1143 = sbr.rel (%p1141) target = $region36
      $region35: #{feature_extractor.6} parent=31 // pred_region
        %s1144 = smul.u32 8, %s19
      $region36: #{feature_extractor.6} parent=31 // pred_fallthru
        _
    $region32: #{feature_extractor.6} parent=5 // pred_fallthru
      _
    %p1145 = scmp.le.s32.totalorder 2, %s9
    // Predicated region
    $region37: #{feature_extractor.6} parent=5 // pred_check
      %p1146 = pneg %p1145
    $region38: #{feature_extractor.6} parent=5 // pred_check_branch
      %1148 = sbr.rel (%p1146) target = $region40
    $region39: #{feature_extractor.6} parent=5 // pred_region
      %s1149 = ssub.s32 %s9, 2
      // Predicated region
      $region41: #{feature_extractor.6} parent=39 // pred_check
        %p1150 = pneg %p133
      $region42: #{feature_extractor.6} parent=39 // pred_check_branch
        %1152 = sbr.rel (%p1150) target = $region44
      $region43: #{feature_extractor.6} parent=39 // pred_region
        %s1153 = smul.u32 8, %s21
        %p1154 = scmp.lt.s32.totalorder %s20, 1
        %s1155 = scalar_select %p1154, %s20, 1
        %p1156 = scmp.lt.s32.totalorder %s1153, 7
        %s1157 = scalar_select %p1156, %s1153, 7
        %s1158 = smul.addr %s1155, 8
        %s1159 = sadd.s32 %s1157, %s1158
        %s1160 = smul.addr %s1159, 4
        %s1161 = scalar_lea.vmem %s3, %s1160
      $region44: #{feature_extractor.6} parent=39 // pred_fallthru
        _
    $region40: #{feature_extractor.6} parent=5 // pred_fallthru
      _
  $region6: #{feature_extractor.6} parent=0 // loop_footer
    %s13 = sadd.s32 1, %s9
  $region7: #{feature_extractor.6} parent=0 // loop_footer_branch
    %8 = sbr.rel target = $region3
  $region8: #{feature_extractor.6} parent=0 // loop_exit
    _

// kernel: feature_extractor.7
$region0: #{feature_extractor.7}
  #allocation0 [shape = 'u32[]', space=smem, size = 0x4, offset = 0x4, fixed_abs, tag = 'smem constant byte address 0x4 - core index']
  #allocation1 [shape = 'u32[144,128]{1,0:T(1,128)}', space=vmem, size = 0x12000, scoped, tag = 'internal scratch']
  #allocation2 [shape = 'f32[24,128]{1,0:T(8,128)}', space=vmem, size = 0x3000, scoped, tag = 'scratch operand']
  %s0 = inlined_call_operand.vmem [shape: bf16[2,32,256], index: 0, kind: input, shape index: {}, may-alias: {0,1}]
  %s1 = inlined_call_operand.vmem [shape: bf16[2,32,256], index: 1, kind: input, shape index: {}, may-alias: {0,1}]
  %s2 = inlined_call_operand.vmem [shape: bf16[1,256,128], index: 2, kind: input, shape index: {}]
  %s3 = inlined_call_operand.vmem [shape: f32[2,19,128], index: 3, kind: output, shape index: {}]
  %s4 = sld [smem:[#allocation0]]
  $region45: #{feature_extractor.7} parent=0
    _
  %s6 = ssub.s32 1, %s4
  %s7 = scalar_select 0, %s6, %s4
  loop: start=0, step=1, limit=4
  $region2: #{feature_extractor.7} parent=0 // loop_pre_header
    _
  $region3: #{feature_extractor.7} parent=0 // loop_header
    %s9 = sphi 0, %s13
    %p10 = scmp.ge.s32.totalorder %s9, 4
    %s16 = sphi 0, %s28
    %s17 = sphi 0, %s24
    %s18 = sphi 0, %s16
    %s19 = sphi 0, %s17
    %s20 = sphi 0, %s18
    %s21 = sphi 0, %s19
    %s33 = sphi 0, %s35
    %s36 = sphi 0, %s33
    %s37 = sphi 0, %s36
    %s53 = sphi 0, %s37
    %s65 = sphi 0, %s67
    %s68 = sphi 0, %s65
    %s69 = sphi 0, %s68
    %s85 = sphi 0, %s69
    %s89 = sphi 0, %s89
    %s91 = sphi 0, %s89
    %s92 = sphi 0, %s91
    %s106 = sphi 0, %s92
    %s114 = sphi 0, %s116
    %s117 = sphi 0, %s114
    %s118 = sphi 0, %s117
    %s134 = sphi 0, %s118
  $region4: #{feature_extractor.7} parent=0 // loop_header_branch
    %12 = sbr.rel (%p10) target = $region8
  $region5: #{feature_extractor.7} parent=0 // loop_body
    %s14 = ssub.s32 %s9, 1
    %s15 = ssub.s32 %s9, 2
    %s22 = sadd.s32 1, %s17
    %p23 = scmp.ge.s32.totalorder %s22, 1
    %s24 = scalar_select %p23, 0, %s22
    %s25 = sadd.s32 1, %s16
    %s26 = scalar_select %p23, %s25, %s16
    %p27 = scmp.ge.s32.totalorder %s26, 2
    %s28 = scalar_select %p27, 0, %s26
    %s29 = ssub.s32 %s16, %s28
    %s30 = ssub.s32 %s17, %s24
    %s31 = sor.u32 %s29, %s30
    %p32 = scmp.eq.s32.totalorder %s31, 0
    %s34 = sadd.s32 %s33, 1
    %s35 = scalar_select %p32, %s33, %s34
    %p38 = pneg %p32
    %p39 = scmp.eq.s32.totalorder %s9, 1
    %p40 = por %p38, %p39
    %p41 = scmp.ne.s32.totalorder %s33, %s36
    %p42 = scmp.eq.s32.totalorder %s9, 0
    %p43 = por %p41, %p42
    %p44 = scmp.ne.s32.totalorder %s33, %s36
    %p45 = scmp.eq.s32.totalorder %s14, 1
    %p46 = por %p44, %p45
    %p47 = scmp.ne.s32.totalorder %s36, %s37
    %p48 = scmp.eq.s32.totalorder %s14, 0
    %p49 = por %p47, %p48
    %p50 = scmp.ne.s32.totalorder %s36, %s37
    %p51 = scmp.eq.s32.totalorder %s15, 1
    %p52 = por %p50, %p51
    %p54 = scmp.ne.s32.totalorder %s37, %s53
    %p55 = scmp.eq.s32.totalorder %s15, 0
    %p56 = por %p54, %p55
    %s57 = sadd.s32 %s17, 1
    %s58 = smul.u32 %s57, 3
    %s59 = sadd.s32 %s24, 1
    %s60 = smul.u32 %s59, 3
    %s61 = ssub.s32 %s16, %s28
    %s62 = ssub.s32 %s58, %s60
    %s63 = sor.u32 %s61, %s62
    %p64 = scmp.eq.s32.totalorder %s63, 0
    %s66 = sadd.s32 %s65, 1
    %s67 = scalar_select %p64, %s65, %s66
    %p70 = pneg %p64
    %p71 = scmp.eq.s32.totalorder %s9, 1
    %p72 = por %p70, %p71
    %p73 = scmp.ne.s32.totalorder %s65, %s68
    %p74 = scmp.eq.s32.totalorder %s9, 0
    %p75 = por %p73, %p74
    %p76 = scmp.ne.s32.totalorder %s65, %s68
    %p77 = scmp.eq.s32.totalorder %s14, 1
    %p78 = por %p76, %p77
    %p79 = scmp.ne.s32.totalorder %s68, %s69
    %p80 = scmp.eq.s32.totalorder %s14, 0
    %p81 = por %p79, %p80
    %p82 = scmp.ne.s32.totalorder %s68, %s69
    %p83 = scmp.eq.s32.totalorder %s15, 1
    %p84 = por %p82, %p83
    %p86 = scmp.ne.s32.totalorder %s69, %s85
    %p87 = scmp.eq.s32.totalorder %s15, 0
    %p88 = por %p86, %p87
    %s90 = sadd.s32 %s89, 1
    %p93 = scmp.eq.s32.totalorder %s9, 1
    %p94 = scmp.ne.s32.totalorder %s89, %s91
    %p95 = scmp.eq.s32.totalorder %s9, 0
    %p96 = por %p94, %p95
    %p97 = scmp.ne.s32.totalorder %s89, %s91
    %p98 = scmp.eq.s32.totalorder %s14, 1
    %p99 = por %p97, %p98
    %p100 = scmp.ne.s32.totalorder %s91, %s92
    %p101 = scmp.eq.s32.totalorder %s14, 0
    %p102 = por %p100, %p101
    %p103 = scmp.ne.s32.totalorder %s91, %s92
    %p104 = scmp.eq.s32.totalorder %s15, 1
    %p105 = por %p103, %p104
    %p107 = scmp.ne.s32.totalorder %s92, %s106
    %p108 = scmp.eq.s32.totalorder %s15, 0
    %p109 = por %p107, %p108
    %s110 = ssub.s32 %s16, %s28
    %s111 = ssub.s32 %s17, %s24
    %s112 = sor.u32 %s110, %s111
    %p113 = scmp.eq.s32.totalorder %s112, 0
    %s115 = sadd.s32 %s114, 1
    %s116 = scalar_select %p113, %s114, %s115
    %p119 = pneg %p113
    %p120 = scmp.eq.s32.totalorder %s9, 1
    %p121 = por %p119, %p120
    %p122 = scmp.ne.s32.totalorder %s114, %s117
    %p123 = scmp.eq.s32.totalorder %s9, 0
    %p124 = por %p122, %p123
    %p125 = scmp.ne.s32.totalorder %s114, %s117
    %p126 = scmp.eq.s32.totalorder %s14, 1
    %p127 = por %p125, %p126
    %p128 = scmp.ne.s32.totalorder %s117, %s118
    %p129 = scmp.eq.s32.totalorder %s14, 0
    %p130 = por %p128, %p129
    %p131 = scmp.ne.s32.totalorder %s117, %s118
    %p132 = scmp.eq.s32.totalorder %s15, 1
    %p133 = por %p131, %p132
    %p135 = scmp.ne.s32.totalorder %s118, %s134
    %p136 = scmp.eq.s32.totalorder %s15, 0
    %p137 = por %p135, %p136
    %p138 = scmp.le.s32.totalorder 1, %s9
    %p139 = scmp.lt.s32.totalorder %s9, 3
    %p140 = pnand %p138, %p139
    %p141 = pneg %p140
    // Predicated region
    $region9: #{feature_extractor.7} parent=5 // pred_check
      _
    $region10: #{feature_extractor.7} parent=5 // pred_check_branch
      %143 = sbr.rel (%p140) target = $region12
    $region11: #{feature_extractor.7} parent=5 // pred_region
      %s144 = ssub.s32 %s9, 1
      // Predicated region
      $region13: #{feature_extractor.7} parent=11 // pred_check
        %p145 = pneg %p102
      $region14: #{feature_extractor.7} parent=11 // pred_check_branch
        %147 = sbr.rel (%p145) target = $region16
      $region15: #{feature_extractor.7} parent=11 // pred_region
        _
      $region16: #{feature_extractor.7} parent=11 // pred_fallthru
        _
    $region12: #{feature_extractor.7} parent=5 // pred_fallthru
      _
    %p148 = scmp.lt.s32.totalorder %s9, 2
    // Predicated region
    $region17: #{feature_extractor.7} parent=5 // pred_check
      %p149 = pneg %p148
    $region18: #{feature_extractor.7} parent=5 // pred_check_branch
      %151 = sbr.rel (%p149) target = $region20
    $region19: #{feature_extractor.7} parent=5 // pred_region
      // Predicated region
      $region21: #{feature_extractor.7} parent=19 // pred_check
        %p152 = pneg %p43
      $region22: #{feature_extractor.7} parent=19 // pred_check_branch
        %154 = sbr.rel (%p152) target = $region24
      $region23: #{feature_extractor.7} parent=19 // pred_region
        %s155 = smul.u32 3, %s17
        %s156 = ssub.s32 4, %s155
        %p157 = scmp.lt.s32.totalorder %s156, 3
        %s158 = scalar_select %p157, %s156, 3
        %s159 = smul.u32 64, %s158
        %s160 = smul.u32 %s159, 2
        %p161 = scmp.lt.s32.totalorder %s16, 1
        %s162 = scalar_select %p161, %s16, 1
        %p163 = scmp.lt.s32.totalorder %s155, 3
        %s164 = scalar_select %p163, %s155, 3
        %s165 = smul.addr %s164, 2
        %s166 = smul.addr %s162, 8
        %s167 = sadd.s32 %s165, %s166
        %s168 = smul.addr %s167, 4
        %s169 = scalar_lea.vmem %s0, %s168
        %s170 = smul.u32 3, %s17
        %s171 = ssub.s32 4, %s170
        %p172 = scmp.lt.s32.totalorder %s171, 3
        %s173 = scalar_select %p172, %s171, 3
        %s174 = smul.u32 64, %s173
        %s175 = smul.u32 %s174, 2
      $region24: #{feature_extractor.7} parent=19 // pred_fallthru
        _
      // Predicated region
      $region25: #{feature_extractor.7} parent=19 // pred_check
        %p176 = pneg %p75
      $region26: #{feature_extractor.7} parent=19 // pred_check_branch
        %178 = sbr.rel (%p176) target = $region28
      $region27: #{feature_extractor.7} parent=19 // pred_region
        %s179 = sadd.s32 %s17, 1
        %s180 = smul.u32 %s179, 3
        %p181 = scmp.lt.s32.totalorder %s16, 1
        %s182 = scalar_select %p181, %s16, 1
        %p183 = scmp.lt.s32.totalorder %s180, 3
        %s184 = scalar_select %p183, %s180, 3
        %s185 = smul.addr %s184, 2
        %s186 = smul.addr %s182, 8
        %s187 = sadd.s32 %s185, %s186
        %s188 = smul.addr %s187, 4
        %s189 = scalar_lea.vmem %s1, %s188
        %s190 = sadd.s32 %s17, 1
        %s191 = smul.u32 %s190, 3
      $region28: #{feature_extractor.7} parent=19 // pred_fallthru
        _
    $region20: #{feature_extractor.7} parent=5 // pred_fallthru
      _
    %p192 = scmp.le.s32.totalorder 1, %s9
    %p193 = scmp.lt.s32.totalorder %s9, 3
    %p194 = pnand %p192, %p193
    %p195 = pneg %p194
    // Predicated region
    $region29: #{feature_extractor.7} parent=5 // pred_check
      _
    $region30: #{feature_extractor.7} parent=5 // pred_check_branch
      %197 = sbr.rel (%p194) target = $region32
    $region31: #{feature_extractor.7} parent=5 // pred_region
      %s198 = ssub.s32 %s9, 1
      %s199 = smul.u32 3, %s19
      %s200 = ssub.s32 4, %s199
      %p201 = scmp.lt.s32.totalorder %s200, 3
      %s202 = scalar_select %p201, %s200, 3
      %s203 = smul.u32 64, %s202
      %s204 = smul.u32 %s203, 2
      %p205 = scmp.lt.s32.totalorder %s18, 1
      %s206 = scalar_select %p205, %s18, 1
      %p207 = scmp.lt.s32.totalorder %s199, 3
      %s208 = scalar_select %p207, %s199, 3
      %s209 = smul.addr %s208, 2
      %s210 = smul.addr %s206, 8
      %s211 = sadd.s32 %s209, %s210
      %s212 = smul.addr %s211, 4
      %s213 = scalar_lea.vmem %s0, %s212
      %p214 = pneg %p49
      %p215 = pneg %p46
      %s216 = sadd.s32 %s19, 1
      %s217 = smul.u32 %s216, 3
      %p218 = scmp.lt.s32.totalorder %s18, 1
      %s219 = scalar_select %p218, %s18, 1
      %p220 = scmp.lt.s32.totalorder %s217, 3
      %s221 = scalar_select %p220, %s217, 3
      %s222 = smul.addr %s221, 2
      %s223 = smul.addr %s219, 8
      %s224 = sadd.s32 %s222, %s223
      %s225 = smul.addr %s224, 4
      %s226 = scalar_lea.vmem %s1, %s225
      %p227 = pneg %p81
      %p228 = pneg %p78
      %p229 = pneg %p102
      %p230 = pneg %p99
      %p231 = pneg %p130
      %p232 = pneg %p127
      %s233 = smul.u32 3, %s19
      %p234 = scmp.lt.s32.totalorder %s18, 1
      %s235 = scalar_select %p234, %s18, 1
      %p236 = scmp.lt.s32.totalorder %s233, 2
      %s237 = scalar_select %p236, %s233, 2
      %s238 = smul.addr %s235, 3
      %s239 = sadd.s32 %s237, %s238
      %s240 = smul.addr %s239, 8
      %s241 = scalar_lea.vmem %s3, %s240
      %s242 = smul.u32 3, %s19
      %s243 = ssub.s32 4, %s242
      %p244 = scmp.lt.s32.totalorder %s243, 3
      %s245 = scalar_select %p244, %s243, 3
      %s246 = smul.u32 64, %s245
      %s247 = smul.u32 %s246, 2
      %p248 = scmp.lt.s32.totalorder %s18, 1
      %s249 = scalar_select %p248, %s18, 1
      %p250 = scmp.lt.s32.totalorder %s242, 3
      %s251 = scalar_select %p250, %s242, 3
      %s252 = smul.addr %s251, 2
      %s253 = smul.addr %s249, 8
      %s254 = sadd.s32 %s252, %s253
      %s255 = smul.addr %s254, 4
      %s256 = scalar_lea.vmem %s0, %s255
      %s257 = smul.u32 3, %s19
      %s258 = ssub.s32 4, %s257
      %p259 = scmp.lt.s32.totalorder %s258, 3
      %s260 = scalar_select %p259, %s258, 3
      %s261 = smul.u32 64, %s260
      %s262 = smul.u32 %s261, 2
      %s263 = sadd.s32 %s19, 1
      %s264 = smul.u32 %s263, 3
      %p265 = scmp.lt.s32.totalorder %s18, 1
      %s266 = scalar_select %p265, %s18, 1
      %p267 = scmp.lt.s32.totalorder %s264, 3
      %s268 = scalar_select %p267, %s264, 3
      %s269 = smul.addr %s268, 2
      %s270 = smul.addr %s266, 8
      %s271 = sadd.s32 %s269, %s270
      %s272 = smul.addr %s271, 4
      %s273 = scalar_lea.vmem %s1, %s272
      %s274 = sadd.s32 %s19, 1
      %s275 = smul.u32 %s274, 3
      %s276 = smul.u32 3, %s19
      %p277 = scmp.lt.s32.totalorder %s18, 1
      %s278 = scalar_select %p277, %s18, 1
      %p279 = scmp.lt.s32.totalorder %s276, 2
      %s280 = scalar_select %p279, %s276, 2
      %s281 = smul.addr %s278, 3
      %s282 = sadd.s32 %s280, %s281
      %s283 = smul.addr %s282, 8
      %s284 = scalar_lea.vmem %s3, %s283
      %s285 = smul.u32 3, %s19
      %v287 = vld [vmem:[%s256] sm:$0xff]
      %v288 = vld [vmem:[%s256 + $0x8] sm:$0xff]
      %v289 = vld [vmem:[%s256 + $0x10] sm:$0xff]
      %v290 = vld [vmem:[%s2] sm:$0xf]
      %v291 = vld [vmem:[%s2 + $0x4] sm:$0xf]
      %v292 = vld [vmem:[%s2 + $0x8] sm:$0xf]
      %v293 = vld [vmem:[%s2 + $0xc] sm:$0xf]
      %v294 = vld [vmem:[%s2 + $0x10] sm:$0xf]
      %v295 = vld [vmem:[%s2 + $0x14] sm:$0xf]
      %v296 = vld [vmem:[%s2 + $0x18] sm:$0xf]
      %v297 = vld [vmem:[%s2 + $0x1c] sm:$0xf]
      %v298 = vld [vmem:[%s2 + $0x20] sm:$0xf]
      %v299 = vld [vmem:[%s2 + $0x24] sm:$0xf]
      %v300 = vld [vmem:[%s2 + $0x28] sm:$0xf]
      %v301 = vld [vmem:[%s2 + $0x2c] sm:$0xf]
      %v302 = vld [vmem:[%s2 + $0x30] sm:$0xf]
      %v303 = vld [vmem:[%s2 + $0x34] sm:$0xf]
      %v304 = vld [vmem:[%s2 + $0x38] sm:$0xf]
      %v305 = vld [vmem:[%s2 + $0x3c] sm:$0xf]
      %v306 = vld [vmem:[%s2 + $0x40] sm:$0xf]
      %v307 = vld [vmem:[%s2 + $0x44] sm:$0xf]
      %v308 = vld [vmem:[%s2 + $0x48] sm:$0xf]
      %v309 = vld [vmem:[%s2 + $0x4c] sm:$0xf]
      %v310 = vld [vmem:[%s2 + $0x50] sm:$0xf]
      %v311 = vld [vmem:[%s2 + $0x54] sm:$0xf]
      %v312 = vld [vmem:[%s2 + $0x58] sm:$0xf]
      %v313 = vld [vmem:[%s2 + $0x5c] sm:$0xf]
      %v314 = vld [vmem:[%s2 + $0x60] sm:$0xf]
      %v315 = vld [vmem:[%s2 + $0x64] sm:$0xf]
      %v316 = vld [vmem:[%s2 + $0x68] sm:$0xf]
      %v317 = vld [vmem:[%s2 + $0x6c] sm:$0xf]
      %v318 = vld [vmem:[%s2 + $0x70] sm:$0xf]
      %v319 = vld [vmem:[%s2 + $0x74] sm:$0xf]
      %v320 = vld [vmem:[%s2 + $0x78] sm:$0xf]
      %v321 = vld [vmem:[%s2 + $0x7c] sm:$0xf]
      %v325 = vunpack.c.l.b16 %v287
      %v326 = vunpack.c.h.b16 %v287
      %v327 = vunpack.c.l.b16 %v288
      %v328 = vunpack.c.h.b16 %v288
      %v329 = vunpack.c.l.b16 %v289
      %v330 = vunpack.c.h.b16 %v289
      %v331 = vpack.c.b16 %v327, %v325
      %v332 = vpack.c.b16 %v328, %v326
      %v333 = vpack.c.b16 %v329, %v329
      %v334 = vpack.c.b16 %v330, %v330
      %v371 = vunpack.c.l.b16 %v290
      %v372 = vunpack.c.l.b16 %v291
      %v373 = vunpack.c.l.b16 %v292
      %v374 = vunpack.c.l.b16 %v293
      %v375 = vunpack.c.l.b16 %v294
      %v376 = vunpack.c.l.b16 %v295
      %v377 = vunpack.c.l.b16 %v296
      %v378 = vunpack.c.l.b16 %v297
      %v379 = vunpack.c.l.b16 %v298
      %v380 = vunpack.c.l.b16 %v299
      %v381 = vunpack.c.l.b16 %v300
      %v382 = vunpack.c.l.b16 %v301
      %v383 = vunpack.c.l.b16 %v302
      %v384 = vunpack.c.l.b16 %v303
      %v385 = vunpack.c.l.b16 %v304
      %v386 = vunpack.c.l.b16 %v305
      %v387 = vunpack.c.l.b16 %v306
      %v388 = vunpack.c.l.b16 %v307
      %v389 = vunpack.c.l.b16 %v308
      %v390 = vunpack.c.l.b16 %v309
      %v391 = vunpack.c.l.b16 %v310
      %v392 = vunpack.c.l.b16 %v311
      %v393 = vunpack.c.l.b16 %v312
      %v394 = vunpack.c.l.b16 %v313
      %v395 = vunpack.c.l.b16 %v314
      %v396 = vunpack.c.l.b16 %v315
      %v397 = vunpack.c.l.b16 %v316
      %v398 = vunpack.c.l.b16 %v317
      %v399 = vunpack.c.l.b16 %v318
      %v400 = vunpack.c.l.b16 %v319
      %v401 = vunpack.c.l.b16 %v320
      %v402 = vunpack.c.l.b16 %v321
      %v403 = vpack.c.b16 %v372, %v371
      %v404 = vpack.c.b16 %v374, %v373
      %v405 = vpack.c.b16 %v376, %v375
      %v406 = vpack.c.b16 %v378, %v377
      %v407 = vpack.c.b16 %v380, %v379
      %v408 = vpack.c.b16 %v382, %v381
      %v409 = vpack.c.b16 %v384, %v383
      %v410 = vpack.c.b16 %v386, %v385
      %v411 = vpack.c.b16 %v388, %v387
      %v412 = vpack.c.b16 %v390, %v389
      %v413 = vpack.c.b16 %v392, %v391
      %v414 = vpack.c.b16 %v394, %v393
      %v415 = vpack.c.b16 %v396, %v395
      %v416 = vpack.c.b16 %v398, %v397
      %v417 = vpack.c.b16 %v400, %v399
      %v418 = vpack.c.b16 %v402, %v401
      %435 = vmatprep.subr.bf16.mxu0 0
      %436 = vmatpush1.bf16.msra.mxu0 %v410
      %437 = vmatprep.subr.bf16.mxu0 0
      %438 = vmatpush1.bf16.msra.mxu0 %v409
      %439 = vmatprep.subr.bf16.mxu0 0
      %440 = vmatpush1.bf16.msra.mxu0 %v408
      %441 = vmatprep.subr.bf16.mxu0 0
      %442 = vmatpush1.bf16.msra.mxu0 %v407
      %443 = vmatprep.subr.bf16.mxu0 0
      %444 = vmatpush1.bf16.msra.mxu0 %v406
      %445 = vmatprep.subr.bf16.mxu0 0
      %446 = vmatpush1.bf16.msra.mxu0 %v405
      %447 = vmatprep.subr.bf16.mxu0 0
      %448 = vmatpush1.bf16.msra.mxu0 %v404
      %449 = vmatprep.subr.bf16.mxu0 0
      %450 = vmatpush1.bf16.msra.mxu0 %v403
      %451 = vmatprep.subr.bf16.mxu0 0
      %452 = vmatpush2.bf16.msra.mxu0 %v418
      %453 = vmatprep.subr.bf16.mxu0 0
      %454 = vmatpush2.bf16.msra.mxu0 %v417
      %455 = vmatprep.subr.bf16.mxu0 0
      %456 = vmatpush2.bf16.msra.mxu0 %v416
      %457 = vmatprep.subr.bf16.mxu0 0
      %458 = vmatpush2.bf16.msra.mxu0 %v415
      %459 = vmatprep.subr.bf16.mxu0 0
      %460 = vmatpush2.bf16.msra.mxu0 %v414
      %461 = vmatprep.subr.bf16.mxu0 0
      %462 = vmatpush2.bf16.msra.mxu0 %v413
      %463 = vmatprep.subr.bf16.mxu0 0
      %464 = vmatpush2.bf16.msra.mxu0 %v412
      %465 = vmatprep.subr.bf16.mxu0 0
      %466 = vmatpush2.bf16.msra.mxu0 %v411
      %467 = vmatprep.mubr.bf16.mxu0 %v332
      %468 = vmatmul.mubr.bf16.gmra.mxu0 %v331
      %v469 = vpop.f32.mrf.mxu0
      %v470 = vadd.f32 0.0, %v469
      %v471 = vpop.f32.mrf.mxu0
      %v472 = vpop.f32.mrf.mxu0
      %v473 = vadd.f32 0.0, %v472
      %v474 = vpop.f32.mrf.mxu0
      %475 = vmatprep.mubr.bf16.mxu0 %v334
      %476 = vmatmul.mubr.bf16.gmra.mxu0 %v333
      %v477 = vpop.f32.mrf.mxu0
      %v478 = vadd.f32 0.0, %v477
      %v479 = vpop.f32.mrf.mxu0
      %v480 = vpop.f32.mrf.mxu0
      %v481 = vpop.f32.mrf.mxu0
      %482 = vdwg.mxu0
      %483 = vst [vmem:[#allocation2] sm:$0xff] %v470
      %484 = vst [vmem:[#allocation2 + $0x8] sm:$0xff] %v473
      %485 = vst [vmem:[#allocation2 + $0x10] sm:$0xff] %v478
      %v486 = vld [vmem:[#allocation2] sm:$0xff]
      %v487 = vld [vmem:[#allocation2 + $0x8] sm:$0xff]
      %v488 = vld [vmem:[#allocation2 + $0x10] sm:$0xff]
      %v489 = vmul.f32 %v486, 0.5
      %v490 = vmul.f32 %v487, 0.5
      %v491 = vmul.f32 %v488, 0.5
      %v492 = vmul.f32 %v486, 0.70710677
      %v493 = vmul.f32 %v487, 0.70710677
      %v494 = vmul.f32 %v488, 0.70710677
      %v495 = verf.f32.pop %v492
      %v496 = verf.f32.pop %v493
      %v497 = verf.f32.pop %v494
      %v498 = vadd.f32 %v495, 1.0
      %v499 = vadd.f32 %v496, 1.0
      %v500 = vadd.f32 %v497, 1.0
      %v501 = vmul.f32 %v489, %v498
      %v502 = vmul.f32 %v490, %v499
      %v503 = vmul.f32 %v491, %v500
      %504 = vst [vmem:[%s284] sm:$0xff] %v501
      %505 = vst [vmem:[%s284 + $0x8] sm:$0xff] %v502
      %506 = vst [vmem:[%s284 + $0x10] sm:$0xff] %v503
      %s507 = smul.u32 3, %s19
      %p508 = scmp.lt.s32.totalorder %s18, 1
      %s509 = scalar_select %p508, %s18, 1
      %p510 = scmp.lt.s32.totalorder %s507, 2
      %s511 = scalar_select %p510, %s507, 2
      %s512 = smul.addr %s509, 3
      %s513 = sadd.s32 %s511, %s512
      %s514 = smul.addr %s513, 8
      %s515 = scalar_lea.vmem %s3, %s514
      // Predicated region
      $region33: #{feature_extractor.7} parent=31 // pred_check
        %p516 = pneg %p127
      $region34: #{feature_extractor.7} parent=31 // pred_check_branch
        %518 = sbr.rel (%p516) target = $region36
      $region35: #{feature_extractor.7} parent=31 // pred_region
        %s519 = smul.u32 3, %s19
      $region36: #{feature_extractor.7} parent=31 // pred_fallthru
        _
    $region32: #{feature_extractor.7} parent=5 // pred_fallthru
      _
    %p520 = scmp.le.s32.totalorder 2, %s9
    // Predicated region
    $region37: #{feature_extractor.7} parent=5 // pred_check
      %p521 = pneg %p520
    $region38: #{feature_extractor.7} parent=5 // pred_check_branch
      %523 = sbr.rel (%p521) target = $region40
    $region39: #{feature_extractor.7} parent=5 // pred_region
      %s524 = ssub.s32 %s9, 2
      // Predicated region
      $region41: #{feature_extractor.7} parent=39 // pred_check
        %p525 = pneg %p133
      $region42: #{feature_extractor.7} parent=39 // pred_check_branch
        %527 = sbr.rel (%p525) target = $region44
      $region43: #{feature_extractor.7} parent=39 // pred_region
        %s528 = smul.u32 3, %s21
        %p529 = scmp.lt.s32.totalorder %s20, 1
        %s530 = scalar_select %p529, %s20, 1
        %p531 = scmp.lt.s32.totalorder %s528, 2
        %s532 = scalar_select %p531, %s528, 2
        %s533 = smul.addr %s530, 3
        %s534 = sadd.s32 %s532, %s533
        %s535 = smul.addr %s534, 8
        %s536 = scalar_lea.vmem %s3, %s535
      $region44: #{feature_extractor.7} parent=39 // pred_fallthru
        _
    $region40: #{feature_extractor.7} parent=5 // pred_fallthru
      _
  $region6: #{feature_extractor.7} parent=0 // loop_footer
    %s13 = sadd.s32 1, %s9
  $region7: #{feature_extractor.7} parent=0 // loop_footer_branch
    %8 = sbr.rel target = $region3
  $region8: #{feature_extractor.7} parent=0 // loop_exit
    _

</llo_original>
